<compile_context>
chip_gen: v5e
topology: v5e:2x2
jax: 0.10.0
libtpu: 0.0.40
codegen_flags: <defaults>
</compile_context>

<pallas_src>
import functools

import jax
import jax.numpy as jnp
from jax.experimental import pallas as pl
from jax.experimental.pallas import tpu as pltpu


_MAX_TILE_M = 2048            # lane (spatial) tile cap, multiple of 128
_MAX_TILE_K = 512             # contraction tile cap (n_k == 1 for this model)
_VMEM_LIMIT_BYTES = 32 * 1024 * 1024
_BN_EPS = 1e-5


def _pick_tile(dim, cap, align):
    """Largest tile <= cap that exactly divides dim (full dim if it fits)."""
    if dim <= cap:
        return dim
    t = (cap // align) * align
    while t >= align:
        if dim % t == 0:
            return t
        t -= align
    return dim


# ----------------------------------------------------------------------------
# Pallas kernels
# ----------------------------------------------------------------------------
def _pre_act(x, kind):
    """Elementwise pre-activation, natively in the input (bf16) dtype."""
    if kind == "leaky_relu":                       # LeakyReLU(0.2)
        return jnp.where(x >= 0, x, x * jnp.asarray(0.2, dtype=x.dtype))
    if kind == "relu":
        return jnp.maximum(x, 0)
    return x


def _epilogue(out, b_ref, post_act, with_stats, stats_ref):
    """Shared tail: BN partial stats (single store), bias, post-activation."""
    if with_stats:
        s = jnp.sum(out, axis=1, keepdims=True)
        ss = jnp.sum(out * out, axis=1, keepdims=True)
        stats_ref[0, 0] = jnp.concatenate([s, ss], axis=1)
    if b_ref is not None:
        out = out + b_ref[...]
    if post_act == "tanh":
        out = jnp.tanh(out)
    elif post_act == "relu":
        out = jnp.maximum(out, 0.0)
    return out


def _conv_kernel_1k(*refs, pre_act, post_act, has_bias, with_stats):
    """Single-pass fused conv-as-matmul (whole K in one block, no scratch)."""
    x_ref, w_ref = refs[0], refs[1]
    idx = 2
    b_ref = None
    if has_bias:
        b_ref = refs[idx]
        idx += 1
    o_ref = refs[idx]
    idx += 1
    stats_ref = refs[idx] if with_stats else None

    x = _pre_act(x_ref[0], pre_act)                # (K, tile_m) bf16
    out = jnp.dot(w_ref[0], x, preferred_element_type=jnp.float32)
    out = _epilogue(out, b_ref, post_act, with_stats, stats_ref)
    o_ref[0] = out.astype(o_ref.dtype)


def _conv_kernel_nk(*refs, pre_act, post_act, n_k, has_bias, with_stats):
    """Fallback: K-tiled accumulation in an f32 VMEM scratch (K > _MAX_TILE_K)."""
    x_ref, w_ref = refs[0], refs[1]
    idx = 2
    b_ref = None
    if has_bias:
        b_ref = refs[idx]
        idx += 1
    o_ref = refs[idx]
    idx += 1
    stats_ref = refs[idx] if with_stats else None
    acc_ref = refs[-1]

    k = pl.program_id(2)

    @pl.when(k == 0)
    def _init():
        acc_ref[...] = jnp.zeros_like(acc_ref)

    x = _pre_act(x_ref[0], pre_act)
    acc_ref[...] += jnp.dot(w_ref[0], x, preferred_element_type=jnp.float32)

    @pl.when(k == n_k - 1)
    def _finalize():
        out = _epilogue(acc_ref[...], b_ref, post_act, with_stats, stats_ref)
        o_ref[0] = out.astype(o_ref.dtype)


# ----------------------------------------------------------------------------
# pallas_call wrapper
# ----------------------------------------------------------------------------
def conv_matmul(x_pkm, w_pok, bias=None, *, pre_act=None, post_act=None,
                with_stats=False, out_dtype=jnp.bfloat16):
    """x: (P, K, M), w: (P, out_c, K) -> y: (P, out_c, M) [, stats (P,n_m,out_c,2)]."""
    if bias is not None and with_stats:
        raise ValueError("BN statistics are computed pre-bias; bias together "
                         "with with_stats would normalize with mismatched stats.")
    P, K, M = x_pkm.shape
    out_c = w_pok.shape[1]

    cap_m = _MAX_TILE_M
    if P == 1 and M % 256 == 0:
        cap_m = min(cap_m, M // 2)      # keep >=2 parallel blocks for v7x's 2 TCs
    tile_m = _pick_tile(M, cap_m, 128)
    tile_k = _pick_tile(K, _MAX_TILE_K, 8)
    n_m = M // tile_m
    n_k = K // tile_k

    x_bf = x_pkm.astype(jnp.bfloat16)   # no-op: patches are already built in bf16
    w_bf = w_pok.astype(jnp.bfloat16)
    has_bias = bias is not None

    out_shape = [jax.ShapeDtypeStruct((P, out_c, M), out_dtype)]
    if with_stats:
        out_shape.append(jax.ShapeDtypeStruct((P, n_m, out_c, 2), jnp.float32))

    if n_k == 1:
        in_specs = [
            pl.BlockSpec((1, K, tile_m), lambda p, m: (p, 0, m)),
            pl.BlockSpec((1, out_c, K), lambda p, m: (p, 0, 0)),
        ]
        args = [x_bf, w_bf]
        if has_bias:
            in_specs.append(pl.BlockSpec((out_c, 1), lambda p, m: (0, 0)))
            args.append(bias.reshape(out_c, 1).astype(jnp.float32))
        out_specs = [pl.BlockSpec((1, out_c, tile_m), lambda p, m: (p, 0, m))]
        if with_stats:
            out_specs.append(
                pl.BlockSpec((1, 1, out_c, 2), lambda p, m: (p, m, 0, 0)))
        kernel = functools.partial(_conv_kernel_1k, pre_act=pre_act,
                                   post_act=post_act, has_bias=has_bias,
                                   with_stats=with_stats)
        outs = pl.pallas_call(
            kernel,
            grid=(P, n_m),
            in_specs=in_specs,
            out_specs=tuple(out_specs),
            out_shape=tuple(out_shape),
            compiler_params=pltpu.CompilerParams(
                dimension_semantics=("parallel", "parallel"),
                vmem_limit_bytes=_VMEM_LIMIT_BYTES),
        )(*args)
    else:
        in_specs = [
            pl.BlockSpec((1, tile_k, tile_m), lambda p, m, k: (p, k, m)),
            pl.BlockSpec((1, out_c, tile_k), lambda p, m, k: (p, 0, k)),
        ]
        args = [x_bf, w_bf]
        if has_bias:
            in_specs.append(pl.BlockSpec((out_c, 1), lambda p, m, k: (0, 0)))
            args.append(bias.reshape(out_c, 1).astype(jnp.float32))
        out_specs = [pl.BlockSpec((1, out_c, tile_m), lambda p, m, k: (p, 0, m))]
        if with_stats:
            out_specs.append(
                pl.BlockSpec((1, 1, out_c, 2), lambda p, m, k: (p, m, 0, 0)))
        kernel = functools.partial(_conv_kernel_nk, pre_act=pre_act,
                                   post_act=post_act, n_k=n_k,
                                   has_bias=has_bias, with_stats=with_stats)
        outs = pl.pallas_call(
            kernel,
            grid=(P, n_m, n_k),
            in_specs=in_specs,
            out_specs=tuple(out_specs),
            out_shape=tuple(out_shape),
            scratch_shapes=[pltpu.VMEM((out_c, tile_m), jnp.float32)],
            compiler_params=pltpu.CompilerParams(
                dimension_semantics=("parallel", "parallel", "arbitrary"),
                vmem_limit_bytes=_VMEM_LIMIT_BYTES),
        )(*args)

    if with_stats:
        return outs[0], outs[1]
    return outs[0], None


# ----------------------------------------------------------------------------
# BatchNorm finalization (tiny XLA) and the folded affine
# ----------------------------------------------------------------------------
def bn_scale_shift(stats, gamma, beta, count):
    """Finalize training-mode BN scale/shift from per-tile (sum, sum-sq)."""
    tot = jnp.sum(stats, axis=(0, 1))                     # (out_c, 2)
    mean = tot[:, 0] / count
    var = jnp.maximum(tot[:, 1] / count - mean * mean, 0.0)
    inv = jax.lax.rsqrt(var + _BN_EPS)
    scale = gamma * inv
    shift = beta - mean * scale
    return scale, shift


def _affine_to_bf16(y_cnhw, scale, shift):
    """Apply the producing layer's folded BN affine; cast to bf16.

    XLA fuses this with the consumer's pad/window gather, so no separate
    normalization pass over the activation is materialized.  Zero padding is
    applied AFTER the affine, and the consumer's LeakyReLU/ReLU runs in-kernel
    (act(0) == 0), matching PyTorch's pad-after-activation semantics.
    """
    if scale is None:
        return y_cnhw.astype(jnp.bfloat16)
    y = (y_cnhw.astype(jnp.float32) * scale[:, None, None, None]
         + shift[:, None, None, None])
    return y.astype(jnp.bfloat16)


# ----------------------------------------------------------------------------
# Patch / weight-matrix construction (XLA glue; channel-major, bf16)
# ----------------------------------------------------------------------------
def _down_patches(y_cnhw, weight_oihw):
    """Conv2d(k=4, s=2, p=1): 16 shifted stride-2 windows stacked along K."""
    C, N, H, W = y_cnhw.shape
    OH, OW = H // 2, W // 2
    M = N * OH * OW
    yp = jnp.pad(y_cnhw, ((0, 0), (0, 0), (1, 1), (1, 1)))
    x_rows, w_cols = [], []
    for kh in range(4):
        for kw in range(4):
            win = yp[:, :, kh:kh + 2 * OH:2, kw:kw + 2 * OW:2]
            x_rows.append(win.reshape(C, M))
            w_cols.append(weight_oihw[:, :, kh, kw])      # (out_c, C)
    X = jnp.concatenate(x_rows, axis=0)[None]             # (1, 16C, M) bf16
    Wm = jnp.concatenate(w_cols, axis=1)[None]            # (1, out_c, 16C)
    return X, Wm, (N, OH, OW)


def _up_patches(inputs_cnhw, weight_iohw):
    """ConvTranspose2d(k=4, s=2, p=1) via the 4-phase sub-pixel decomposition.

    out[:, 2a+dy, 2b+dx] = sum_{dh,dw in {0,1}} W[:, :, 3-dy-2dh, 3-dx-2dw]
                           . in_pad[:, a+dy+dh, b+dx+dw]
    Skip connections are fused here: all inputs' windows stack along K.
    """
    _, N, H, W = inputs_cnhw[0].shape
    M = N * H * W
    padded = [jnp.pad(y, ((0, 0), (0, 0), (1, 1), (1, 1))) for y in inputs_cnhw]
    phases_x, phases_w = [], []
    for dy in (0, 1):
        for dx in (0, 1):
            x_rows, w_cols = [], []
            c_off = 0
            for y, yp in zip(inputs_cnhw, padded):
                Ci = y.shape[0]
                for dh in (0, 1):
                    for dw in (0, 1):
                        win = yp[:, :, dy + dh:dy + dh + H, dx + dw:dx + dw + W]
                        x_rows.append(win.reshape(Ci, M))
                        kh = 3 - dy - 2 * dh
                        kw = 3 - dx - 2 * dw
                        w_cols.append(weight_iohw[c_off:c_off + Ci, :, kh, kw].T)
                c_off += Ci
            phases_x.append(jnp.concatenate(x_rows, axis=0))   # (K, M) bf16
            phases_w.append(jnp.concatenate(w_cols, axis=1))   # (out_c, K)
    X = jnp.stack(phases_x, axis=0)                            # (4, K, M)
    Wm = jnp.stack(phases_w, axis=0)                           # (4, out_c, K)
    return X, Wm, (N, H, W)


# ----------------------------------------------------------------------------
# Layers
# ----------------------------------------------------------------------------
def down_conv_layer(inp, weight, *, pre_act=None, with_stats=False):
    """inp = (y_cnhw, bn_scale|None, bn_shift|None) -> raw conv output, stats."""
    y = _affine_to_bf16(*inp)
    X, Wm, (N, OH, OW) = _down_patches(y, weight)
    out_c = weight.shape[0]
    yo, stats = conv_matmul(X, Wm, pre_act=pre_act, with_stats=with_stats)
    return yo.reshape(out_c, N, OH, OW), stats


def up_conv_layer(inputs, weight, bias=None, *, pre_act=None, post_act=None,
                  with_stats=False, out_dtype=jnp.bfloat16):
    """inputs = [(y_cnhw, bn_scale|None, bn_shift|None), ...] -> raw output, stats."""
    ys = [_affine_to_bf16(*inp) for inp in inputs]
    X, Wm, (N, H, W) = _up_patches(ys, weight)
    out_c = weight.shape[1]
    y, stats = conv_matmul(X, Wm, bias=bias, pre_act=pre_act,
                           post_act=post_act, with_stats=with_stats,
                           out_dtype=out_dtype)
    # Interleave the 4 phases into the 2x-upsampled output.
    y = y.reshape(2, 2, out_c, N, H, W)
    y = jnp.transpose(y, (2, 3, 4, 0, 5, 1)).reshape(out_c, N, 2 * H, 2 * W)
    return y, stats


def _per_channel_count(t_cnhw):
    return float(t_cnhw.shape[1] * t_cnhw.shape[2] * t_cnhw.shape[3])


# ----------------------------------------------------------------------------
# PartUnet2 (num_downs=4): outermost -> ngf block -> middle block -> innermost
# ----------------------------------------------------------------------------
def init_params(key, input_nc, output_nc, ngf):
    ks = jax.random.split(key, 16)

    def conv_w(k_, oc, ic):
        return jax.random.normal(k_, (oc, ic, 4, 4), jnp.float32) * 0.05

    def convT_w(k_, ic, oc):
        return jax.random.normal(k_, (ic, oc, 4, 4), jnp.float32) * 0.05

    p = {}
    # downconvs (bias=False because norm_layer is BatchNorm2d)
    p["dc0_w"] = conv_w(ks[0], ngf, input_nc)          # outermost down
    p["dc1_w"] = conv_w(ks[1], ngf * 2, ngf)
    p["dc2_w"] = conv_w(ks[2], ngf * 2, ngf * 2)
    p["dc3_w"] = conv_w(ks[3], ngf * 2, ngf * 2)       # innermost down
    # upconvs
    p["uc3_w"] = convT_w(ks[4], ngf * 2, ngf * 2)      # innermost up (bias=False)
    p["uc2_w"] = convT_w(ks[5], ngf * 4, ngf * 2)
    p["uc1_w"] = convT_w(ks[6], ngf * 4, ngf)
    p["uc0_w"] = convT_w(ks[7], ngf * 2, output_nc)    # outermost up (has bias)
    p["uc0_b"] = jax.random.normal(ks[8], (output_nc,), jnp.float32) * 0.05
    # BatchNorm affine params (PyTorch defaults: gamma=1, beta=0)
    for name, c in [("dn1", ngf * 2), ("dn2", ngf * 2),
                    ("un3", ngf * 2), ("un2", ngf * 2), ("un1", ngf)]:
        p[name + "_g"] = jnp.ones((c,), jnp.float32)
        p[name + "_b"] = jnp.zeros((c,), jnp.float32)
    return p


def part_unet2_forward(params, x_nchw, ngf):
    del ngf  # shapes are carried by the parameters
    p = params
    x = jnp.transpose(x_nchw, (1, 0, 2, 3))            # NCHW -> (C, N, H, W)

    # ---- encoder (raw conv outputs; BN affine folded into the consumers) ----
    d1, _ = down_conv_layer((x, None, None), p["dc0_w"])                      # ngf,  H/2
    d2, s2 = down_conv_layer((d1, None, None), p["dc1_w"],
                             pre_act="leaky_relu", with_stats=True)           # 2ngf, H/4
    sc2, sh2 = bn_scale_shift(s2, p["dn1_g"], p["dn1_b"], _per_channel_count(d2))
    d3, s3 = down_conv_layer((d2, sc2, sh2), p["dc2_w"],
                             pre_act="leaky_relu", with_stats=True)           # 2ngf, H/8
    sc3, sh3 = bn_scale_shift(s3, p["dn2_g"], p["dn2_b"], _per_channel_count(d3))
    d4, _ = down_conv_layer((d3, sc3, sh3), p["dc3_w"], pre_act="leaky_relu") # innermost

    # ---- decoder (skip concats + BN affines fused into the up-conv contraction)
    u4, s4 = up_conv_layer([(d4, None, None)], p["uc3_w"],
                           pre_act="relu", with_stats=True)
    sc4, sh4 = bn_scale_shift(s4, p["un3_g"], p["un3_b"], _per_channel_count(u4))
    u3, s3u = up_conv_layer([(d3, sc3, sh3), (u4, sc4, sh4)], p["uc2_w"],
                            pre_act="relu", with_stats=True)
    sc3u, sh3u = bn_scale_shift(s3u, p["un2_g"], p["un2_b"], _per_channel_count(u3))
    u2, s2u = up_conv_layer([(d2, sc2, sh2), (u3, sc3u, sh3u)], p["uc1_w"],
                            pre_act="relu", with_stats=True)
    sc2u, sh2u = bn_scale_shift(s2u, p["un1_g"], p["un1_b"], _per_channel_count(u2))
    out, _ = up_conv_layer([(d1, None, None), (u2, sc2u, sh2u)], p["uc0_w"],
                           bias=p["uc0_b"], pre_act="relu", post_act="tanh",
                           out_dtype=jnp.float32)
    return jnp.transpose(out, (1, 0, 2, 3))            # (C,N,H,W) -> NCHW


if __name__ == "__main__":
    # Small synthetic config: PartUnet2(input_nc=3, output_nc=3, num_downs=4, ngf=8)
    input_nc, output_nc, ngf = 3, 3, 8
    batch, spatial = 2, 16                              # divisible by 2**num_downs

    key = jax.random.PRNGKey(0)
    k_params, k_x = jax.random.split(key)
    params = init_params(k_params, input_nc, output_nc, ngf)
    x = jax.random.normal(k_x, (batch, input_nc, spatial, spatial), jnp.float32)

    fwd = jax.jit(functools.partial(part_unet2_forward, ngf=ngf))
    y = fwd(params, x)
    y = jax.block_until_ready(y)

    assert y.shape == (batch, output_nc, spatial, spatial), y.shape
    assert bool(jnp.all(jnp.isfinite(y)))
    assert float(jnp.max(jnp.abs(y))) <= 1.0 + 1e-6     # Tanh output range
    print("KERNEL_OK")
</pallas_src>

<mosaic_0001>
module attributes {stable_mosaic.version = 11 : i64} {
  func.func @_conv_kernel_1k(%arg0: i32, %arg1: i32, %arg2: memref<1x48x128xbf16, #tpu.memory_space<vmem>>, %arg3: memref<1x8x48xbf16, #tpu.memory_space<vmem>>, %arg4: memref<1x8x128xbf16, #tpu.memory_space<vmem>>) attributes {dimension_semantics = [#tpu.dimension_semantics<parallel>, #tpu.dimension_semantics<parallel>], iteration_bounds = array<i64: 1, 1>, scalar_prefetch = 0 : i64, scratch_operands = 0 : i64, tpu.core_type = #tpu.core_type<tc>, window_params = [{transform_indices = @transform_0, window_bounds = array<i64: 1, 48, 128>}, {transform_indices = @transform_1, window_bounds = array<i64: 1, 8, 48>}, {transform_indices = @transform_2, window_bounds = array<i64: 1, 8, 128>}]} {
    %c0 = arith.constant 0 : index
    %c0_0 = arith.constant 0 : index
    %c0_1 = arith.constant 0 : index
    %0 = vector.load %arg2[%c0, %c0_0, %c0_1] : memref<1x48x128xbf16, #tpu.memory_space<vmem>>, vector<1x48x128xbf16>
    %1 = vector.shape_cast %0 : vector<1x48x128xbf16> to vector<48x128xbf16>
    %c0_2 = arith.constant 0 : index
    %c0_3 = arith.constant 0 : index
    %c0_4 = arith.constant 0 : index
    %2 = vector.load %arg3[%c0_2, %c0_3, %c0_4] : memref<1x8x48xbf16, #tpu.memory_space<vmem>>, vector<1x8x48xbf16>
    %3 = vector.shape_cast %2 : vector<1x8x48xbf16> to vector<8x48xbf16>
    %cst = arith.constant dense<0.000000e+00> : vector<8x128xf32>
    %4 = tpu.matmul %3, %1, %cst {dimension_numbers = #tpu.dot_dimension_numbers<[1], [0], [0], [1], [0, 0, 1, 1], [], []>} : vector<8x48xbf16>, vector<48x128xbf16>, vector<8x128xf32> -> vector<8x128xf32>
    %5 = arith.truncf %4 : vector<8x128xf32> to vector<8x128xbf16>
    %c0_5 = arith.constant 0 : index
    %c0_6 = arith.constant 0 : index
    %c0_7 = arith.constant 0 : index
    %6 = vector.load %arg4[%c0_5, %c0_6, %c0_7] : memref<1x8x128xbf16, #tpu.memory_space<vmem>>, vector<1x8x128xbf16>
    %7 = vector.shape_cast %6 : vector<1x8x128xbf16> to vector<8x128xbf16>
    %8 = vector.shape_cast %5 : vector<8x128xbf16> to vector<1x8x128xbf16>
    tpu.vector_store %arg4[%c0_5, %c0_6, %c0_7], %8 {strides = array<i32>} : memref<1x8x128xbf16, #tpu.memory_space<vmem>>, vector<1x8x128xbf16>,
    return
  }
  func.func @transform_0(%arg0: i32, %arg1: i32) -> (i32, i32, i32) {
    %c0_i32 = arith.constant 0 : i32
    %c0_i32_0 = arith.constant 0 : i32
    return %arg0, %c0_i32, %arg1 : i32, i32, i32
  }
  func.func @transform_1(%arg0: i32, %arg1: i32) -> (i32, i32, i32) {
    %c0_i32 = arith.constant 0 : i32
    %c0_i32_0 = arith.constant 0 : i32
    %c0_i32_1 = arith.constant 0 : i32
    return %arg0, %c0_i32, %c0_i32_0 : i32, i32, i32
  }
  func.func @transform_2(%arg0: i32, %arg1: i32) -> (i32, i32, i32) {
    %c0_i32 = arith.constant 0 : i32
    %c0_i32_0 = arith.constant 0 : i32
    return %arg0, %c0_i32, %arg1 : i32, i32, i32
  }
}

module attributes {stable_mosaic.version = 11 : i64} {
  func.func @_conv_kernel_1k(%arg0: i32, %arg1: i32, %arg2: memref<1x128x32xbf16, #tpu.memory_space<vmem>>, %arg3: memref<1x16x128xbf16, #tpu.memory_space<vmem>>, %arg4: memref<1x16x32xbf16, #tpu.memory_space<vmem>>, %arg5: memref<1x1x16x2xf32, #tpu.memory_space<vmem>>) attributes {dimension_semantics = [#tpu.dimension_semantics<parallel>, #tpu.dimension_semantics<parallel>], iteration_bounds = array<i64: 1, 1>, scalar_prefetch = 0 : i64, scratch_operands = 0 : i64, tpu.core_type = #tpu.core_type<tc>, window_params = [{transform_indices = @transform_0, window_bounds = array<i64: 1, 128, 32>}, {transform_indices = @transform_1, window_bounds = array<i64: 1, 16, 128>}, {transform_indices = @transform_2, window_bounds = array<i64: 1, 16, 32>}, {transform_indices = @transform_3, window_bounds = array<i64: 1, 1, 16, 2>}]} {
    %c0 = arith.constant 0 : index
    %c0_0 = arith.constant 0 : index
    %c0_1 = arith.constant 0 : index
    %0 = vector.load %arg2[%c0, %c0_0, %c0_1] : memref<1x128x32xbf16, #tpu.memory_space<vmem>>, vector<1x128x32xbf16>
    %1 = vector.shape_cast %0 : vector<1x128x32xbf16> to vector<128x32xbf16>
    %cst = arith.constant 0.000000e+00 : bf16
    %2 = vector.broadcast %cst : bf16 to vector<128x32xbf16>
    %3 = arith.cmpf oge, %1, %2 : vector<128x32xbf16>
    %cst_2 = arith.constant 2.001950e-01 : bf16
    %4 = vector.broadcast %cst_2 : bf16 to vector<128x32xbf16>
    %5 = arith.mulf %1, %4 : vector<128x32xbf16>
    %6 = arith.select %3, %1, %5 : vector<128x32xi1>, vector<128x32xbf16>
    %c0_3 = arith.constant 0 : index
    %c0_4 = arith.constant 0 : index
    %c0_5 = arith.constant 0 : index
    %7 = vector.load %arg3[%c0_3, %c0_4, %c0_5] : memref<1x16x128xbf16, #tpu.memory_space<vmem>>, vector<1x16x128xbf16>
    %8 = vector.shape_cast %7 : vector<1x16x128xbf16> to vector<16x128xbf16>
    %cst_6 = arith.constant dense<0.000000e+00> : vector<16x32xf32>
    %9 = tpu.matmul %8, %6, %cst_6 {dimension_numbers = #tpu.dot_dimension_numbers<[1], [0], [0], [1], [0, 0, 1, 1], [], []>} : vector<16x128xbf16>, vector<128x32xbf16>, vector<16x32xf32> -> vector<16x32xf32>
    %cst_7 = arith.constant dense<0.000000e+00> : vector<16xf32>
    %10 = vector.multi_reduction <add>, %9, %cst_7 [1] : vector<16x32xf32> to vector<16xf32>
    %11 = vector.shape_cast %10 : vector<16xf32> to vector<16x1xf32>
    %12 = arith.mulf %9, %9 : vector<16x32xf32>
    %cst_8 = arith.constant dense<0.000000e+00> : vector<16xf32>
    %13 = vector.multi_reduction <add>, %12, %cst_8 [1] : vector<16x32xf32> to vector<16xf32>
    %14 = vector.shape_cast %13 : vector<16xf32> to vector<16x1xf32>
    %15 = tpu.concatenate %11, %14 in 1 : vector<16x1xf32>, vector<16x1xf32> -> vector<16x2xf32>
    %c0_9 = arith.constant 0 : index
    %c0_10 = arith.constant 0 : index
    %c0_11 = arith.constant 0 : index
    %c0_12 = arith.constant 0 : index
    %16 = vector.load %arg5[%c0_9, %c0_10, %c0_11, %c0_12] : memref<1x1x16x2xf32, #tpu.memory_space<vmem>>, vector<1x1x16x2xf32>
    %17 = vector.shape_cast %16 : vector<1x1x16x2xf32> to vector<16x2xf32>
    %18 = vector.shape_cast %15 : vector<16x2xf32> to vector<1x1x16x2xf32>
    tpu.vector_store %arg5[%c0_9, %c0_10, %c0_11, %c0_12], %18 {strides = array<i32>} : memref<1x1x16x2xf32, #tpu.memory_space<vmem>>, vector<1x1x16x2xf32>,
    %19 = arith.truncf %9 : vector<16x32xf32> to vector<16x32xbf16>
    %c0_13 = arith.constant 0 : index
    %c0_14 = arith.constant 0 : index
    %c0_15 = arith.constant 0 : index
    %20 = vector.load %arg4[%c0_13, %c0_14, %c0_15] : memref<1x16x32xbf16, #tpu.memory_space<vmem>>, vector<1x16x32xbf16>
    %21 = vector.shape_cast %20 : vector<1x16x32xbf16> to vector<16x32xbf16>
    %22 = vector.shape_cast %19 : vector<16x32xbf16> to vector<1x16x32xbf16>
    tpu.vector_store %arg4[%c0_13, %c0_14, %c0_15], %22 {strides = array<i32>} : memref<1x16x32xbf16, #tpu.memory_space<vmem>>, vector<1x16x32xbf16>,
    return
  }
  func.func @transform_0(%arg0: i32, %arg1: i32) -> (i32, i32, i32) {
    %c0_i32 = arith.constant 0 : i32
    %c0_i32_0 = arith.constant 0 : i32
    return %arg0, %c0_i32, %arg1 : i32, i32, i32
  }
  func.func @transform_1(%arg0: i32, %arg1: i32) -> (i32, i32, i32) {
    %c0_i32 = arith.constant 0 : i32
    %c0_i32_0 = arith.constant 0 : i32
    %c0_i32_1 = arith.constant 0 : i32
    return %arg0, %c0_i32, %c0_i32_0 : i32, i32, i32
  }
  func.func @transform_2(%arg0: i32, %arg1: i32) -> (i32, i32, i32) {
    %c0_i32 = arith.constant 0 : i32
    %c0_i32_0 = arith.constant 0 : i32
    return %arg0, %c0_i32, %arg1 : i32, i32, i32
  }
  func.func @transform_3(%arg0: i32, %arg1: i32) -> (i32, i32, i32, i32) {
    %c0_i32 = arith.constant 0 : i32
    %c0_i32_0 = arith.constant 0 : i32
    %c0_i32_1 = arith.constant 0 : i32
    return %arg0, %arg1, %c0_i32, %c0_i32_0 : i32, i32, i32, i32
  }
}

module attributes {stable_mosaic.version = 11 : i64} {
  func.func @_conv_kernel_1k(%arg0: i32, %arg1: i32, %arg2: memref<1x256x8xbf16, #tpu.memory_space<vmem>>, %arg3: memref<1x16x256xbf16, #tpu.memory_space<vmem>>, %arg4: memref<1x16x8xbf16, #tpu.memory_space<vmem>>, %arg5: memref<1x1x16x2xf32, #tpu.memory_space<vmem>>) attributes {dimension_semantics = [#tpu.dimension_semantics<parallel>, #tpu.dimension_semantics<parallel>], iteration_bounds = array<i64: 1, 1>, scalar_prefetch = 0 : i64, scratch_operands = 0 : i64, tpu.core_type = #tpu.core_type<tc>, window_params = [{transform_indices = @transform_0, window_bounds = array<i64: 1, 256, 8>}, {transform_indices = @transform_1, window_bounds = array<i64: 1, 16, 256>}, {transform_indices = @transform_2, window_bounds = array<i64: 1, 16, 8>}, {transform_indices = @transform_3, window_bounds = array<i64: 1, 1, 16, 2>}]} {
    %c0 = arith.constant 0 : index
    %c0_0 = arith.constant 0 : index
    %c0_1 = arith.constant 0 : index
    %0 = vector.load %arg2[%c0, %c0_0, %c0_1] : memref<1x256x8xbf16, #tpu.memory_space<vmem>>, vector<1x256x8xbf16>
    %1 = vector.shape_cast %0 : vector<1x256x8xbf16> to vector<256x8xbf16>
    %cst = arith.constant 0.000000e+00 : bf16
    %2 = vector.broadcast %cst : bf16 to vector<256x8xbf16>
    %3 = arith.cmpf oge, %1, %2 : vector<256x8xbf16>
    %cst_2 = arith.constant 2.001950e-01 : bf16
    %4 = vector.broadcast %cst_2 : bf16 to vector<256x8xbf16>
    %5 = arith.mulf %1, %4 : vector<256x8xbf16>
    %6 = arith.select %3, %1, %5 : vector<256x8xi1>, vector<256x8xbf16>
    %c0_3 = arith.constant 0 : index
    %c0_4 = arith.constant 0 : index
    %c0_5 = arith.constant 0 : index
    %7 = vector.load %arg3[%c0_3, %c0_4, %c0_5] : memref<1x16x256xbf16, #tpu.memory_space<vmem>>, vector<1x16x256xbf16>
    %8 = vector.shape_cast %7 : vector<1x16x256xbf16> to vector<16x256xbf16>
    %cst_6 = arith.constant dense<0.000000e+00> : vector<16x8xf32>
    %9 = tpu.matmul %8, %6, %cst_6 {dimension_numbers = #tpu.dot_dimension_numbers<[1], [0], [0], [1], [0, 0, 1, 1], [], []>} : vector<16x256xbf16>, vector<256x8xbf16>, vector<16x8xf32> -> vector<16x8xf32>
    %cst_7 = arith.constant dense<0.000000e+00> : vector<16xf32>
    %10 = vector.multi_reduction <add>, %9, %cst_7 [1] : vector<16x8xf32> to vector<16xf32>
    %11 = vector.shape_cast %10 : vector<16xf32> to vector<16x1xf32>
    %12 = arith.mulf %9, %9 : vector<16x8xf32>
    %cst_8 = arith.constant dense<0.000000e+00> : vector<16xf32>
    %13 = vector.multi_reduction <add>, %12, %cst_8 [1] : vector<16x8xf32> to vector<16xf32>
    %14 = vector.shape_cast %13 : vector<16xf32> to vector<16x1xf32>
    %15 = tpu.concatenate %11, %14 in 1 : vector<16x1xf32>, vector<16x1xf32> -> vector<16x2xf32>
    %c0_9 = arith.constant 0 : index
    %c0_10 = arith.constant 0 : index
    %c0_11 = arith.constant 0 : index
    %c0_12 = arith.constant 0 : index
    %16 = vector.load %arg5[%c0_9, %c0_10, %c0_11, %c0_12] : memref<1x1x16x2xf32, #tpu.memory_space<vmem>>, vector<1x1x16x2xf32>
    %17 = vector.shape_cast %16 : vector<1x1x16x2xf32> to vector<16x2xf32>
    %18 = vector.shape_cast %15 : vector<16x2xf32> to vector<1x1x16x2xf32>
    tpu.vector_store %arg5[%c0_9, %c0_10, %c0_11, %c0_12], %18 {strides = array<i32>} : memref<1x1x16x2xf32, #tpu.memory_space<vmem>>, vector<1x1x16x2xf32>,
    %19 = arith.truncf %9 : vector<16x8xf32> to vector<16x8xbf16>
    %c0_13 = arith.constant 0 : index
    %c0_14 = arith.constant 0 : index
    %c0_15 = arith.constant 0 : index
    %20 = vector.load %arg4[%c0_13, %c0_14, %c0_15] : memref<1x16x8xbf16, #tpu.memory_space<vmem>>, vector<1x16x8xbf16>
    %21 = vector.shape_cast %20 : vector<1x16x8xbf16> to vector<16x8xbf16>
    %22 = vector.shape_cast %19 : vector<16x8xbf16> to vector<1x16x8xbf16>
    tpu.vector_store %arg4[%c0_13, %c0_14, %c0_15], %22 {strides = array<i32>} : memref<1x16x8xbf16, #tpu.memory_space<vmem>>, vector<1x16x8xbf16>,
    return
  }
  func.func @transform_0(%arg0: i32, %arg1: i32) -> (i32, i32, i32) {
    %c0_i32 = arith.constant 0 : i32
    %c0_i32_0 = arith.constant 0 : i32
    return %arg0, %c0_i32, %arg1 : i32, i32, i32
  }
  func.func @transform_1(%arg0: i32, %arg1: i32) -> (i32, i32, i32) {
    %c0_i32 = arith.constant 0 : i32
    %c0_i32_0 = arith.constant 0 : i32
    %c0_i32_1 = arith.constant 0 : i32
    return %arg0, %c0_i32, %c0_i32_0 : i32, i32, i32
  }
  func.func @transform_2(%arg0: i32, %arg1: i32) -> (i32, i32, i32) {
    %c0_i32 = arith.constant 0 : i32
    %c0_i32_0 = arith.constant 0 : i32
    return %arg0, %c0_i32, %arg1 : i32, i32, i32
  }
  func.func @transform_3(%arg0: i32, %arg1: i32) -> (i32, i32, i32, i32) {
    %c0_i32 = arith.constant 0 : i32
    %c0_i32_0 = arith.constant 0 : i32
    %c0_i32_1 = arith.constant 0 : i32
    return %arg0, %arg1, %c0_i32, %c0_i32_0 : i32, i32, i32, i32
  }
}

module attributes {stable_mosaic.version = 11 : i64} {
  func.func @_conv_kernel_1k(%arg0: i32, %arg1: i32, %arg2: memref<1x256x2xbf16, #tpu.memory_space<vmem>>, %arg3: memref<1x16x256xbf16, #tpu.memory_space<vmem>>, %arg4: memref<1x16x2xbf16, #tpu.memory_space<vmem>>) attributes {dimension_semantics = [#tpu.dimension_semantics<parallel>, #tpu.dimension_semantics<parallel>], iteration_bounds = array<i64: 1, 1>, scalar_prefetch = 0 : i64, scratch_operands = 0 : i64, tpu.core_type = #tpu.core_type<tc>, window_params = [{transform_indices = @transform_0, window_bounds = array<i64: 1, 256, 2>}, {transform_indices = @transform_1, window_bounds = array<i64: 1, 16, 256>}, {transform_indices = @transform_2, window_bounds = array<i64: 1, 16, 2>}]} {
    %c0 = arith.constant 0 : index
    %c0_0 = arith.constant 0 : index
    %c0_1 = arith.constant 0 : index
    %0 = vector.load %arg2[%c0, %c0_0, %c0_1] : memref<1x256x2xbf16, #tpu.memory_space<vmem>>, vector<1x256x2xbf16>
    %1 = vector.shape_cast %0 : vector<1x256x2xbf16> to vector<256x2xbf16>
    %cst = arith.constant 0.000000e+00 : bf16
    %2 = vector.broadcast %cst : bf16 to vector<256x2xbf16>
    %3 = arith.cmpf oge, %1, %2 : vector<256x2xbf16>
    %cst_2 = arith.constant 2.001950e-01 : bf16
    %4 = vector.broadcast %cst_2 : bf16 to vector<256x2xbf16>
    %5 = arith.mulf %1, %4 : vector<256x2xbf16>
    %6 = arith.select %3, %1, %5 : vector<256x2xi1>, vector<256x2xbf16>
    %c0_3 = arith.constant 0 : index
    %c0_4 = arith.constant 0 : index
    %c0_5 = arith.constant 0 : index
    %7 = vector.load %arg3[%c0_3, %c0_4, %c0_5] : memref<1x16x256xbf16, #tpu.memory_space<vmem>>, vector<1x16x256xbf16>
    %8 = vector.shape_cast %7 : vector<1x16x256xbf16> to vector<16x256xbf16>
    %cst_6 = arith.constant dense<0.000000e+00> : vector<16x2xf32>
    %9 = tpu.matmul %8, %6, %cst_6 {dimension_numbers = #tpu.dot_dimension_numbers<[1], [0], [0], [1], [0, 0, 1, 1], [], []>} : vector<16x256xbf16>, vector<256x2xbf16>, vector<16x2xf32> -> vector<16x2xf32>
    %10 = arith.truncf %9 : vector<16x2xf32> to vector<16x2xbf16>
    %c0_7 = arith.constant 0 : index
    %c0_8 = arith.constant 0 : index
    %c0_9 = arith.constant 0 : index
    %11 = vector.load %arg4[%c0_7, %c0_8, %c0_9] : memref<1x16x2xbf16, #tpu.memory_space<vmem>>, vector<1x16x2xbf16>
    %12 = vector.shape_cast %11 : vector<1x16x2xbf16> to vector<16x2xbf16>
    %13 = vector.shape_cast %10 : vector<16x2xbf16> to vector<1x16x2xbf16>
    tpu.vector_store %arg4[%c0_7, %c0_8, %c0_9], %13 {strides = array<i32>} : memref<1x16x2xbf16, #tpu.memory_space<vmem>>, vector<1x16x2xbf16>,
    return
  }
  func.func @transform_0(%arg0: i32, %arg1: i32) -> (i32, i32, i32) {
    %c0_i32 = arith.constant 0 : i32
    %c0_i32_0 = arith.constant 0 : i32
    return %arg0, %c0_i32, %arg1 : i32, i32, i32
  }
  func.func @transform_1(%arg0: i32, %arg1: i32) -> (i32, i32, i32) {
    %c0_i32 = arith.constant 0 : i32
    %c0_i32_0 = arith.constant 0 : i32
    %c0_i32_1 = arith.constant 0 : i32
    return %arg0, %c0_i32, %c0_i32_0 : i32, i32, i32
  }
  func.func @transform_2(%arg0: i32, %arg1: i32) -> (i32, i32, i32) {
    %c0_i32 = arith.constant 0 : i32
    %c0_i32_0 = arith.constant 0 : i32
    return %arg0, %c0_i32, %arg1 : i32, i32, i32
  }
}

module attributes {stable_mosaic.version = 11 : i64} {
  func.func @_conv_kernel_1k(%arg0: i32, %arg1: i32, %arg2: memref<1x64x2xbf16, #tpu.memory_space<vmem>>, %arg3: memref<1x16x64xbf16, #tpu.memory_space<vmem>>, %arg4: memref<1x16x2xbf16, #tpu.memory_space<vmem>>, %arg5: memref<1x1x16x2xf32, #tpu.memory_space<vmem>>) attributes {dimension_semantics = [#tpu.dimension_semantics<parallel>, #tpu.dimension_semantics<parallel>], iteration_bounds = array<i64: 4, 1>, scalar_prefetch = 0 : i64, scratch_operands = 0 : i64, tpu.core_type = #tpu.core_type<tc>, window_params = [{transform_indices = @transform_0, window_bounds = array<i64: 1, 64, 2>}, {transform_indices = @transform_1, window_bounds = array<i64: 1, 16, 64>}, {transform_indices = @transform_2, window_bounds = array<i64: 1, 16, 2>}, {transform_indices = @transform_3, window_bounds = array<i64: 1, 1, 16, 2>}]} {
    %c0 = arith.constant 0 : index
    %c0_0 = arith.constant 0 : index
    %c0_1 = arith.constant 0 : index
    %0 = vector.load %arg2[%c0, %c0_0, %c0_1] : memref<1x64x2xbf16, #tpu.memory_space<vmem>>, vector<1x64x2xbf16>
    %1 = vector.shape_cast %0 : vector<1x64x2xbf16> to vector<64x2xbf16>
    %cst = arith.constant 0.000000e+00 : bf16
    %2 = vector.broadcast %cst : bf16 to vector<64x2xbf16>
    %3 = arith.maximumf %1, %2 : vector<64x2xbf16>
    %c0_2 = arith.constant 0 : index
    %c0_3 = arith.constant 0 : index
    %c0_4 = arith.constant 0 : index
    %4 = vector.load %arg3[%c0_2, %c0_3, %c0_4] : memref<1x16x64xbf16, #tpu.memory_space<vmem>>, vector<1x16x64xbf16>
    %5 = vector.shape_cast %4 : vector<1x16x64xbf16> to vector<16x64xbf16>
    %cst_5 = arith.constant dense<0.000000e+00> : vector<16x2xf32>
    %6 = tpu.matmul %5, %3, %cst_5 {dimension_numbers = #tpu.dot_dimension_numbers<[1], [0], [0], [1], [0, 0, 1, 1], [], []>} : vector<16x64xbf16>, vector<64x2xbf16>, vector<16x2xf32> -> vector<16x2xf32>
    %cst_6 = arith.constant dense<0.000000e+00> : vector<16xf32>
    %7 = vector.multi_reduction <add>, %6, %cst_6 [1] : vector<16x2xf32> to vector<16xf32>
    %8 = vector.shape_cast %7 : vector<16xf32> to vector<16x1xf32>
    %9 = arith.mulf %6, %6 : vector<16x2xf32>
    %cst_7 = arith.constant dense<0.000000e+00> : vector<16xf32>
    %10 = vector.multi_reduction <add>, %9, %cst_7 [1] : vector<16x2xf32> to vector<16xf32>
    %11 = vector.shape_cast %10 : vector<16xf32> to vector<16x1xf32>
    %12 = tpu.concatenate %8, %11 in 1 : vector<16x1xf32>, vector<16x1xf32> -> vector<16x2xf32>
    %c0_8 = arith.constant 0 : index
    %c0_9 = arith.constant 0 : index
    %c0_10 = arith.constant 0 : index
    %c0_11 = arith.constant 0 : index
    %13 = vector.load %arg5[%c0_8, %c0_9, %c0_10, %c0_11] : memref<1x1x16x2xf32, #tpu.memory_space<vmem>>, vector<1x1x16x2xf32>
    %14 = vector.shape_cast %13 : vector<1x1x16x2xf32> to vector<16x2xf32>
    %15 = vector.shape_cast %12 : vector<16x2xf32> to vector<1x1x16x2xf32>
    tpu.vector_store %arg5[%c0_8, %c0_9, %c0_10, %c0_11], %15 {strides = array<i32>} : memref<1x1x16x2xf32, #tpu.memory_space<vmem>>, vector<1x1x16x2xf32>,
    %16 = arith.truncf %6 : vector<16x2xf32> to vector<16x2xbf16>
    %c0_12 = arith.constant 0 : index
    %c0_13 = arith.constant 0 : index
    %c0_14 = arith.constant 0 : index
    %17 = vector.load %arg4[%c0_12, %c0_13, %c0_14] : memref<1x16x2xbf16, #tpu.memory_space<vmem>>, vector<1x16x2xbf16>
    %18 = vector.shape_cast %17 : vector<1x16x2xbf16> to vector<16x2xbf16>
    %19 = vector.shape_cast %16 : vector<16x2xbf16> to vector<1x16x2xbf16>
    tpu.vector_store %arg4[%c0_12, %c0_13, %c0_14], %19 {strides = array<i32>} : memref<1x16x2xbf16, #tpu.memory_space<vmem>>, vector<1x16x2xbf16>,
    return
  }
  func.func @transform_0(%arg0: i32, %arg1: i32) -> (i32, i32, i32) {
    %c0_i32 = arith.constant 0 : i32
    %c0_i32_0 = arith.constant 0 : i32
    return %arg0, %c0_i32, %arg1 : i32, i32, i32
  }
  func.func @transform_1(%arg0: i32, %arg1: i32) -> (i32, i32, i32) {
    %c0_i32 = arith.constant 0 : i32
    %c0_i32_0 = arith.constant 0 : i32
    %c0_i32_1 = arith.constant 0 : i32
    return %arg0, %c0_i32, %c0_i32_0 : i32, i32, i32
  }
  func.func @transform_2(%arg0: i32, %arg1: i32) -> (i32, i32, i32) {
    %c0_i32 = arith.constant 0 : i32
    %c0_i32_0 = arith.constant 0 : i32
    return %arg0, %c0_i32, %arg1 : i32, i32, i32
  }
  func.func @transform_3(%arg0: i32, %arg1: i32) -> (i32, i32, i32, i32) {
    %c0_i32 = arith.constant 0 : i32
    %c0_i32_0 = arith.constant 0 : i32
    %c0_i32_1 = arith.constant 0 : i32
    return %arg0, %arg1, %c0_i32, %c0_i32_0 : i32, i32, i32, i32
  }
}

module attributes {stable_mosaic.version = 11 : i64} {
  func.func @_conv_kernel_1k(%arg0: i32, %arg1: i32, %arg2: memref<1x128x8xbf16, #tpu.memory_space<vmem>>, %arg3: memref<1x16x128xbf16, #tpu.memory_space<vmem>>, %arg4: memref<1x16x8xbf16, #tpu.memory_space<vmem>>, %arg5: memref<1x1x16x2xf32, #tpu.memory_space<vmem>>) attributes {dimension_semantics = [#tpu.dimension_semantics<parallel>, #tpu.dimension_semantics<parallel>], iteration_bounds = array<i64: 4, 1>, scalar_prefetch = 0 : i64, scratch_operands = 0 : i64, tpu.core_type = #tpu.core_type<tc>, window_params = [{transform_indices = @transform_0, window_bounds = array<i64: 1, 128, 8>}, {transform_indices = @transform_1, window_bounds = array<i64: 1, 16, 128>}, {transform_indices = @transform_2, window_bounds = array<i64: 1, 16, 8>}, {transform_indices = @transform_3, window_bounds = array<i64: 1, 1, 16, 2>}]} {
    %c0 = arith.constant 0 : index
    %c0_0 = arith.constant 0 : index
    %c0_1 = arith.constant 0 : index
    %0 = vector.load %arg2[%c0, %c0_0, %c0_1] : memref<1x128x8xbf16, #tpu.memory_space<vmem>>, vector<1x128x8xbf16>
    %1 = vector.shape_cast %0 : vector<1x128x8xbf16> to vector<128x8xbf16>
    %cst = arith.constant 0.000000e+00 : bf16
    %2 = vector.broadcast %cst : bf16 to vector<128x8xbf16>
    %3 = arith.maximumf %1, %2 : vector<128x8xbf16>
    %c0_2 = arith.constant 0 : index
    %c0_3 = arith.constant 0 : index
    %c0_4 = arith.constant 0 : index
    %4 = vector.load %arg3[%c0_2, %c0_3, %c0_4] : memref<1x16x128xbf16, #tpu.memory_space<vmem>>, vector<1x16x128xbf16>
    %5 = vector.shape_cast %4 : vector<1x16x128xbf16> to vector<16x128xbf16>
    %cst_5 = arith.constant dense<0.000000e+00> : vector<16x8xf32>
    %6 = tpu.matmul %5, %3, %cst_5 {dimension_numbers = #tpu.dot_dimension_numbers<[1], [0], [0], [1], [0, 0, 1, 1], [], []>} : vector<16x128xbf16>, vector<128x8xbf16>, vector<16x8xf32> -> vector<16x8xf32>
    %cst_6 = arith.constant dense<0.000000e+00> : vector<16xf32>
    %7 = vector.multi_reduction <add>, %6, %cst_6 [1] : vector<16x8xf32> to vector<16xf32>
    %8 = vector.shape_cast %7 : vector<16xf32> to vector<16x1xf32>
    %9 = arith.mulf %6, %6 : vector<16x8xf32>
    %cst_7 = arith.constant dense<0.000000e+00> : vector<16xf32>
    %10 = vector.multi_reduction <add>, %9, %cst_7 [1] : vector<16x8xf32> to vector<16xf32>
    %11 = vector.shape_cast %10 : vector<16xf32> to vector<16x1xf32>
    %12 = tpu.concatenate %8, %11 in 1 : vector<16x1xf32>, vector<16x1xf32> -> vector<16x2xf32>
    %c0_8 = arith.constant 0 : index
    %c0_9 = arith.constant 0 : index
    %c0_10 = arith.constant 0 : index
    %c0_11 = arith.constant 0 : index
    %13 = vector.load %arg5[%c0_8, %c0_9, %c0_10, %c0_11] : memref<1x1x16x2xf32, #tpu.memory_space<vmem>>, vector<1x1x16x2xf32>
    %14 = vector.shape_cast %13 : vector<1x1x16x2xf32> to vector<16x2xf32>
    %15 = vector.shape_cast %12 : vector<16x2xf32> to vector<1x1x16x2xf32>
    tpu.vector_store %arg5[%c0_8, %c0_9, %c0_10, %c0_11], %15 {strides = array<i32>} : memref<1x1x16x2xf32, #tpu.memory_space<vmem>>, vector<1x1x16x2xf32>,
    %16 = arith.truncf %6 : vector<16x8xf32> to vector<16x8xbf16>
    %c0_12 = arith.constant 0 : index
    %c0_13 = arith.constant 0 : index
    %c0_14 = arith.constant 0 : index
    %17 = vector.load %arg4[%c0_12, %c0_13, %c0_14] : memref<1x16x8xbf16, #tpu.memory_space<vmem>>, vector<1x16x8xbf16>
    %18 = vector.shape_cast %17 : vector<1x16x8xbf16> to vector<16x8xbf16>
    %19 = vector.shape_cast %16 : vector<16x8xbf16> to vector<1x16x8xbf16>
    tpu.vector_store %arg4[%c0_12, %c0_13, %c0_14], %19 {strides = array<i32>} : memref<1x16x8xbf16, #tpu.memory_space<vmem>>, vector<1x16x8xbf16>,
    return
  }
  func.func @transform_0(%arg0: i32, %arg1: i32) -> (i32, i32, i32) {
    %c0_i32 = arith.constant 0 : i32
    %c0_i32_0 = arith.constant 0 : i32
    return %arg0, %c0_i32, %arg1 : i32, i32, i32
  }
  func.func @transform_1(%arg0: i32, %arg1: i32) -> (i32, i32, i32) {
    %c0_i32 = arith.constant 0 : i32
    %c0_i32_0 = arith.constant 0 : i32
    %c0_i32_1 = arith.constant 0 : i32
    return %arg0, %c0_i32, %c0_i32_0 : i32, i32, i32
  }
  func.func @transform_2(%arg0: i32, %arg1: i32) -> (i32, i32, i32) {
    %c0_i32 = arith.constant 0 : i32
    %c0_i32_0 = arith.constant 0 : i32
    return %arg0, %c0_i32, %arg1 : i32, i32, i32
  }
  func.func @transform_3(%arg0: i32, %arg1: i32) -> (i32, i32, i32, i32) {
    %c0_i32 = arith.constant 0 : i32
    %c0_i32_0 = arith.constant 0 : i32
    %c0_i32_1 = arith.constant 0 : i32
    return %arg0, %arg1, %c0_i32, %c0_i32_0 : i32, i32, i32, i32
  }
}

module attributes {stable_mosaic.version = 11 : i64} {
  func.func @_conv_kernel_1k(%arg0: i32, %arg1: i32, %arg2: memref<1x128x32xbf16, #tpu.memory_space<vmem>>, %arg3: memref<1x8x128xbf16, #tpu.memory_space<vmem>>, %arg4: memref<1x8x32xbf16, #tpu.memory_space<vmem>>, %arg5: memref<1x1x8x2xf32, #tpu.memory_space<vmem>>) attributes {dimension_semantics = [#tpu.dimension_semantics<parallel>, #tpu.dimension_semantics<parallel>], iteration_bounds = array<i64: 4, 1>, scalar_prefetch = 0 : i64, scratch_operands = 0 : i64, tpu.core_type = #tpu.core_type<tc>, window_params = [{transform_indices = @transform_0, window_bounds = array<i64: 1, 128, 32>}, {transform_indices = @transform_1, window_bounds = array<i64: 1, 8, 128>}, {transform_indices = @transform_2, window_bounds = array<i64: 1, 8, 32>}, {transform_indices = @transform_3, window_bounds = array<i64: 1, 1, 8, 2>}]} {
    %c0 = arith.constant 0 : index
    %c0_0 = arith.constant 0 : index
    %c0_1 = arith.constant 0 : index
    %0 = vector.load %arg2[%c0, %c0_0, %c0_1] : memref<1x128x32xbf16, #tpu.memory_space<vmem>>, vector<1x128x32xbf16>
    %1 = vector.shape_cast %0 : vector<1x128x32xbf16> to vector<128x32xbf16>
    %cst = arith.constant 0.000000e+00 : bf16
    %2 = vector.broadcast %cst : bf16 to vector<128x32xbf16>
    %3 = arith.maximumf %1, %2 : vector<128x32xbf16>
    %c0_2 = arith.constant 0 : index
    %c0_3 = arith.constant 0 : index
    %c0_4 = arith.constant 0 : index
    %4 = vector.load %arg3[%c0_2, %c0_3, %c0_4] : memref<1x8x128xbf16, #tpu.memory_space<vmem>>, vector<1x8x128xbf16>
    %5 = vector.shape_cast %4 : vector<1x8x128xbf16> to vector<8x128xbf16>
    %cst_5 = arith.constant dense<0.000000e+00> : vector<8x32xf32>
    %6 = tpu.matmul %5, %3, %cst_5 {dimension_numbers = #tpu.dot_dimension_numbers<[1], [0], [0], [1], [0, 0, 1, 1], [], []>} : vector<8x128xbf16>, vector<128x32xbf16>, vector<8x32xf32> -> vector<8x32xf32>
    %cst_6 = arith.constant dense<0.000000e+00> : vector<8xf32>
    %7 = vector.multi_reduction <add>, %6, %cst_6 [1] : vector<8x32xf32> to vector<8xf32>
    %8 = vector.shape_cast %7 : vector<8xf32> to vector<8x1xf32>
    %9 = arith.mulf %6, %6 : vector<8x32xf32>
    %cst_7 = arith.constant dense<0.000000e+00> : vector<8xf32>
    %10 = vector.multi_reduction <add>, %9, %cst_7 [1] : vector<8x32xf32> to vector<8xf32>
    %11 = vector.shape_cast %10 : vector<8xf32> to vector<8x1xf32>
    %12 = tpu.concatenate %8, %11 in 1 : vector<8x1xf32>, vector<8x1xf32> -> vector<8x2xf32>
    %c0_8 = arith.constant 0 : index
    %c0_9 = arith.constant 0 : index
    %c0_10 = arith.constant 0 : index
    %c0_11 = arith.constant 0 : index
    %13 = vector.load %arg5[%c0_8, %c0_9, %c0_10, %c0_11] : memref<1x1x8x2xf32, #tpu.memory_space<vmem>>, vector<1x1x8x2xf32>
    %14 = vector.shape_cast %13 : vector<1x1x8x2xf32> to vector<8x2xf32>
    %15 = vector.shape_cast %12 : vector<8x2xf32> to vector<1x1x8x2xf32>
    tpu.vector_store %arg5[%c0_8, %c0_9, %c0_10, %c0_11], %15 {strides = array<i32>} : memref<1x1x8x2xf32, #tpu.memory_space<vmem>>, vector<1x1x8x2xf32>,
    %16 = arith.truncf %6 : vector<8x32xf32> to vector<8x32xbf16>
    %c0_12 = arith.constant 0 : index
    %c0_13 = arith.constant 0 : index
    %c0_14 = arith.constant 0 : index
    %17 = vector.load %arg4[%c0_12, %c0_13, %c0_14] : memref<1x8x32xbf16, #tpu.memory_space<vmem>>, vector<1x8x32xbf16>
    %18 = vector.shape_cast %17 : vector<1x8x32xbf16> to vector<8x32xbf16>
    %19 = vector.shape_cast %16 : vector<8x32xbf16> to vector<1x8x32xbf16>
    tpu.vector_store %arg4[%c0_12, %c0_13, %c0_14], %19 {strides = array<i32>} : memref<1x8x32xbf16, #tpu.memory_space<vmem>>, vector<1x8x32xbf16>,
    return
  }
  func.func @transform_0(%arg0: i32, %arg1: i32) -> (i32, i32, i32) {
    %c0_i32 = arith.constant 0 : i32
    %c0_i32_0 = arith.constant 0 : i32
    return %arg0, %c0_i32, %arg1 : i32, i32, i32
  }
  func.func @transform_1(%arg0: i32, %arg1: i32) -> (i32, i32, i32) {
    %c0_i32 = arith.constant 0 : i32
    %c0_i32_0 = arith.constant 0 : i32
    %c0_i32_1 = arith.constant 0 : i32
    return %arg0, %c0_i32, %c0_i32_0 : i32, i32, i32
  }
  func.func @transform_2(%arg0: i32, %arg1: i32) -> (i32, i32, i32) {
    %c0_i32 = arith.constant 0 : i32
    %c0_i32_0 = arith.constant 0 : i32
    return %arg0, %c0_i32, %arg1 : i32, i32, i32
  }
  func.func @transform_3(%arg0: i32, %arg1: i32) -> (i32, i32, i32, i32) {
    %c0_i32 = arith.constant 0 : i32
    %c0_i32_0 = arith.constant 0 : i32
    %c0_i32_1 = arith.constant 0 : i32
    return %arg0, %arg1, %c0_i32, %c0_i32_0 : i32, i32, i32, i32
  }
}

module attributes {stable_mosaic.version = 11 : i64} {
  func.func @_conv_kernel_1k(%arg0: i32, %arg1: i32, %arg2: memref<1x64x128xbf16, #tpu.memory_space<vmem>>, %arg3: memref<1x3x64xbf16, #tpu.memory_space<vmem>>, %arg4: memref<3x1xf32, #tpu.memory_space<vmem>>, %arg5: memref<1x3x128xf32, #tpu.memory_space<vmem>>) attributes {dimension_semantics = [#tpu.dimension_semantics<parallel>, #tpu.dimension_semantics<parallel>], iteration_bounds = array<i64: 4, 1>, scalar_prefetch = 0 : i64, scratch_operands = 0 : i64, tpu.core_type = #tpu.core_type<tc>, window_params = [{transform_indices = @transform_0, window_bounds = array<i64: 1, 64, 128>}, {transform_indices = @transform_1, window_bounds = array<i64: 1, 3, 64>}, {pipeline_mode = #tpu.pipeline_mode<synchronous>, transform_indices = @transform_2, window_bounds = array<i64: 3, 1>}, {transform_indices = @transform_3, window_bounds = array<i64: 1, 3, 128>}]} {
    %c0 = arith.constant 0 : index
    %c0_0 = arith.constant 0 : index
    %c0_1 = arith.constant 0 : index
    %0 = vector.load %arg2[%c0, %c0_0, %c0_1] : memref<1x64x128xbf16, #tpu.memory_space<vmem>>, vector<1x64x128xbf16>
    %1 = vector.shape_cast %0 : vector<1x64x128xbf16> to vector<64x128xbf16>
    %cst = arith.constant 0.000000e+00 : bf16
    %2 = vector.broadcast %cst : bf16 to vector<64x128xbf16>
    %3 = arith.maximumf %1, %2 : vector<64x128xbf16>
    %c0_2 = arith.constant 0 : index
    %c0_3 = arith.constant 0 : index
    %c0_4 = arith.constant 0 : index
    %4 = vector.load %arg3[%c0_2, %c0_3, %c0_4] : memref<1x3x64xbf16, #tpu.memory_space<vmem>>, vector<1x3x64xbf16>
    %5 = vector.shape_cast %4 : vector<1x3x64xbf16> to vector<3x64xbf16>
    %cst_5 = arith.constant dense<0.000000e+00> : vector<3x128xf32>
    %6 = tpu.matmul %5, %3, %cst_5 {dimension_numbers = #tpu.dot_dimension_numbers<[1], [0], [0], [1], [0, 0, 1, 1], [], []>} : vector<3x64xbf16>, vector<64x128xbf16>, vector<3x128xf32> -> vector<3x128xf32>
    %c0_6 = arith.constant 0 : index
    %c0_7 = arith.constant 0 : index
    %7 = vector.load %arg4[%c0_6, %c0_7] : memref<3x1xf32, #tpu.memory_space<vmem>>, vector<3x1xf32>
    %8 = vector.broadcast %7 : vector<3x1xf32> to vector<3x128xf32>
    %9 = arith.addf %6, %8 : vector<3x128xf32>
    %10 = math.tanh %9 : vector<3x128xf32>
    %c0_8 = arith.constant 0 : index
    %c0_9 = arith.constant 0 : index
    %c0_10 = arith.constant 0 : index
    %11 = vector.load %arg5[%c0_8, %c0_9, %c0_10] : memref<1x3x128xf32, #tpu.memory_space<vmem>>, vector<1x3x128xf32>
    %12 = vector.shape_cast %11 : vector<1x3x128xf32> to vector<3x128xf32>
    %13 = vector.shape_cast %10 : vector<3x128xf32> to vector<1x3x128xf32>
    tpu.vector_store %arg5[%c0_8, %c0_9, %c0_10], %13 {strides = array<i32>} : memref<1x3x128xf32, #tpu.memory_space<vmem>>, vector<1x3x128xf32>,
    return
  }
  func.func @transform_0(%arg0: i32, %arg1: i32) -> (i32, i32, i32) {
    %c0_i32 = arith.constant 0 : i32
    %c0_i32_0 = arith.constant 0 : i32
    return %arg0, %c0_i32, %arg1 : i32, i32, i32
  }
  func.func @transform_1(%arg0: i32, %arg1: i32) -> (i32, i32, i32) {
    %c0_i32 = arith.constant 0 : i32
    %c0_i32_0 = arith.constant 0 : i32
    %c0_i32_1 = arith.constant 0 : i32
    return %arg0, %c0_i32, %c0_i32_0 : i32, i32, i32
  }
  func.func @transform_2(%arg0: i32, %arg1: i32) -> (i32, i32) {
    %c0_i32 = arith.constant 0 : i32
    %c0_i32_0 = arith.constant 0 : i32
    %c0_i32_1 = arith.constant 0 : i32
    return %c0_i32, %c0_i32_0 : i32, i32
  }
  func.func @transform_3(%arg0: i32, %arg1: i32) -> (i32, i32, i32) {
    %c0_i32 = arith.constant 0 : i32
    %c0_i32_0 = arith.constant 0 : i32
    return %arg0, %c0_i32, %arg1 : i32, i32, i32
  }
}

</mosaic_0001>

<llo_original>
// kernel: part_unet2_forward.8
$region0: #{part_unet2_forward.8}
  #allocation0 [shape = 'u32[]', space=smem, size = 0x4, offset = 0x4, fixed_abs, tag = 'smem constant byte address 0x4 - core index']
  #allocation1 [shape = 'u32[72,128]{1,0:T(1,128)}', space=vmem, size = 0x9000, scoped, tag = 'internal scratch']
  %s0 = inlined_call_operand.vmem [shape: bf16[1,48,128], index: 0, kind: input, shape index: {}]
  %s1 = inlined_call_operand.vmem [shape: bf16[1,8,48], index: 1, kind: input, shape index: {}]
  %s2 = inlined_call_operand.vmem [shape: bf16[1,8,128], index: 2, kind: output, shape index: {}]
  %s3 = sld [smem:[#allocation0]]
  $region18: #{part_unet2_forward.8} parent=0
    _
  %s5 = ssub.s32 1, %s3
  %s6 = scalar_select 0, %s5, %s3
  // Predicated region
  $region2: #{part_unet2_forward.8} parent=0 // pred_check
    _
  $region3: #{part_unet2_forward.8} parent=0 // pred_check_branch
    %8 = sbr.rel (0) target = $region5
  $region4: #{part_unet2_forward.8} parent=0 // pred_region
    _
  $region5: #{part_unet2_forward.8} parent=0 // pred_fallthru
    _
  // Predicated region
  $region6: #{part_unet2_forward.8} parent=0 // pred_check
    _
  $region7: #{part_unet2_forward.8} parent=0 // pred_check_branch
    %10 = sbr.rel (0) target = $region9
  $region8: #{part_unet2_forward.8} parent=0 // pred_region
    _
  $region9: #{part_unet2_forward.8} parent=0 // pred_fallthru
    _
  %v12 = vld [vmem:[%s0] sm:$0xf]
  %v13 = vld [vmem:[%s0 + $0x4] sm:$0xf]
  %v14 = vld [vmem:[%s0 + $0x8] sm:$0xf]
  %v15 = vld [vmem:[%s0 + $0xc] sm:$0xf]
  %v16 = vld [vmem:[%s0 + $0x10] sm:$0xf]
  %v17 = vld [vmem:[%s0 + $0x14] sm:$0xf]
  %v18 = vld [vmem:[%s1] sm:$0xf]
  %v25 = vunpack.c.l.b16 %v12
  %v26 = vunpack.c.l.b16 %v13
  %v27 = vunpack.c.l.b16 %v14
  %v28 = vunpack.c.l.b16 %v15
  %v29 = vunpack.c.l.b16 %v16
  %v30 = vunpack.c.l.b16 %v17
  %v31 = vpack.c.b16 %v26, %v25
  %v32 = vpack.c.b16 %v28, %v27
  %v33 = vpack.c.b16 %v30, %v29
  %vm37 = vcmask 392192
  %v39 = vsel %vm37, %v18, 0
  %41 = vmatpush.bf16.msra.mxu0 0
  %42 = vmatpush.bf16.msra.mxu0 0
  %43 = vmatpush.bf16.msra.mxu0 0
  %44 = vmatpush.bf16.msra.mxu0 0
  %45 = vmatpush.bf16.msra.mxu0 0
  %46 = vmatpush.bf16.msra.mxu0 %v33
  %47 = vmatpush.bf16.msra.mxu0 %v32
  %48 = vmatpush.bf16.msra.mxu0 %v31
  %49 = vmatmul.bf16.gmra.mxu0 %v39
  %v50 = vpop.f32.mrf.mxu0
  %v51 = vadd.f32 0.0, %v50
  %v52 = vpop.f32.mrf.mxu0
  %53 = vdwg.mxu0
  %v54 = vpack.c.bf16 %v51, %v51
  %55 = vst [vmem:[%s2] sm:$0xf] %v54
  // Predicated region
  $region10: #{part_unet2_forward.8} parent=0 // pred_check
    _
  $region11: #{part_unet2_forward.8} parent=0 // pred_check_branch
    %57 = sbr.rel (0) target = $region13
  $region12: #{part_unet2_forward.8} parent=0 // pred_region
    _
  $region13: #{part_unet2_forward.8} parent=0 // pred_fallthru
    _
  // Predicated region
  $region14: #{part_unet2_forward.8} parent=0 // pred_check
    _
  $region15: #{part_unet2_forward.8} parent=0 // pred_check_branch
    %59 = sbr.rel (0) target = $region17
  $region16: #{part_unet2_forward.8} parent=0 // pred_region
    _
  $region17: #{part_unet2_forward.8} parent=0 // pred_fallthru
    _

// kernel: part_unet2_forward.9
$region0: #{part_unet2_forward.9}
  #allocation0 [shape = 'u32[]', space=smem, size = 0x4, offset = 0x4, fixed_abs, tag = 'smem constant byte address 0x4 - core index']
  #allocation1 [shape = 'u32[72,128]{1,0:T(1,128)}', space=vmem, size = 0x9000, scoped, tag = 'internal scratch']
  %s0 = inlined_call_operand.vmem [shape: bf16[1,128,32], index: 0, kind: input, shape index: {}]
  %s1 = inlined_call_operand.vmem [shape: bf16[1,16,128], index: 1, kind: input, shape index: {}]
  %s2 = inlined_call_operand.vmem [shape: bf16[1,16,32], index: 2, kind: output, shape index: {0}]
  %s3 = inlined_call_operand.vmem [shape: f32[1,1,16,2], index: 3, kind: output, shape index: {1}]
  %4 = xla_tuple %s2, %s3
  %s5 = sld [smem:[#allocation0]]
  $region26: #{part_unet2_forward.9} parent=0
    _
  %s7 = ssub.s32 1, %s5
  %s8 = scalar_select 0, %s7, %s5
  // Predicated region
  $region2: #{part_unet2_forward.9} parent=0 // pred_check
    _
  $region3: #{part_unet2_forward.9} parent=0 // pred_check_branch
    %10 = sbr.rel (0) target = $region5
  $region4: #{part_unet2_forward.9} parent=0 // pred_region
    _
  $region5: #{part_unet2_forward.9} parent=0 // pred_fallthru
    _
  // Predicated region
  $region6: #{part_unet2_forward.9} parent=0 // pred_check
    _
  $region7: #{part_unet2_forward.9} parent=0 // pred_check_branch
    %12 = sbr.rel (0) target = $region9
  $region8: #{part_unet2_forward.9} parent=0 // pred_region
    _
  $region9: #{part_unet2_forward.9} parent=0 // pred_fallthru
    _
  %v13 = vld [vmem:[%s0] sm:$0xf]
  %v14 = vld [vmem:[%s0 + $0x4] sm:$0xf]
  %v15 = vld [vmem:[%s0 + $0x8] sm:$0xf]
  %v16 = vld [vmem:[%s0 + $0xc] sm:$0xf]
  %v17 = vld [vmem:[%s0 + $0x10] sm:$0xf]
  %v18 = vld [vmem:[%s0 + $0x14] sm:$0xf]
  %v19 = vld [vmem:[%s0 + $0x18] sm:$0xf]
  %v20 = vld [vmem:[%s0 + $0x1c] sm:$0xf]
  %v21 = vld [vmem:[%s0 + $0x20] sm:$0xf]
  %v22 = vld [vmem:[%s0 + $0x24] sm:$0xf]
  %v23 = vld [vmem:[%s0 + $0x28] sm:$0xf]
  %v24 = vld [vmem:[%s0 + $0x2c] sm:$0xf]
  %v25 = vld [vmem:[%s0 + $0x30] sm:$0xf]
  %v26 = vld [vmem:[%s0 + $0x34] sm:$0xf]
  %v27 = vld [vmem:[%s0 + $0x38] sm:$0xf]
  %v28 = vld [vmem:[%s0 + $0x3c] sm:$0xf]
  %v29 = vunpack.c.l.bf16 %v13
  %v30 = vunpack.c.l.bf16 %v14
  %v31 = vunpack.c.l.bf16 %v15
  %v32 = vunpack.c.l.bf16 %v16
  %v33 = vunpack.c.l.bf16 %v17
  %v34 = vunpack.c.l.bf16 %v18
  %v35 = vunpack.c.l.bf16 %v19
  %v36 = vunpack.c.l.bf16 %v20
  %v37 = vunpack.c.l.bf16 %v21
  %v38 = vunpack.c.l.bf16 %v22
  %v39 = vunpack.c.l.bf16 %v23
  %v40 = vunpack.c.l.bf16 %v24
  %v41 = vunpack.c.l.bf16 %v25
  %v42 = vunpack.c.l.bf16 %v26
  %v43 = vunpack.c.l.bf16 %v27
  %v44 = vunpack.c.l.bf16 %v28
  %vm45 = vcmp.ge.f32.partialorder %v29, 0.0
  %vm46 = vcmp.ge.f32.partialorder %v30, 0.0
  %vm47 = vcmp.ge.f32.partialorder %v31, 0.0
  %vm48 = vcmp.ge.f32.partialorder %v32, 0.0
  %vm49 = vcmp.ge.f32.partialorder %v33, 0.0
  %vm50 = vcmp.ge.f32.partialorder %v34, 0.0
  %vm51 = vcmp.ge.f32.partialorder %v35, 0.0
  %vm52 = vcmp.ge.f32.partialorder %v36, 0.0
  %vm53 = vcmp.ge.f32.partialorder %v37, 0.0
  %vm54 = vcmp.ge.f32.partialorder %v38, 0.0
  %vm55 = vcmp.ge.f32.partialorder %v39, 0.0
  %vm56 = vcmp.ge.f32.partialorder %v40, 0.0
  %vm57 = vcmp.ge.f32.partialorder %v41, 0.0
  %vm58 = vcmp.ge.f32.partialorder %v42, 0.0
  %vm59 = vcmp.ge.f32.partialorder %v43, 0.0
  %vm60 = vcmp.ge.f32.partialorder %v44, 0.0
  %v61 = vmul.f32 %v29, 0.20019531
  %v62 = vmul.f32 %v30, 0.20019531
  %v63 = vmul.f32 %v31, 0.20019531
  %v64 = vmul.f32 %v32, 0.20019531
  %v65 = vmul.f32 %v33, 0.20019531
  %v66 = vmul.f32 %v34, 0.20019531
  %v67 = vmul.f32 %v35, 0.20019531
  %v68 = vmul.f32 %v36, 0.20019531
  %v69 = vmul.f32 %v37, 0.20019531
  %v70 = vmul.f32 %v38, 0.20019531
  %v71 = vmul.f32 %v39, 0.20019531
  %v72 = vmul.f32 %v40, 0.20019531
  %v73 = vmul.f32 %v41, 0.20019531
  %v74 = vmul.f32 %v42, 0.20019531
  %v75 = vmul.f32 %v43, 0.20019531
  %v76 = vmul.f32 %v44, 0.20019531
  %v77 = vpack.c.bf16 %v61, %v61
  %v78 = vpack.c.bf16 %v62, %v62
  %v79 = vpack.c.bf16 %v63, %v63
  %v80 = vpack.c.bf16 %v64, %v64
  %v81 = vpack.c.bf16 %v65, %v65
  %v82 = vpack.c.bf16 %v66, %v66
  %v83 = vpack.c.bf16 %v67, %v67
  %v84 = vpack.c.bf16 %v68, %v68
  %v85 = vpack.c.bf16 %v69, %v69
  %v86 = vpack.c.bf16 %v70, %v70
  %v87 = vpack.c.bf16 %v71, %v71
  %v88 = vpack.c.bf16 %v72, %v72
  %v89 = vpack.c.bf16 %v73, %v73
  %v90 = vpack.c.bf16 %v74, %v74
  %v91 = vpack.c.bf16 %v75, %v75
  %v92 = vpack.c.bf16 %v76, %v76
  %vm93 = vmpackc.low %vm45, %vm45
  %vm94 = vmpackc.low %vm46, %vm46
  %vm95 = vmpackc.low %vm47, %vm47
  %vm96 = vmpackc.low %vm48, %vm48
  %vm97 = vmpackc.low %vm49, %vm49
  %vm98 = vmpackc.low %vm50, %vm50
  %vm99 = vmpackc.low %vm51, %vm51
  %vm100 = vmpackc.low %vm52, %vm52
  %vm101 = vmpackc.low %vm53, %vm53
  %vm102 = vmpackc.low %vm54, %vm54
  %vm103 = vmpackc.low %vm55, %vm55
  %vm104 = vmpackc.low %vm56, %vm56
  %vm105 = vmpackc.low %vm57, %vm57
  %vm106 = vmpackc.low %vm58, %vm58
  %vm107 = vmpackc.low %vm59, %vm59
  %vm108 = vmpackc.low %vm60, %vm60
  %v109 = vsel %vm93, %v13, %v77
  %v110 = vsel %vm94, %v14, %v78
  %v111 = vsel %vm95, %v15, %v79
  %v112 = vsel %vm96, %v16, %v80
  %v113 = vsel %vm97, %v17, %v81
  %v114 = vsel %vm98, %v18, %v82
  %v115 = vsel %vm99, %v19, %v83
  %v116 = vsel %vm100, %v20, %v84
  %v117 = vsel %vm101, %v21, %v85
  %v118 = vsel %vm102, %v22, %v86
  %v119 = vsel %vm103, %v23, %v87
  %v120 = vsel %vm104, %v24, %v88
  %v121 = vsel %vm105, %v25, %v89
  %v122 = vsel %vm106, %v26, %v90
  %v123 = vsel %vm107, %v27, %v91
  %v124 = vsel %vm108, %v28, %v92
  %v125 = vld [vmem:[%s1] sm:$0xf]
  %v126 = vld [vmem:[%s1 + $0x4] sm:$0xf]
  %v129 = vunpack.c.l.b16 %v125
  %v130 = vunpack.c.l.b16 %v126
  %v131 = vpack.c.b16 %v130, %v129
  %v149 = vunpack.c.l.b16 %v109
  %v150 = vunpack.c.l.b16 %v110
  %v151 = vunpack.c.l.b16 %v111
  %v152 = vunpack.c.l.b16 %v112
  %v153 = vunpack.c.l.b16 %v113
  %v154 = vunpack.c.l.b16 %v114
  %v155 = vunpack.c.l.b16 %v115
  %v156 = vunpack.c.l.b16 %v116
  %v157 = vunpack.c.l.b16 %v117
  %v158 = vunpack.c.l.b16 %v118
  %v159 = vunpack.c.l.b16 %v119
  %v160 = vunpack.c.l.b16 %v120
  %v161 = vunpack.c.l.b16 %v121
  %v162 = vunpack.c.l.b16 %v122
  %v163 = vunpack.c.l.b16 %v123
  %v164 = vunpack.c.l.b16 %v124
  %v165 = vpack.c.b16 %v150, %v149
  %v166 = vpack.c.b16 %v152, %v151
  %v167 = vpack.c.b16 %v154, %v153
  %v168 = vpack.c.b16 %v156, %v155
  %v169 = vpack.c.b16 %v158, %v157
  %v170 = vpack.c.b16 %v160, %v159
  %v171 = vpack.c.b16 %v162, %v161
  %v172 = vpack.c.b16 %v164, %v163
  %181 = vmatpush.bf16.msra.mxu0 %v172
  %182 = vmatpush.bf16.msra.mxu0 %v171
  %183 = vmatpush.bf16.msra.mxu0 %v170
  %184 = vmatpush.bf16.msra.mxu0 %v169
  %185 = vmatpush.bf16.msra.mxu0 %v168
  %186 = vmatpush.bf16.msra.mxu0 %v167
  %187 = vmatpush.bf16.msra.mxu0 %v166
  %188 = vmatpush.bf16.msra.mxu0 %v165
  %189 = vmatmul.bf16.gmra.mxu0 %v131
  %v190 = vpop.f32.mrf.mxu0
  %v191 = vadd.f32 0.0, %v190
  %v192 = vpop.f32.mrf.mxu0
  %v193 = vadd.f32 0.0, %v192
  %194 = vdwg.mxu0
  %vm195 = vcmask 261120
  %v196 = vsel %vm195, %v191, 0.0
  %197 = vadd.xlane.f32.xlu0 %v196
  %v198 = vpop.xlane.xlu0 %197
  %v199 = vsel %vm195, %v193, 0.0
  %200 = vadd.xlane.f32.xlu0 %v199
  %v201 = vpop.xlane.xlu0 %200
  %v202 = vmul.f32 %v191, %v191
  %v203 = vmul.f32 %v193, %v193
  %v204 = vsel %vm195, %v202, 0.0
  %205 = vadd.xlane.f32.xlu0 %v204
  %v206 = vpop.xlane.xlu0 %205
  %v207 = vsel %vm195, %v203, 0.0
  %208 = vadd.xlane.f32.xlu0 %v207
  %v209 = vpop.xlane.xlu0 %208
  %vm210 = vcmask 7168
  %v211 = vsel %vm210, %v198, %v206
  %v212 = vsel %vm210, %v201, %v209
  %vm213 = vcmask 15360
  %214 = vst.msk [vmem:[%s3] sm:$0xff] %vm213, %v211
  %215 = vst.msk [vmem:[%s3 + $0x8] sm:$0xff] %vm213, %v212
  %v216 = vpack.c.bf16 %v191, %v191
  %v217 = vpack.c.bf16 %v193, %v193
  %vm218 = vcmask 257024
  %219 = vst.msk [vmem:[%s2] sm:$0xf] %vm218, %v216
  %220 = vst.msk [vmem:[%s2 + $0x4] sm:$0xf] %vm218, %v217
  // Predicated region
  $region10: #{part_unet2_forward.9} parent=0 // pred_check
    _
  $region11: #{part_unet2_forward.9} parent=0 // pred_check_branch
    %222 = sbr.rel (0) target = $region13
  $region12: #{part_unet2_forward.9} parent=0 // pred_region
    _
  $region13: #{part_unet2_forward.9} parent=0 // pred_fallthru
    _
  // Predicated region
  $region14: #{part_unet2_forward.9} parent=0 // pred_check
    _
  $region15: #{part_unet2_forward.9} parent=0 // pred_check_branch
    %224 = sbr.rel (0) target = $region17
  $region16: #{part_unet2_forward.9} parent=0 // pred_region
    _
  $region17: #{part_unet2_forward.9} parent=0 // pred_fallthru
    _
  // Predicated region
  $region18: #{part_unet2_forward.9} parent=0 // pred_check
    _
  $region19: #{part_unet2_forward.9} parent=0 // pred_check_branch
    %226 = sbr.rel (0) target = $region21
  $region20: #{part_unet2_forward.9} parent=0 // pred_region
    _
  $region21: #{part_unet2_forward.9} parent=0 // pred_fallthru
    _
  // Predicated region
  $region22: #{part_unet2_forward.9} parent=0 // pred_check
    _
  $region23: #{part_unet2_forward.9} parent=0 // pred_check_branch
    %228 = sbr.rel (0) target = $region25
  $region24: #{part_unet2_forward.9} parent=0 // pred_region
    _
  $region25: #{part_unet2_forward.9} parent=0 // pred_fallthru
    _

// kernel: part_unet2_forward.10
$region0: #{part_unet2_forward.10}
  #allocation0 [shape = 'u32[]', space=smem, size = 0x4, offset = 0x4, fixed_abs, tag = 'smem constant byte address 0x4 - core index']
  #allocation1 [shape = 'u32[72,128]{1,0:T(1,128)}', space=vmem, size = 0x9000, scoped, tag = 'internal scratch']
  %s0 = inlined_call_operand.vmem [shape: bf16[1,256,8], index: 0, kind: input, shape index: {}]
  %s1 = inlined_call_operand.vmem [shape: bf16[1,16,256], index: 1, kind: input, shape index: {}]
  %s2 = inlined_call_operand.vmem [shape: bf16[1,16,8], index: 2, kind: output, shape index: {0}]
  %s3 = inlined_call_operand.vmem [shape: f32[1,1,16,2], index: 3, kind: output, shape index: {1}]
  %4 = xla_tuple %s2, %s3
  %s5 = sld [smem:[#allocation0]]
  $region26: #{part_unet2_forward.10} parent=0
    _
  %s7 = ssub.s32 1, %s5
  %s8 = scalar_select 0, %s7, %s5
  // Predicated region
  $region2: #{part_unet2_forward.10} parent=0 // pred_check
    _
  $region3: #{part_unet2_forward.10} parent=0 // pred_check_branch
    %10 = sbr.rel (0) target = $region5
  $region4: #{part_unet2_forward.10} parent=0 // pred_region
    _
  $region5: #{part_unet2_forward.10} parent=0 // pred_fallthru
    _
  // Predicated region
  $region6: #{part_unet2_forward.10} parent=0 // pred_check
    _
  $region7: #{part_unet2_forward.10} parent=0 // pred_check_branch
    %12 = sbr.rel (0) target = $region9
  $region8: #{part_unet2_forward.10} parent=0 // pred_region
    _
  $region9: #{part_unet2_forward.10} parent=0 // pred_fallthru
    _
  %v13 = vld [vmem:[%s0] sm:$0xf]
  %v14 = vld [vmem:[%s0 + $0x4] sm:$0xf]
  %v15 = vld [vmem:[%s0 + $0x8] sm:$0xf]
  %v16 = vld [vmem:[%s0 + $0xc] sm:$0xf]
  %v17 = vld [vmem:[%s0 + $0x10] sm:$0xf]
  %v18 = vld [vmem:[%s0 + $0x14] sm:$0xf]
  %v19 = vld [vmem:[%s0 + $0x18] sm:$0xf]
  %v20 = vld [vmem:[%s0 + $0x1c] sm:$0xf]
  %v21 = vld [vmem:[%s0 + $0x20] sm:$0xf]
  %v22 = vld [vmem:[%s0 + $0x24] sm:$0xf]
  %v23 = vld [vmem:[%s0 + $0x28] sm:$0xf]
  %v24 = vld [vmem:[%s0 + $0x2c] sm:$0xf]
  %v25 = vld [vmem:[%s0 + $0x30] sm:$0xf]
  %v26 = vld [vmem:[%s0 + $0x34] sm:$0xf]
  %v27 = vld [vmem:[%s0 + $0x38] sm:$0xf]
  %v28 = vld [vmem:[%s0 + $0x3c] sm:$0xf]
  %v29 = vld [vmem:[%s0 + $0x40] sm:$0xf]
  %v30 = vld [vmem:[%s0 + $0x44] sm:$0xf]
  %v31 = vld [vmem:[%s0 + $0x48] sm:$0xf]
  %v32 = vld [vmem:[%s0 + $0x4c] sm:$0xf]
  %v33 = vld [vmem:[%s0 + $0x50] sm:$0xf]
  %v34 = vld [vmem:[%s0 + $0x54] sm:$0xf]
  %v35 = vld [vmem:[%s0 + $0x58] sm:$0xf]
  %v36 = vld [vmem:[%s0 + $0x5c] sm:$0xf]
  %v37 = vld [vmem:[%s0 + $0x60] sm:$0xf]
  %v38 = vld [vmem:[%s0 + $0x64] sm:$0xf]
  %v39 = vld [vmem:[%s0 + $0x68] sm:$0xf]
  %v40 = vld [vmem:[%s0 + $0x6c] sm:$0xf]
  %v41 = vld [vmem:[%s0 + $0x70] sm:$0xf]
  %v42 = vld [vmem:[%s0 + $0x74] sm:$0xf]
  %v43 = vld [vmem:[%s0 + $0x78] sm:$0xf]
  %v44 = vld [vmem:[%s0 + $0x7c] sm:$0xf]
  %v45 = vunpack.c.l.bf16 %v13
  %v46 = vunpack.c.l.bf16 %v14
  %v47 = vunpack.c.l.bf16 %v15
  %v48 = vunpack.c.l.bf16 %v16
  %v49 = vunpack.c.l.bf16 %v17
  %v50 = vunpack.c.l.bf16 %v18
  %v51 = vunpack.c.l.bf16 %v19
  %v52 = vunpack.c.l.bf16 %v20
  %v53 = vunpack.c.l.bf16 %v21
  %v54 = vunpack.c.l.bf16 %v22
  %v55 = vunpack.c.l.bf16 %v23
  %v56 = vunpack.c.l.bf16 %v24
  %v57 = vunpack.c.l.bf16 %v25
  %v58 = vunpack.c.l.bf16 %v26
  %v59 = vunpack.c.l.bf16 %v27
  %v60 = vunpack.c.l.bf16 %v28
  %v61 = vunpack.c.l.bf16 %v29
  %v62 = vunpack.c.l.bf16 %v30
  %v63 = vunpack.c.l.bf16 %v31
  %v64 = vunpack.c.l.bf16 %v32
  %v65 = vunpack.c.l.bf16 %v33
  %v66 = vunpack.c.l.bf16 %v34
  %v67 = vunpack.c.l.bf16 %v35
  %v68 = vunpack.c.l.bf16 %v36
  %v69 = vunpack.c.l.bf16 %v37
  %v70 = vunpack.c.l.bf16 %v38
  %v71 = vunpack.c.l.bf16 %v39
  %v72 = vunpack.c.l.bf16 %v40
  %v73 = vunpack.c.l.bf16 %v41
  %v74 = vunpack.c.l.bf16 %v42
  %v75 = vunpack.c.l.bf16 %v43
  %v76 = vunpack.c.l.bf16 %v44
  %vm77 = vcmp.ge.f32.partialorder %v45, 0.0
  %vm78 = vcmp.ge.f32.partialorder %v46, 0.0
  %vm79 = vcmp.ge.f32.partialorder %v47, 0.0
  %vm80 = vcmp.ge.f32.partialorder %v48, 0.0
  %vm81 = vcmp.ge.f32.partialorder %v49, 0.0
  %vm82 = vcmp.ge.f32.partialorder %v50, 0.0
  %vm83 = vcmp.ge.f32.partialorder %v51, 0.0
  %vm84 = vcmp.ge.f32.partialorder %v52, 0.0
  %vm85 = vcmp.ge.f32.partialorder %v53, 0.0
  %vm86 = vcmp.ge.f32.partialorder %v54, 0.0
  %vm87 = vcmp.ge.f32.partialorder %v55, 0.0
  %vm88 = vcmp.ge.f32.partialorder %v56, 0.0
  %vm89 = vcmp.ge.f32.partialorder %v57, 0.0
  %vm90 = vcmp.ge.f32.partialorder %v58, 0.0
  %vm91 = vcmp.ge.f32.partialorder %v59, 0.0
  %vm92 = vcmp.ge.f32.partialorder %v60, 0.0
  %vm93 = vcmp.ge.f32.partialorder %v61, 0.0
  %vm94 = vcmp.ge.f32.partialorder %v62, 0.0
  %vm95 = vcmp.ge.f32.partialorder %v63, 0.0
  %vm96 = vcmp.ge.f32.partialorder %v64, 0.0
  %vm97 = vcmp.ge.f32.partialorder %v65, 0.0
  %vm98 = vcmp.ge.f32.partialorder %v66, 0.0
  %vm99 = vcmp.ge.f32.partialorder %v67, 0.0
  %vm100 = vcmp.ge.f32.partialorder %v68, 0.0
  %vm101 = vcmp.ge.f32.partialorder %v69, 0.0
  %vm102 = vcmp.ge.f32.partialorder %v70, 0.0
  %vm103 = vcmp.ge.f32.partialorder %v71, 0.0
  %vm104 = vcmp.ge.f32.partialorder %v72, 0.0
  %vm105 = vcmp.ge.f32.partialorder %v73, 0.0
  %vm106 = vcmp.ge.f32.partialorder %v74, 0.0
  %vm107 = vcmp.ge.f32.partialorder %v75, 0.0
  %vm108 = vcmp.ge.f32.partialorder %v76, 0.0
  %v109 = vmul.f32 %v45, 0.20019531
  %v110 = vmul.f32 %v46, 0.20019531
  %v111 = vmul.f32 %v47, 0.20019531
  %v112 = vmul.f32 %v48, 0.20019531
  %v113 = vmul.f32 %v49, 0.20019531
  %v114 = vmul.f32 %v50, 0.20019531
  %v115 = vmul.f32 %v51, 0.20019531
  %v116 = vmul.f32 %v52, 0.20019531
  %v117 = vmul.f32 %v53, 0.20019531
  %v118 = vmul.f32 %v54, 0.20019531
  %v119 = vmul.f32 %v55, 0.20019531
  %v120 = vmul.f32 %v56, 0.20019531
  %v121 = vmul.f32 %v57, 0.20019531
  %v122 = vmul.f32 %v58, 0.20019531
  %v123 = vmul.f32 %v59, 0.20019531
  %v124 = vmul.f32 %v60, 0.20019531
  %v125 = vmul.f32 %v61, 0.20019531
  %v126 = vmul.f32 %v62, 0.20019531
  %v127 = vmul.f32 %v63, 0.20019531
  %v128 = vmul.f32 %v64, 0.20019531
  %v129 = vmul.f32 %v65, 0.20019531
  %v130 = vmul.f32 %v66, 0.20019531
  %v131 = vmul.f32 %v67, 0.20019531
  %v132 = vmul.f32 %v68, 0.20019531
  %v133 = vmul.f32 %v69, 0.20019531
  %v134 = vmul.f32 %v70, 0.20019531
  %v135 = vmul.f32 %v71, 0.20019531
  %v136 = vmul.f32 %v72, 0.20019531
  %v137 = vmul.f32 %v73, 0.20019531
  %v138 = vmul.f32 %v74, 0.20019531
  %v139 = vmul.f32 %v75, 0.20019531
  %v140 = vmul.f32 %v76, 0.20019531
  %v141 = vpack.c.bf16 %v109, %v109
  %v142 = vpack.c.bf16 %v110, %v110
  %v143 = vpack.c.bf16 %v111, %v111
  %v144 = vpack.c.bf16 %v112, %v112
  %v145 = vpack.c.bf16 %v113, %v113
  %v146 = vpack.c.bf16 %v114, %v114
  %v147 = vpack.c.bf16 %v115, %v115
  %v148 = vpack.c.bf16 %v116, %v116
  %v149 = vpack.c.bf16 %v117, %v117
  %v150 = vpack.c.bf16 %v118, %v118
  %v151 = vpack.c.bf16 %v119, %v119
  %v152 = vpack.c.bf16 %v120, %v120
  %v153 = vpack.c.bf16 %v121, %v121
  %v154 = vpack.c.bf16 %v122, %v122
  %v155 = vpack.c.bf16 %v123, %v123
  %v156 = vpack.c.bf16 %v124, %v124
  %v157 = vpack.c.bf16 %v125, %v125
  %v158 = vpack.c.bf16 %v126, %v126
  %v159 = vpack.c.bf16 %v127, %v127
  %v160 = vpack.c.bf16 %v128, %v128
  %v161 = vpack.c.bf16 %v129, %v129
  %v162 = vpack.c.bf16 %v130, %v130
  %v163 = vpack.c.bf16 %v131, %v131
  %v164 = vpack.c.bf16 %v132, %v132
  %v165 = vpack.c.bf16 %v133, %v133
  %v166 = vpack.c.bf16 %v134, %v134
  %v167 = vpack.c.bf16 %v135, %v135
  %v168 = vpack.c.bf16 %v136, %v136
  %v169 = vpack.c.bf16 %v137, %v137
  %v170 = vpack.c.bf16 %v138, %v138
  %v171 = vpack.c.bf16 %v139, %v139
  %v172 = vpack.c.bf16 %v140, %v140
  %vm173 = vmpackc.low %vm77, %vm77
  %vm174 = vmpackc.low %vm78, %vm78
  %vm175 = vmpackc.low %vm79, %vm79
  %vm176 = vmpackc.low %vm80, %vm80
  %vm177 = vmpackc.low %vm81, %vm81
  %vm178 = vmpackc.low %vm82, %vm82
  %vm179 = vmpackc.low %vm83, %vm83
  %vm180 = vmpackc.low %vm84, %vm84
  %vm181 = vmpackc.low %vm85, %vm85
  %vm182 = vmpackc.low %vm86, %vm86
  %vm183 = vmpackc.low %vm87, %vm87
  %vm184 = vmpackc.low %vm88, %vm88
  %vm185 = vmpackc.low %vm89, %vm89
  %vm186 = vmpackc.low %vm90, %vm90
  %vm187 = vmpackc.low %vm91, %vm91
  %vm188 = vmpackc.low %vm92, %vm92
  %vm189 = vmpackc.low %vm93, %vm93
  %vm190 = vmpackc.low %vm94, %vm94
  %vm191 = vmpackc.low %vm95, %vm95
  %vm192 = vmpackc.low %vm96, %vm96
  %vm193 = vmpackc.low %vm97, %vm97
  %vm194 = vmpackc.low %vm98, %vm98
  %vm195 = vmpackc.low %vm99, %vm99
  %vm196 = vmpackc.low %vm100, %vm100
  %vm197 = vmpackc.low %vm101, %vm101
  %vm198 = vmpackc.low %vm102, %vm102
  %vm199 = vmpackc.low %vm103, %vm103
  %vm200 = vmpackc.low %vm104, %vm104
  %vm201 = vmpackc.low %vm105, %vm105
  %vm202 = vmpackc.low %vm106, %vm106
  %vm203 = vmpackc.low %vm107, %vm107
  %vm204 = vmpackc.low %vm108, %vm108
  %v205 = vsel %vm173, %v13, %v141
  %v206 = vsel %vm174, %v14, %v142
  %v207 = vsel %vm175, %v15, %v143
  %v208 = vsel %vm176, %v16, %v144
  %v209 = vsel %vm177, %v17, %v145
  %v210 = vsel %vm178, %v18, %v146
  %v211 = vsel %vm179, %v19, %v147
  %v212 = vsel %vm180, %v20, %v148
  %v213 = vsel %vm181, %v21, %v149
  %v214 = vsel %vm182, %v22, %v150
  %v215 = vsel %vm183, %v23, %v151
  %v216 = vsel %vm184, %v24, %v152
  %v217 = vsel %vm185, %v25, %v153
  %v218 = vsel %vm186, %v26, %v154
  %v219 = vsel %vm187, %v27, %v155
  %v220 = vsel %vm188, %v28, %v156
  %v221 = vsel %vm189, %v29, %v157
  %v222 = vsel %vm190, %v30, %v158
  %v223 = vsel %vm191, %v31, %v159
  %v224 = vsel %vm192, %v32, %v160
  %v225 = vsel %vm193, %v33, %v161
  %v226 = vsel %vm194, %v34, %v162
  %v227 = vsel %vm195, %v35, %v163
  %v228 = vsel %vm196, %v36, %v164
  %v229 = vsel %vm197, %v37, %v165
  %v230 = vsel %vm198, %v38, %v166
  %v231 = vsel %vm199, %v39, %v167
  %v232 = vsel %vm200, %v40, %v168
  %v233 = vsel %vm201, %v41, %v169
  %v234 = vsel %vm202, %v42, %v170
  %v235 = vsel %vm203, %v43, %v171
  %v236 = vsel %vm204, %v44, %v172
  %v237 = vld [vmem:[%s1] sm:$0xff]
  %v238 = vld [vmem:[%s1 + $0x8] sm:$0xff]
  %v241 = vunpack.c.l.b16 %v237
  %v242 = vunpack.c.h.b16 %v237
  %v243 = vunpack.c.l.b16 %v238
  %v244 = vunpack.c.h.b16 %v238
  %v245 = vpack.c.b16 %v243, %v241
  %v246 = vpack.c.b16 %v244, %v242
  %v281 = vunpack.c.l.b16 %v205
  %v282 = vunpack.c.l.b16 %v206
  %v283 = vunpack.c.l.b16 %v207
  %v284 = vunpack.c.l.b16 %v208
  %v285 = vunpack.c.l.b16 %v209
  %v286 = vunpack.c.l.b16 %v210
  %v287 = vunpack.c.l.b16 %v211
  %v288 = vunpack.c.l.b16 %v212
  %v289 = vunpack.c.l.b16 %v213
  %v290 = vunpack.c.l.b16 %v214
  %v291 = vunpack.c.l.b16 %v215
  %v292 = vunpack.c.l.b16 %v216
  %v293 = vunpack.c.l.b16 %v217
  %v294 = vunpack.c.l.b16 %v218
  %v295 = vunpack.c.l.b16 %v219
  %v296 = vunpack.c.l.b16 %v220
  %v297 = vunpack.c.l.b16 %v221
  %v298 = vunpack.c.l.b16 %v222
  %v299 = vunpack.c.l.b16 %v223
  %v300 = vunpack.c.l.b16 %v224
  %v301 = vunpack.c.l.b16 %v225
  %v302 = vunpack.c.l.b16 %v226
  %v303 = vunpack.c.l.b16 %v227
  %v304 = vunpack.c.l.b16 %v228
  %v305 = vunpack.c.l.b16 %v229
  %v306 = vunpack.c.l.b16 %v230
  %v307 = vunpack.c.l.b16 %v231
  %v308 = vunpack.c.l.b16 %v232
  %v309 = vunpack.c.l.b16 %v233
  %v310 = vunpack.c.l.b16 %v234
  %v311 = vunpack.c.l.b16 %v235
  %v312 = vunpack.c.l.b16 %v236
  %v313 = vpack.c.b16 %v282, %v281
  %v314 = vpack.c.b16 %v284, %v283
  %v315 = vpack.c.b16 %v286, %v285
  %v316 = vpack.c.b16 %v288, %v287
  %v317 = vpack.c.b16 %v290, %v289
  %v318 = vpack.c.b16 %v292, %v291
  %v319 = vpack.c.b16 %v294, %v293
  %v320 = vpack.c.b16 %v296, %v295
  %v321 = vpack.c.b16 %v298, %v297
  %v322 = vpack.c.b16 %v300, %v299
  %v323 = vpack.c.b16 %v302, %v301
  %v324 = vpack.c.b16 %v304, %v303
  %v325 = vpack.c.b16 %v306, %v305
  %v326 = vpack.c.b16 %v308, %v307
  %v327 = vpack.c.b16 %v310, %v309
  %v328 = vpack.c.b16 %v312, %v311
  %345 = vmatpush.bf16.msra.mxu0 %v320
  %346 = vmatpush.bf16.msra.mxu0 %v319
  %347 = vmatpush.bf16.msra.mxu0 %v318
  %348 = vmatpush.bf16.msra.mxu0 %v317
  %349 = vmatpush.bf16.msra.mxu0 %v316
  %350 = vmatpush.bf16.msra.mxu0 %v315
  %351 = vmatpush.bf16.msra.mxu0 %v314
  %352 = vmatpush.bf16.msra.mxu0 %v313
  %353 = vmatmul.bf16.gmra.mxu0 %v245
  %v354 = vpop.f32.mrf.mxu0
  %v355 = vadd.f32 0.0, %v354
  %v356 = vpop.f32.mrf.mxu0
  %v357 = vadd.f32 0.0, %v356
  %358 = vdwg.mxu0
  %359 = vmatpush.bf16.msra.mxu0 %v328
  %360 = vmatpush.bf16.msra.mxu0 %v327
  %361 = vmatpush.bf16.msra.mxu0 %v326
  %362 = vmatpush.bf16.msra.mxu0 %v325
  %363 = vmatpush.bf16.msra.mxu0 %v324
  %364 = vmatpush.bf16.msra.mxu0 %v323
  %365 = vmatpush.bf16.msra.mxu0 %v322
  %366 = vmatpush.bf16.msra.mxu0 %v321
  %367 = vmatmul.bf16.gmra.mxu0 %v246
  %v368 = vpop.f32.mrf.mxu0
  %v369 = vadd.f32 %v355, %v368
  %v370 = vpop.f32.mrf.mxu0
  %v371 = vadd.f32 %v357, %v370
  %372 = vdwg.mxu0
  %vm373 = vcmask 64512
  %v374 = vsel %vm373, %v369, 0.0
  %375 = vadd.xlane.f32.xlu0 %v374
  %v376 = vpop.xlane.xlu0 %375
  %v377 = vsel %vm373, %v371, 0.0
  %378 = vadd.xlane.f32.xlu0 %v377
  %v379 = vpop.xlane.xlu0 %378
  %v380 = vmul.f32 %v369, %v369
  %v381 = vmul.f32 %v371, %v371
  %v382 = vsel %vm373, %v380, 0.0
  %383 = vadd.xlane.f32.xlu0 %v382
  %v384 = vpop.xlane.xlu0 %383
  %v385 = vsel %vm373, %v381, 0.0
  %386 = vadd.xlane.f32.xlu0 %v385
  %v387 = vpop.xlane.xlu0 %386
  %vm388 = vcmask 7168
  %v389 = vsel %vm388, %v376, %v384
  %v390 = vsel %vm388, %v379, %v387
  %vm391 = vcmask 15360
  %392 = vst.msk [vmem:[%s3] sm:$0xff] %vm391, %v389
  %393 = vst.msk [vmem:[%s3 + $0x8] sm:$0xff] %vm391, %v390
  %v394 = vpack.c.bf16 %v369, %v369
  %v395 = vpack.c.bf16 %v371, %v371
  %vm396 = vcmask 60416
  %397 = vst.msk [vmem:[%s2] sm:$0xf] %vm396, %v394
  %398 = vst.msk [vmem:[%s2 + $0x4] sm:$0xf] %vm396, %v395
  // Predicated region
  $region10: #{part_unet2_forward.10} parent=0 // pred_check
    _
  $region11: #{part_unet2_forward.10} parent=0 // pred_check_branch
    %400 = sbr.rel (0) target = $region13
  $region12: #{part_unet2_forward.10} parent=0 // pred_region
    _
  $region13: #{part_unet2_forward.10} parent=0 // pred_fallthru
    _
  // Predicated region
  $region14: #{part_unet2_forward.10} parent=0 // pred_check
    _
  $region15: #{part_unet2_forward.10} parent=0 // pred_check_branch
    %402 = sbr.rel (0) target = $region17
  $region16: #{part_unet2_forward.10} parent=0 // pred_region
    _
  $region17: #{part_unet2_forward.10} parent=0 // pred_fallthru
    _
  // Predicated region
  $region18: #{part_unet2_forward.10} parent=0 // pred_check
    _
  $region19: #{part_unet2_forward.10} parent=0 // pred_check_branch
    %404 = sbr.rel (0) target = $region21
  $region20: #{part_unet2_forward.10} parent=0 // pred_region
    _
  $region21: #{part_unet2_forward.10} parent=0 // pred_fallthru
    _
  // Predicated region
  $region22: #{part_unet2_forward.10} parent=0 // pred_check
    _
  $region23: #{part_unet2_forward.10} parent=0 // pred_check_branch
    %406 = sbr.rel (0) target = $region25
  $region24: #{part_unet2_forward.10} parent=0 // pred_region
    _
  $region25: #{part_unet2_forward.10} parent=0 // pred_fallthru
    _

// kernel: part_unet2_forward.11
$region0: #{part_unet2_forward.11}
  #allocation0 [shape = 'u32[]', space=smem, size = 0x4, offset = 0x4, fixed_abs, tag = 'smem constant byte address 0x4 - core index']
  #allocation1 [shape = 'u32[72,128]{1,0:T(1,128)}', space=vmem, size = 0x9000, scoped, tag = 'internal scratch']
  %s0 = inlined_call_operand.vmem [shape: bf16[1,256,2], index: 0, kind: input, shape index: {}]
  %s1 = inlined_call_operand.vmem [shape: bf16[1,16,256], index: 1, kind: input, shape index: {}]
  %s2 = inlined_call_operand.vmem [shape: bf16[1,16,2], index: 2, kind: output, shape index: {}]
  %s3 = sld [smem:[#allocation0]]
  $region18: #{part_unet2_forward.11} parent=0
    _
  %s5 = ssub.s32 1, %s3
  %s6 = scalar_select 0, %s5, %s3
  // Predicated region
  $region2: #{part_unet2_forward.11} parent=0 // pred_check
    _
  $region3: #{part_unet2_forward.11} parent=0 // pred_check_branch
    %8 = sbr.rel (0) target = $region5
  $region4: #{part_unet2_forward.11} parent=0 // pred_region
    _
  $region5: #{part_unet2_forward.11} parent=0 // pred_fallthru
    _
  // Predicated region
  $region6: #{part_unet2_forward.11} parent=0 // pred_check
    _
  $region7: #{part_unet2_forward.11} parent=0 // pred_check_branch
    %10 = sbr.rel (0) target = $region9
  $region8: #{part_unet2_forward.11} parent=0 // pred_region
    _
  $region9: #{part_unet2_forward.11} parent=0 // pred_fallthru
    _
  %v11 = vld [vmem:[%s0] sm:$0xf]
  %v12 = vld [vmem:[%s0 + $0x4] sm:$0xf]
  %v13 = vld [vmem:[%s0 + $0x8] sm:$0xf]
  %v14 = vld [vmem:[%s0 + $0xc] sm:$0xf]
  %v15 = vld [vmem:[%s0 + $0x10] sm:$0xf]
  %v16 = vld [vmem:[%s0 + $0x14] sm:$0xf]
  %v17 = vld [vmem:[%s0 + $0x18] sm:$0xf]
  %v18 = vld [vmem:[%s0 + $0x1c] sm:$0xf]
  %v19 = vld [vmem:[%s0 + $0x20] sm:$0xf]
  %v20 = vld [vmem:[%s0 + $0x24] sm:$0xf]
  %v21 = vld [vmem:[%s0 + $0x28] sm:$0xf]
  %v22 = vld [vmem:[%s0 + $0x2c] sm:$0xf]
  %v23 = vld [vmem:[%s0 + $0x30] sm:$0xf]
  %v24 = vld [vmem:[%s0 + $0x34] sm:$0xf]
  %v25 = vld [vmem:[%s0 + $0x38] sm:$0xf]
  %v26 = vld [vmem:[%s0 + $0x3c] sm:$0xf]
  %v27 = vld [vmem:[%s0 + $0x40] sm:$0xf]
  %v28 = vld [vmem:[%s0 + $0x44] sm:$0xf]
  %v29 = vld [vmem:[%s0 + $0x48] sm:$0xf]
  %v30 = vld [vmem:[%s0 + $0x4c] sm:$0xf]
  %v31 = vld [vmem:[%s0 + $0x50] sm:$0xf]
  %v32 = vld [vmem:[%s0 + $0x54] sm:$0xf]
  %v33 = vld [vmem:[%s0 + $0x58] sm:$0xf]
  %v34 = vld [vmem:[%s0 + $0x5c] sm:$0xf]
  %v35 = vld [vmem:[%s0 + $0x60] sm:$0xf]
  %v36 = vld [vmem:[%s0 + $0x64] sm:$0xf]
  %v37 = vld [vmem:[%s0 + $0x68] sm:$0xf]
  %v38 = vld [vmem:[%s0 + $0x6c] sm:$0xf]
  %v39 = vld [vmem:[%s0 + $0x70] sm:$0xf]
  %v40 = vld [vmem:[%s0 + $0x74] sm:$0xf]
  %v41 = vld [vmem:[%s0 + $0x78] sm:$0xf]
  %v42 = vld [vmem:[%s0 + $0x7c] sm:$0xf]
  %v43 = vunpack.c.l.bf16 %v11
  %v44 = vunpack.c.l.bf16 %v12
  %v45 = vunpack.c.l.bf16 %v13
  %v46 = vunpack.c.l.bf16 %v14
  %v47 = vunpack.c.l.bf16 %v15
  %v48 = vunpack.c.l.bf16 %v16
  %v49 = vunpack.c.l.bf16 %v17
  %v50 = vunpack.c.l.bf16 %v18
  %v51 = vunpack.c.l.bf16 %v19
  %v52 = vunpack.c.l.bf16 %v20
  %v53 = vunpack.c.l.bf16 %v21
  %v54 = vunpack.c.l.bf16 %v22
  %v55 = vunpack.c.l.bf16 %v23
  %v56 = vunpack.c.l.bf16 %v24
  %v57 = vunpack.c.l.bf16 %v25
  %v58 = vunpack.c.l.bf16 %v26
  %v59 = vunpack.c.l.bf16 %v27
  %v60 = vunpack.c.l.bf16 %v28
  %v61 = vunpack.c.l.bf16 %v29
  %v62 = vunpack.c.l.bf16 %v30
  %v63 = vunpack.c.l.bf16 %v31
  %v64 = vunpack.c.l.bf16 %v32
  %v65 = vunpack.c.l.bf16 %v33
  %v66 = vunpack.c.l.bf16 %v34
  %v67 = vunpack.c.l.bf16 %v35
  %v68 = vunpack.c.l.bf16 %v36
  %v69 = vunpack.c.l.bf16 %v37
  %v70 = vunpack.c.l.bf16 %v38
  %v71 = vunpack.c.l.bf16 %v39
  %v72 = vunpack.c.l.bf16 %v40
  %v73 = vunpack.c.l.bf16 %v41
  %v74 = vunpack.c.l.bf16 %v42
  %vm75 = vcmp.ge.f32.partialorder %v43, 0.0
  %vm76 = vcmp.ge.f32.partialorder %v44, 0.0
  %vm77 = vcmp.ge.f32.partialorder %v45, 0.0
  %vm78 = vcmp.ge.f32.partialorder %v46, 0.0
  %vm79 = vcmp.ge.f32.partialorder %v47, 0.0
  %vm80 = vcmp.ge.f32.partialorder %v48, 0.0
  %vm81 = vcmp.ge.f32.partialorder %v49, 0.0
  %vm82 = vcmp.ge.f32.partialorder %v50, 0.0
  %vm83 = vcmp.ge.f32.partialorder %v51, 0.0
  %vm84 = vcmp.ge.f32.partialorder %v52, 0.0
  %vm85 = vcmp.ge.f32.partialorder %v53, 0.0
  %vm86 = vcmp.ge.f32.partialorder %v54, 0.0
  %vm87 = vcmp.ge.f32.partialorder %v55, 0.0
  %vm88 = vcmp.ge.f32.partialorder %v56, 0.0
  %vm89 = vcmp.ge.f32.partialorder %v57, 0.0
  %vm90 = vcmp.ge.f32.partialorder %v58, 0.0
  %vm91 = vcmp.ge.f32.partialorder %v59, 0.0
  %vm92 = vcmp.ge.f32.partialorder %v60, 0.0
  %vm93 = vcmp.ge.f32.partialorder %v61, 0.0
  %vm94 = vcmp.ge.f32.partialorder %v62, 0.0
  %vm95 = vcmp.ge.f32.partialorder %v63, 0.0
  %vm96 = vcmp.ge.f32.partialorder %v64, 0.0
  %vm97 = vcmp.ge.f32.partialorder %v65, 0.0
  %vm98 = vcmp.ge.f32.partialorder %v66, 0.0
  %vm99 = vcmp.ge.f32.partialorder %v67, 0.0
  %vm100 = vcmp.ge.f32.partialorder %v68, 0.0
  %vm101 = vcmp.ge.f32.partialorder %v69, 0.0
  %vm102 = vcmp.ge.f32.partialorder %v70, 0.0
  %vm103 = vcmp.ge.f32.partialorder %v71, 0.0
  %vm104 = vcmp.ge.f32.partialorder %v72, 0.0
  %vm105 = vcmp.ge.f32.partialorder %v73, 0.0
  %vm106 = vcmp.ge.f32.partialorder %v74, 0.0
  %v107 = vmul.f32 %v43, 0.20019531
  %v108 = vmul.f32 %v44, 0.20019531
  %v109 = vmul.f32 %v45, 0.20019531
  %v110 = vmul.f32 %v46, 0.20019531
  %v111 = vmul.f32 %v47, 0.20019531
  %v112 = vmul.f32 %v48, 0.20019531
  %v113 = vmul.f32 %v49, 0.20019531
  %v114 = vmul.f32 %v50, 0.20019531
  %v115 = vmul.f32 %v51, 0.20019531
  %v116 = vmul.f32 %v52, 0.20019531
  %v117 = vmul.f32 %v53, 0.20019531
  %v118 = vmul.f32 %v54, 0.20019531
  %v119 = vmul.f32 %v55, 0.20019531
  %v120 = vmul.f32 %v56, 0.20019531
  %v121 = vmul.f32 %v57, 0.20019531
  %v122 = vmul.f32 %v58, 0.20019531
  %v123 = vmul.f32 %v59, 0.20019531
  %v124 = vmul.f32 %v60, 0.20019531
  %v125 = vmul.f32 %v61, 0.20019531
  %v126 = vmul.f32 %v62, 0.20019531
  %v127 = vmul.f32 %v63, 0.20019531
  %v128 = vmul.f32 %v64, 0.20019531
  %v129 = vmul.f32 %v65, 0.20019531
  %v130 = vmul.f32 %v66, 0.20019531
  %v131 = vmul.f32 %v67, 0.20019531
  %v132 = vmul.f32 %v68, 0.20019531
  %v133 = vmul.f32 %v69, 0.20019531
  %v134 = vmul.f32 %v70, 0.20019531
  %v135 = vmul.f32 %v71, 0.20019531
  %v136 = vmul.f32 %v72, 0.20019531
  %v137 = vmul.f32 %v73, 0.20019531
  %v138 = vmul.f32 %v74, 0.20019531
  %v139 = vpack.c.bf16 %v107, %v107
  %v140 = vpack.c.bf16 %v108, %v108
  %v141 = vpack.c.bf16 %v109, %v109
  %v142 = vpack.c.bf16 %v110, %v110
  %v143 = vpack.c.bf16 %v111, %v111
  %v144 = vpack.c.bf16 %v112, %v112
  %v145 = vpack.c.bf16 %v113, %v113
  %v146 = vpack.c.bf16 %v114, %v114
  %v147 = vpack.c.bf16 %v115, %v115
  %v148 = vpack.c.bf16 %v116, %v116
  %v149 = vpack.c.bf16 %v117, %v117
  %v150 = vpack.c.bf16 %v118, %v118
  %v151 = vpack.c.bf16 %v119, %v119
  %v152 = vpack.c.bf16 %v120, %v120
  %v153 = vpack.c.bf16 %v121, %v121
  %v154 = vpack.c.bf16 %v122, %v122
  %v155 = vpack.c.bf16 %v123, %v123
  %v156 = vpack.c.bf16 %v124, %v124
  %v157 = vpack.c.bf16 %v125, %v125
  %v158 = vpack.c.bf16 %v126, %v126
  %v159 = vpack.c.bf16 %v127, %v127
  %v160 = vpack.c.bf16 %v128, %v128
  %v161 = vpack.c.bf16 %v129, %v129
  %v162 = vpack.c.bf16 %v130, %v130
  %v163 = vpack.c.bf16 %v131, %v131
  %v164 = vpack.c.bf16 %v132, %v132
  %v165 = vpack.c.bf16 %v133, %v133
  %v166 = vpack.c.bf16 %v134, %v134
  %v167 = vpack.c.bf16 %v135, %v135
  %v168 = vpack.c.bf16 %v136, %v136
  %v169 = vpack.c.bf16 %v137, %v137
  %v170 = vpack.c.bf16 %v138, %v138
  %vm171 = vmpackc.low %vm75, %vm75
  %vm172 = vmpackc.low %vm76, %vm76
  %vm173 = vmpackc.low %vm77, %vm77
  %vm174 = vmpackc.low %vm78, %vm78
  %vm175 = vmpackc.low %vm79, %vm79
  %vm176 = vmpackc.low %vm80, %vm80
  %vm177 = vmpackc.low %vm81, %vm81
  %vm178 = vmpackc.low %vm82, %vm82
  %vm179 = vmpackc.low %vm83, %vm83
  %vm180 = vmpackc.low %vm84, %vm84
  %vm181 = vmpackc.low %vm85, %vm85
  %vm182 = vmpackc.low %vm86, %vm86
  %vm183 = vmpackc.low %vm87, %vm87
  %vm184 = vmpackc.low %vm88, %vm88
  %vm185 = vmpackc.low %vm89, %vm89
  %vm186 = vmpackc.low %vm90, %vm90
  %vm187 = vmpackc.low %vm91, %vm91
  %vm188 = vmpackc.low %vm92, %vm92
  %vm189 = vmpackc.low %vm93, %vm93
  %vm190 = vmpackc.low %vm94, %vm94
  %vm191 = vmpackc.low %vm95, %vm95
  %vm192 = vmpackc.low %vm96, %vm96
  %vm193 = vmpackc.low %vm97, %vm97
  %vm194 = vmpackc.low %vm98, %vm98
  %vm195 = vmpackc.low %vm99, %vm99
  %vm196 = vmpackc.low %vm100, %vm100
  %vm197 = vmpackc.low %vm101, %vm101
  %vm198 = vmpackc.low %vm102, %vm102
  %vm199 = vmpackc.low %vm103, %vm103
  %vm200 = vmpackc.low %vm104, %vm104
  %vm201 = vmpackc.low %vm105, %vm105
  %vm202 = vmpackc.low %vm106, %vm106
  %v203 = vsel %vm171, %v11, %v139
  %v204 = vsel %vm172, %v12, %v140
  %v205 = vsel %vm173, %v13, %v141
  %v206 = vsel %vm174, %v14, %v142
  %v207 = vsel %vm175, %v15, %v143
  %v208 = vsel %vm176, %v16, %v144
  %v209 = vsel %vm177, %v17, %v145
  %v210 = vsel %vm178, %v18, %v146
  %v211 = vsel %vm179, %v19, %v147
  %v212 = vsel %vm180, %v20, %v148
  %v213 = vsel %vm181, %v21, %v149
  %v214 = vsel %vm182, %v22, %v150
  %v215 = vsel %vm183, %v23, %v151
  %v216 = vsel %vm184, %v24, %v152
  %v217 = vsel %vm185, %v25, %v153
  %v218 = vsel %vm186, %v26, %v154
  %v219 = vsel %vm187, %v27, %v155
  %v220 = vsel %vm188, %v28, %v156
  %v221 = vsel %vm189, %v29, %v157
  %v222 = vsel %vm190, %v30, %v158
  %v223 = vsel %vm191, %v31, %v159
  %v224 = vsel %vm192, %v32, %v160
  %v225 = vsel %vm193, %v33, %v161
  %v226 = vsel %vm194, %v34, %v162
  %v227 = vsel %vm195, %v35, %v163
  %v228 = vsel %vm196, %v36, %v164
  %v229 = vsel %vm197, %v37, %v165
  %v230 = vsel %vm198, %v38, %v166
  %v231 = vsel %vm199, %v39, %v167
  %v232 = vsel %vm200, %v40, %v168
  %v233 = vsel %vm201, %v41, %v169
  %v234 = vsel %vm202, %v42, %v170
  %v235 = vld [vmem:[%s1] sm:$0xff]
  %v236 = vld [vmem:[%s1 + $0x8] sm:$0xff]
  %v239 = vunpack.c.l.b16 %v235
  %v240 = vunpack.c.h.b16 %v235
  %v241 = vunpack.c.l.b16 %v236
  %v242 = vunpack.c.h.b16 %v236
  %v243 = vpack.c.b16 %v241, %v239
  %v244 = vpack.c.b16 %v242, %v240
  %v279 = vunpack.c.l.b16 %v203
  %v280 = vunpack.c.l.b16 %v204
  %v281 = vunpack.c.l.b16 %v205
  %v282 = vunpack.c.l.b16 %v206
  %v283 = vunpack.c.l.b16 %v207
  %v284 = vunpack.c.l.b16 %v208
  %v285 = vunpack.c.l.b16 %v209
  %v286 = vunpack.c.l.b16 %v210
  %v287 = vunpack.c.l.b16 %v211
  %v288 = vunpack.c.l.b16 %v212
  %v289 = vunpack.c.l.b16 %v213
  %v290 = vunpack.c.l.b16 %v214
  %v291 = vunpack.c.l.b16 %v215
  %v292 = vunpack.c.l.b16 %v216
  %v293 = vunpack.c.l.b16 %v217
  %v294 = vunpack.c.l.b16 %v218
  %v295 = vunpack.c.l.b16 %v219
  %v296 = vunpack.c.l.b16 %v220
  %v297 = vunpack.c.l.b16 %v221
  %v298 = vunpack.c.l.b16 %v222
  %v299 = vunpack.c.l.b16 %v223
  %v300 = vunpack.c.l.b16 %v224
  %v301 = vunpack.c.l.b16 %v225
  %v302 = vunpack.c.l.b16 %v226
  %v303 = vunpack.c.l.b16 %v227
  %v304 = vunpack.c.l.b16 %v228
  %v305 = vunpack.c.l.b16 %v229
  %v306 = vunpack.c.l.b16 %v230
  %v307 = vunpack.c.l.b16 %v231
  %v308 = vunpack.c.l.b16 %v232
  %v309 = vunpack.c.l.b16 %v233
  %v310 = vunpack.c.l.b16 %v234
  %v311 = vpack.c.b16 %v280, %v279
  %v312 = vpack.c.b16 %v282, %v281
  %v313 = vpack.c.b16 %v284, %v283
  %v314 = vpack.c.b16 %v286, %v285
  %v315 = vpack.c.b16 %v288, %v287
  %v316 = vpack.c.b16 %v290, %v289
  %v317 = vpack.c.b16 %v292, %v291
  %v318 = vpack.c.b16 %v294, %v293
  %v319 = vpack.c.b16 %v296, %v295
  %v320 = vpack.c.b16 %v298, %v297
  %v321 = vpack.c.b16 %v300, %v299
  %v322 = vpack.c.b16 %v302, %v301
  %v323 = vpack.c.b16 %v304, %v303
  %v324 = vpack.c.b16 %v306, %v305
  %v325 = vpack.c.b16 %v308, %v307
  %v326 = vpack.c.b16 %v310, %v309
  %343 = vmatpush.bf16.msra.mxu0 %v318
  %344 = vmatpush.bf16.msra.mxu0 %v317
  %345 = vmatpush.bf16.msra.mxu0 %v316
  %346 = vmatpush.bf16.msra.mxu0 %v315
  %347 = vmatpush.bf16.msra.mxu0 %v314
  %348 = vmatpush.bf16.msra.mxu0 %v313
  %349 = vmatpush.bf16.msra.mxu0 %v312
  %350 = vmatpush.bf16.msra.mxu0 %v311
  %351 = vmatmul.bf16.gmra.mxu0 %v243
  %v352 = vpop.f32.mrf.mxu0
  %v353 = vadd.f32 0.0, %v352
  %v354 = vpop.f32.mrf.mxu0
  %v355 = vadd.f32 0.0, %v354
  %356 = vdwg.mxu0
  %357 = vmatpush.bf16.msra.mxu0 %v326
  %358 = vmatpush.bf16.msra.mxu0 %v325
  %359 = vmatpush.bf16.msra.mxu0 %v324
  %360 = vmatpush.bf16.msra.mxu0 %v323
  %361 = vmatpush.bf16.msra.mxu0 %v322
  %362 = vmatpush.bf16.msra.mxu0 %v321
  %363 = vmatpush.bf16.msra.mxu0 %v320
  %364 = vmatpush.bf16.msra.mxu0 %v319
  %365 = vmatmul.bf16.gmra.mxu0 %v244
  %v366 = vpop.f32.mrf.mxu0
  %v367 = vadd.f32 %v353, %v366
  %v368 = vpop.f32.mrf.mxu0
  %v369 = vadd.f32 %v355, %v368
  %370 = vdwg.mxu0
  %v371 = vpack.c.bf16 %v367, %v367
  %v372 = vpack.c.bf16 %v369, %v369
  %vm373 = vcmask 11264
  %374 = vst.msk [vmem:[%s2] sm:$0xf] %vm373, %v371
  %375 = vst.msk [vmem:[%s2 + $0x4] sm:$0xf] %vm373, %v372
  // Predicated region
  $region10: #{part_unet2_forward.11} parent=0 // pred_check
    _
  $region11: #{part_unet2_forward.11} parent=0 // pred_check_branch
    %377 = sbr.rel (0) target = $region13
  $region12: #{part_unet2_forward.11} parent=0 // pred_region
    _
  $region13: #{part_unet2_forward.11} parent=0 // pred_fallthru
    _
  // Predicated region
  $region14: #{part_unet2_forward.11} parent=0 // pred_check
    _
  $region15: #{part_unet2_forward.11} parent=0 // pred_check_branch
    %379 = sbr.rel (0) target = $region17
  $region16: #{part_unet2_forward.11} parent=0 // pred_region
    _
  $region17: #{part_unet2_forward.11} parent=0 // pred_fallthru
    _

// kernel: part_unet2_forward.12
$region0: #{part_unet2_forward.12}
  #allocation0 [shape = 'u32[]', space=smem, size = 0x4, offset = 0x4, fixed_abs, tag = 'smem constant byte address 0x4 - core index']
  #allocation1 [shape = 'u32[72,128]{1,0:T(1,128)}', space=vmem, size = 0x9000, scoped, tag = 'internal scratch']
  %s0 = inlined_call_operand.vmem [shape: bf16[4,64,2], index: 0, kind: input, shape index: {}]
  %s1 = inlined_call_operand.vmem [shape: bf16[4,16,64], index: 1, kind: input, shape index: {}]
  %s2 = inlined_call_operand.vmem [shape: bf16[4,16,2], index: 2, kind: output, shape index: {0}]
  %s3 = inlined_call_operand.vmem [shape: f32[4,1,16,2], index: 3, kind: output, shape index: {1}]
  %4 = xla_tuple %s2, %s3
  %s5 = sld [smem:[#allocation0]]
  $region49: #{part_unet2_forward.12} parent=0
    _
  %s7 = ssub.s32 1, %s5
  %s8 = scalar_select 0, %s7, %s5
  loop: start=0, step=1, limit=6
  $region2: #{part_unet2_forward.12} parent=0 // loop_pre_header
    _
  $region3: #{part_unet2_forward.12} parent=0 // loop_header
    %s10 = sphi 0, %s14
    %p11 = scmp.ge.s32.totalorder %s10, 6
    %s17 = sphi 0, %s29
    %s18 = sphi 0, %s25
    %s19 = sphi 0, %s17
    %s20 = sphi 0, %s18
    %s21 = sphi 0, %s19
    %s22 = sphi 0, %s20
    %s34 = sphi 0, %s36
    %s37 = sphi 0, %s34
    %s38 = sphi 0, %s37
    %s54 = sphi 0, %s38
    %s60 = sphi 0, %s62
    %s63 = sphi 0, %s60
    %s64 = sphi 0, %s63
    %s80 = sphi 0, %s64
    %s88 = sphi 0, %s90
    %s91 = sphi 0, %s88
    %s92 = sphi 0, %s91
    %s108 = sphi 0, %s92
    %s116 = sphi 0, %s118
    %s119 = sphi 0, %s116
    %s120 = sphi 0, %s119
    %s136 = sphi 0, %s120
  $region4: #{part_unet2_forward.12} parent=0 // loop_header_branch
    %13 = sbr.rel (%p11) target = $region8
  $region5: #{part_unet2_forward.12} parent=0 // loop_body
    %s15 = ssub.s32 %s10, 1
    %s16 = ssub.s32 %s10, 2
    %s23 = sadd.s32 1, %s18
    %p24 = scmp.ge.s32.totalorder %s23, 1
    %s25 = scalar_select %p24, 0, %s23
    %s26 = sadd.s32 1, %s17
    %s27 = scalar_select %p24, %s26, %s17
    %p28 = scmp.ge.s32.totalorder %s27, 4
    %s29 = scalar_select %p28, 0, %s27
    %s30 = ssub.s32 %s17, %s29
    %s31 = ssub.s32 %s18, %s25
    %s32 = sor.u32 %s30, %s31
    %p33 = scmp.eq.s32.totalorder %s32, 0
    %s35 = sadd.s32 %s34, 1
    %s36 = scalar_select %p33, %s34, %s35
    %p39 = pneg %p33
    %p40 = scmp.eq.s32.totalorder %s10, 3
    %p41 = por %p39, %p40
    %p42 = scmp.ne.s32.totalorder %s34, %s37
    %p43 = scmp.eq.s32.totalorder %s10, 0
    %p44 = por %p42, %p43
    %p45 = scmp.ne.s32.totalorder %s34, %s37
    %p46 = scmp.eq.s32.totalorder %s15, 3
    %p47 = por %p45, %p46
    %p48 = scmp.ne.s32.totalorder %s37, %s38
    %p49 = scmp.eq.s32.totalorder %s15, 0
    %p50 = por %p48, %p49
    %p51 = scmp.ne.s32.totalorder %s37, %s38
    %p52 = scmp.eq.s32.totalorder %s16, 3
    %p53 = por %p51, %p52
    %p55 = scmp.ne.s32.totalorder %s38, %s54
    %p56 = scmp.eq.s32.totalorder %s16, 0
    %p57 = por %p55, %p56
    %s58 = ssub.s32 %s17, %s29
    %p59 = scmp.eq.s32.totalorder %s58, 0
    %s61 = sadd.s32 %s60, 1
    %s62 = scalar_select %p59, %s60, %s61
    %p65 = pneg %p59
    %p66 = scmp.eq.s32.totalorder %s10, 3
    %p67 = por %p65, %p66
    %p68 = scmp.ne.s32.totalorder %s60, %s63
    %p69 = scmp.eq.s32.totalorder %s10, 0
    %p70 = por %p68, %p69
    %p71 = scmp.ne.s32.totalorder %s60, %s63
    %p72 = scmp.eq.s32.totalorder %s15, 3
    %p73 = por %p71, %p72
    %p74 = scmp.ne.s32.totalorder %s63, %s64
    %p75 = scmp.eq.s32.totalorder %s15, 0
    %p76 = por %p74, %p75
    %p77 = scmp.ne.s32.totalorder %s63, %s64
    %p78 = scmp.eq.s32.totalorder %s16, 3
    %p79 = por %p77, %p78
    %p81 = scmp.ne.s32.totalorder %s64, %s80
    %p82 = scmp.eq.s32.totalorder %s16, 0
    %p83 = por %p81, %p82
    %s84 = ssub.s32 %s17, %s29
    %s85 = ssub.s32 %s18, %s25
    %s86 = sor.u32 %s84, %s85
    %p87 = scmp.eq.s32.totalorder %s86, 0
    %s89 = sadd.s32 %s88, 1
    %s90 = scalar_select %p87, %s88, %s89
    %p93 = pneg %p87
    %p94 = scmp.eq.s32.totalorder %s10, 3
    %p95 = por %p93, %p94
    %p96 = scmp.ne.s32.totalorder %s88, %s91
    %p97 = scmp.eq.s32.totalorder %s10, 0
    %p98 = por %p96, %p97
    %p99 = scmp.ne.s32.totalorder %s88, %s91
    %p100 = scmp.eq.s32.totalorder %s15, 3
    %p101 = por %p99, %p100
    %p102 = scmp.ne.s32.totalorder %s91, %s92
    %p103 = scmp.eq.s32.totalorder %s15, 0
    %p104 = por %p102, %p103
    %p105 = scmp.ne.s32.totalorder %s91, %s92
    %p106 = scmp.eq.s32.totalorder %s16, 3
    %p107 = por %p105, %p106
    %p109 = scmp.ne.s32.totalorder %s92, %s108
    %p110 = scmp.eq.s32.totalorder %s16, 0
    %p111 = por %p109, %p110
    %s112 = ssub.s32 %s17, %s29
    %s113 = ssub.s32 %s18, %s25
    %s114 = sor.u32 %s112, %s113
    %p115 = scmp.eq.s32.totalorder %s114, 0
    %s117 = sadd.s32 %s116, 1
    %s118 = scalar_select %p115, %s116, %s117
    %p121 = pneg %p115
    %p122 = scmp.eq.s32.totalorder %s10, 3
    %p123 = por %p121, %p122
    %p124 = scmp.ne.s32.totalorder %s116, %s119
    %p125 = scmp.eq.s32.totalorder %s10, 0
    %p126 = por %p124, %p125
    %p127 = scmp.ne.s32.totalorder %s116, %s119
    %p128 = scmp.eq.s32.totalorder %s15, 3
    %p129 = por %p127, %p128
    %p130 = scmp.ne.s32.totalorder %s119, %s120
    %p131 = scmp.eq.s32.totalorder %s15, 0
    %p132 = por %p130, %p131
    %p133 = scmp.ne.s32.totalorder %s119, %s120
    %p134 = scmp.eq.s32.totalorder %s16, 3
    %p135 = por %p133, %p134
    %p137 = scmp.ne.s32.totalorder %s120, %s136
    %p138 = scmp.eq.s32.totalorder %s16, 0
    %p139 = por %p137, %p138
    %p140 = scmp.le.s32.totalorder 1, %s10
    %p141 = scmp.lt.s32.totalorder %s10, 5
    %p142 = pnand %p140, %p141
    %p143 = pneg %p142
    // Predicated region
    $region9: #{part_unet2_forward.12} parent=5 // pred_check
      _
    $region10: #{part_unet2_forward.12} parent=5 // pred_check_branch
      %145 = sbr.rel (%p142) target = $region12
    $region11: #{part_unet2_forward.12} parent=5 // pred_region
      %s146 = ssub.s32 %s10, 1
    $region12: #{part_unet2_forward.12} parent=5 // pred_fallthru
      _
    %p147 = scmp.lt.s32.totalorder %s10, 4
    // Predicated region
    $region13: #{part_unet2_forward.12} parent=5 // pred_check
      %p148 = pneg %p147
    $region14: #{part_unet2_forward.12} parent=5 // pred_check_branch
      %150 = sbr.rel (%p148) target = $region16
    $region15: #{part_unet2_forward.12} parent=5 // pred_region
      // Predicated region
      $region17: #{part_unet2_forward.12} parent=15 // pred_check
        %p151 = pneg %p44
      $region18: #{part_unet2_forward.12} parent=15 // pred_check_branch
        %153 = sbr.rel (%p151) target = $region20
      $region19: #{part_unet2_forward.12} parent=15 // pred_region
        %p154 = scmp.lt.s32.totalorder %s17, 3
        %s155 = scalar_select %p154, %s17, 3
        %p156 = scmp.lt.s32.totalorder %s18, 0
        %s157 = scalar_select %p156, %s18, 0
        %s158 = smul.addr %s155, 8
        %s159 = sadd.s32 %s157, %s158
        %s160 = smul.addr %s159, 4
        %s161 = scalar_lea.vmem %s0, %s160
      $region20: #{part_unet2_forward.12} parent=15 // pred_fallthru
        _
      // Predicated region
      $region21: #{part_unet2_forward.12} parent=15 // pred_check
        %p162 = pneg %p70
      $region22: #{part_unet2_forward.12} parent=15 // pred_check_branch
        %164 = sbr.rel (%p162) target = $region24
      $region23: #{part_unet2_forward.12} parent=15 // pred_region
        %p165 = scmp.lt.s32.totalorder %s17, 3
        %s166 = scalar_select %p165, %s17, 3
        %s167 = smul.addr %s166, 2
        %s168 = smul.addr %s167, 4
        %s169 = scalar_lea.vmem %s1, %s168
      $region24: #{part_unet2_forward.12} parent=15 // pred_fallthru
        _
    $region16: #{part_unet2_forward.12} parent=5 // pred_fallthru
      _
    %p170 = scmp.le.s32.totalorder 1, %s10
    %p171 = scmp.lt.s32.totalorder %s10, 5
    %p172 = pnand %p170, %p171
    %p173 = pneg %p172
    // Predicated region
    $region25: #{part_unet2_forward.12} parent=5 // pred_check
      _
    $region26: #{part_unet2_forward.12} parent=5 // pred_check_branch
      %175 = sbr.rel (%p172) target = $region28
    $region27: #{part_unet2_forward.12} parent=5 // pred_region
      %s176 = ssub.s32 %s10, 1
      %p177 = scmp.lt.s32.totalorder %s19, 3
      %s178 = scalar_select %p177, %s19, 3
      %p179 = scmp.lt.s32.totalorder %s20, 0
      %s180 = scalar_select %p179, %s20, 0
      %s181 = smul.addr %s178, 8
      %s182 = sadd.s32 %s180, %s181
      %s183 = smul.addr %s182, 4
      %s184 = scalar_lea.vmem %s0, %s183
      %p185 = pneg %p50
      %p186 = pneg %p47
      %p187 = scmp.lt.s32.totalorder %s19, 3
      %s188 = scalar_select %p187, %s19, 3
      %s189 = smul.addr %s188, 2
      %s190 = smul.addr %s189, 4
      %s191 = scalar_lea.vmem %s1, %s190
      %p192 = pneg %p76
      %p193 = pneg %p73
      %p194 = pneg %p104
      %p195 = pneg %p101
      %p196 = scmp.lt.s32.totalorder %s19, 3
      %s197 = scalar_select %p196, %s19, 3
      %p198 = scmp.lt.s32.totalorder %s20, 0
      %s199 = scalar_select %p198, %s20, 0
      %s200 = smul.addr %s197, 2
      %s201 = sadd.s32 %s199, %s200
      %s202 = smul.addr %s201, 4
      %s203 = scalar_lea.vmem %s2, %s202
      %p204 = pneg %p132
      %p205 = pneg %p129
      %p206 = scmp.lt.s32.totalorder %s19, 3
      %s207 = scalar_select %p206, %s19, 3
      %p208 = scmp.lt.s32.totalorder %s20, 0
      %s209 = scalar_select %p208, %s20, 0
      %s210 = smul.addr %s209, 2
      %s211 = smul.addr %s207, 2
      %s212 = sadd.s32 %s210, %s211
      %s213 = smul.addr %s212, 8
      %s214 = scalar_lea.vmem %s3, %s213
      %p215 = scmp.lt.s32.totalorder %s19, 3
      %s216 = scalar_select %p215, %s19, 3
      %p217 = scmp.lt.s32.totalorder %s20, 0
      %s218 = scalar_select %p217, %s20, 0
      %s219 = smul.addr %s216, 8
      %s220 = sadd.s32 %s218, %s219
      %s221 = smul.addr %s220, 4
      %s222 = scalar_lea.vmem %s0, %s221
      %p223 = scmp.lt.s32.totalorder %s19, 3
      %s224 = scalar_select %p223, %s19, 3
      %s225 = smul.addr %s224, 2
      %s226 = smul.addr %s225, 4
      %s227 = scalar_lea.vmem %s1, %s226
      %p228 = scmp.lt.s32.totalorder %s19, 3
      %s229 = scalar_select %p228, %s19, 3
      %p230 = scmp.lt.s32.totalorder %s20, 0
      %s231 = scalar_select %p230, %s20, 0
      %s232 = smul.addr %s229, 2
      %s233 = sadd.s32 %s231, %s232
      %s234 = smul.addr %s233, 4
      %s235 = scalar_lea.vmem %s2, %s234
      %p236 = scmp.lt.s32.totalorder %s19, 3
      %s237 = scalar_select %p236, %s19, 3
      %p238 = scmp.lt.s32.totalorder %s20, 0
      %s239 = scalar_select %p238, %s20, 0
      %s240 = smul.addr %s239, 2
      %s241 = smul.addr %s237, 2
      %s242 = sadd.s32 %s240, %s241
      %s243 = smul.addr %s242, 8
      %s244 = scalar_lea.vmem %s3, %s243
      %v246 = vld [vmem:[%s222] sm:$0xf]
      %v247 = vld [vmem:[%s222 + $0x4] sm:$0xf]
      %v248 = vld [vmem:[%s222 + $0x8] sm:$0xf]
      %v249 = vld [vmem:[%s222 + $0xc] sm:$0xf]
      %v250 = vld [vmem:[%s222 + $0x10] sm:$0xf]
      %v251 = vld [vmem:[%s222 + $0x14] sm:$0xf]
      %v252 = vld [vmem:[%s222 + $0x18] sm:$0xf]
      %v253 = vld [vmem:[%s222 + $0x1c] sm:$0xf]
      %v254 = vunpack.c.l.bf16 %v246
      %v255 = vunpack.c.l.bf16 %v247
      %v256 = vunpack.c.l.bf16 %v248
      %v257 = vunpack.c.l.bf16 %v249
      %v258 = vunpack.c.l.bf16 %v250
      %v259 = vunpack.c.l.bf16 %v251
      %v260 = vunpack.c.l.bf16 %v252
      %v261 = vunpack.c.l.bf16 %v253
      %v262 = vmax.f32 %v254, 0.0
      %v263 = vmax.f32 %v255, 0.0
      %v264 = vmax.f32 %v256, 0.0
      %v265 = vmax.f32 %v257, 0.0
      %v266 = vmax.f32 %v258, 0.0
      %v267 = vmax.f32 %v259, 0.0
      %v268 = vmax.f32 %v260, 0.0
      %v269 = vmax.f32 %v261, 0.0
      %v270 = vpack.c.bf16 %v263, %v262
      %v271 = vpack.c.bf16 %v265, %v264
      %v272 = vpack.c.bf16 %v267, %v266
      %v273 = vpack.c.bf16 %v269, %v268
      %v274 = vld [vmem:[%s227] sm:$0xf]
      %v275 = vld [vmem:[%s227 + $0x4] sm:$0xf]
      %v278 = vunpack.c.l.b16 %v274
      %v279 = vunpack.c.l.b16 %v275
      %v280 = vpack.c.b16 %v279, %v278
      %vm281 = vcmask 523264
      %v283 = vsel %vm281, %v280, 0
      %285 = vmatpush.bf16.msra.mxu0 0
      %286 = vmatpush.bf16.msra.mxu0 0
      %287 = vmatpush.bf16.msra.mxu0 0
      %288 = vmatpush.bf16.msra.mxu0 0
      %289 = vmatpush.bf16.msra.mxu0 %v273
      %290 = vmatpush.bf16.msra.mxu0 %v272
      %291 = vmatpush.bf16.msra.mxu0 %v271
      %292 = vmatpush.bf16.msra.mxu0 %v270
      %293 = vmatmul.bf16.gmra.mxu0 %v283
      %v294 = vpop.f32.mrf.mxu0
      %v295 = vadd.f32 0.0, %v294
      %v296 = vpop.f32.mrf.mxu0
      %v297 = vadd.f32 0.0, %v296
      %298 = vdwg.mxu0
      %vm299 = vcmask 15360
      %v300 = vsel %vm299, %v295, 0.0
      %301 = vadd.xlane.f32.xlu0 %v300
      %v302 = vpop.xlane.xlu0 %301
      %v303 = vsel %vm299, %v297, 0.0
      %304 = vadd.xlane.f32.xlu0 %v303
      %v305 = vpop.xlane.xlu0 %304
      %v306 = vmul.f32 %v295, %v295
      %v307 = vmul.f32 %v297, %v297
      %v308 = vsel %vm299, %v306, 0.0
      %309 = vadd.xlane.f32.xlu0 %v308
      %v310 = vpop.xlane.xlu0 %309
      %v311 = vsel %vm299, %v307, 0.0
      %312 = vadd.xlane.f32.xlu0 %v311
      %v313 = vpop.xlane.xlu0 %312
      %vm314 = vcmask 7168
      %v315 = vsel %vm314, %v302, %v310
      %v316 = vsel %vm314, %v305, %v313
      %317 = vst.msk [vmem:[%s244] sm:$0xff] %vm299, %v315
      %318 = vst.msk [vmem:[%s244 + $0x8] sm:$0xff] %vm299, %v316
      %v319 = vpack.c.bf16 %v295, %v295
      %v320 = vpack.c.bf16 %v297, %v297
      %vm321 = vcmask 11264
      %322 = vst.msk [vmem:[%s235] sm:$0xf] %vm321, %v319
      %323 = vst.msk [vmem:[%s235 + $0x4] sm:$0xf] %vm321, %v320
      %p324 = scmp.lt.s32.totalorder %s19, 3
      %s325 = scalar_select %p324, %s19, 3
      %p326 = scmp.lt.s32.totalorder %s20, 0
      %s327 = scalar_select %p326, %s20, 0
      %s328 = smul.addr %s325, 2
      %s329 = sadd.s32 %s327, %s328
      %s330 = smul.addr %s329, 4
      %s331 = scalar_lea.vmem %s2, %s330
      %p332 = scmp.lt.s32.totalorder %s19, 3
      %s333 = scalar_select %p332, %s19, 3
      %p334 = scmp.lt.s32.totalorder %s20, 0
      %s335 = scalar_select %p334, %s20, 0
      %s336 = smul.addr %s335, 2
      %s337 = smul.addr %s333, 2
      %s338 = sadd.s32 %s336, %s337
      %s339 = smul.addr %s338, 8
      %s340 = scalar_lea.vmem %s3, %s339
      // Predicated region
      $region29: #{part_unet2_forward.12} parent=27 // pred_check
        %p341 = pneg %p101
      $region30: #{part_unet2_forward.12} parent=27 // pred_check_branch
        %343 = sbr.rel (%p341) target = $region32
      $region31: #{part_unet2_forward.12} parent=27 // pred_region
        _
      $region32: #{part_unet2_forward.12} parent=27 // pred_fallthru
        _
      // Predicated region
      $region33: #{part_unet2_forward.12} parent=27 // pred_check
        %p344 = pneg %p129
      $region34: #{part_unet2_forward.12} parent=27 // pred_check_branch
        %346 = sbr.rel (%p344) target = $region36
      $region35: #{part_unet2_forward.12} parent=27 // pred_region
        _
      $region36: #{part_unet2_forward.12} parent=27 // pred_fallthru
        _
    $region28: #{part_unet2_forward.12} parent=5 // pred_fallthru
      _
    %p347 = scmp.le.s32.totalorder 2, %s10
    // Predicated region
    $region37: #{part_unet2_forward.12} parent=5 // pred_check
      %p348 = pneg %p347
    $region38: #{part_unet2_forward.12} parent=5 // pred_check_branch
      %350 = sbr.rel (%p348) target = $region40
    $region39: #{part_unet2_forward.12} parent=5 // pred_region
      %s351 = ssub.s32 %s10, 2
      // Predicated region
      $region41: #{part_unet2_forward.12} parent=39 // pred_check
        %p352 = pneg %p107
      $region42: #{part_unet2_forward.12} parent=39 // pred_check_branch
        %354 = sbr.rel (%p352) target = $region44
      $region43: #{part_unet2_forward.12} parent=39 // pred_region
        %p355 = scmp.lt.s32.totalorder %s21, 3
        %s356 = scalar_select %p355, %s21, 3
        %p357 = scmp.lt.s32.totalorder %s22, 0
        %s358 = scalar_select %p357, %s22, 0
        %s359 = smul.addr %s356, 2
        %s360 = sadd.s32 %s358, %s359
        %s361 = smul.addr %s360, 4
        %s362 = scalar_lea.vmem %s2, %s361
      $region44: #{part_unet2_forward.12} parent=39 // pred_fallthru
        _
      // Predicated region
      $region45: #{part_unet2_forward.12} parent=39 // pred_check
        %p363 = pneg %p135
      $region46: #{part_unet2_forward.12} parent=39 // pred_check_branch
        %365 = sbr.rel (%p363) target = $region48
      $region47: #{part_unet2_forward.12} parent=39 // pred_region
        %p366 = scmp.lt.s32.totalorder %s21, 3
        %s367 = scalar_select %p366, %s21, 3
        %p368 = scmp.lt.s32.totalorder %s22, 0
        %s369 = scalar_select %p368, %s22, 0
        %s370 = smul.addr %s369, 2
        %s371 = smul.addr %s367, 2
        %s372 = sadd.s32 %s370, %s371
        %s373 = smul.addr %s372, 8
        %s374 = scalar_lea.vmem %s3, %s373
      $region48: #{part_unet2_forward.12} parent=39 // pred_fallthru
        _
    $region40: #{part_unet2_forward.12} parent=5 // pred_fallthru
      _
  $region6: #{part_unet2_forward.12} parent=0 // loop_footer
    %s14 = sadd.s32 1, %s10
  $region7: #{part_unet2_forward.12} parent=0 // loop_footer_branch
    %9 = sbr.rel target = $region3
  $region8: #{part_unet2_forward.12} parent=0 // loop_exit
    _

// kernel: part_unet2_forward.13
$region0: #{part_unet2_forward.13}
  #allocation0 [shape = 'u32[]', space=smem, size = 0x4, offset = 0x4, fixed_abs, tag = 'smem constant byte address 0x4 - core index']
  #allocation1 [shape = 'u32[72,128]{1,0:T(1,128)}', space=vmem, size = 0x9000, scoped, tag = 'internal scratch']
  %s0 = inlined_call_operand.vmem [shape: bf16[4,128,8], index: 0, kind: input, shape index: {}]
  %s1 = inlined_call_operand.vmem [shape: bf16[4,16,128], index: 1, kind: input, shape index: {}]
  %s2 = inlined_call_operand.vmem [shape: bf16[4,16,8], index: 2, kind: output, shape index: {0}]
  %s3 = inlined_call_operand.vmem [shape: f32[4,1,16,2], index: 3, kind: output, shape index: {1}]
  %4 = xla_tuple %s2, %s3
  %s5 = sld [smem:[#allocation0]]
  $region49: #{part_unet2_forward.13} parent=0
    _
  %s7 = ssub.s32 1, %s5
  %s8 = scalar_select 0, %s7, %s5
  loop: start=0, step=1, limit=6
  $region2: #{part_unet2_forward.13} parent=0 // loop_pre_header
    _
  $region3: #{part_unet2_forward.13} parent=0 // loop_header
    %s10 = sphi 0, %s14
    %p11 = scmp.ge.s32.totalorder %s10, 6
    %s17 = sphi 0, %s29
    %s18 = sphi 0, %s25
    %s19 = sphi 0, %s17
    %s20 = sphi 0, %s18
    %s21 = sphi 0, %s19
    %s22 = sphi 0, %s20
    %s34 = sphi 0, %s36
    %s37 = sphi 0, %s34
    %s38 = sphi 0, %s37
    %s54 = sphi 0, %s38
    %s60 = sphi 0, %s62
    %s63 = sphi 0, %s60
    %s64 = sphi 0, %s63
    %s80 = sphi 0, %s64
    %s88 = sphi 0, %s90
    %s91 = sphi 0, %s88
    %s92 = sphi 0, %s91
    %s108 = sphi 0, %s92
    %s116 = sphi 0, %s118
    %s119 = sphi 0, %s116
    %s120 = sphi 0, %s119
    %s136 = sphi 0, %s120
  $region4: #{part_unet2_forward.13} parent=0 // loop_header_branch
    %13 = sbr.rel (%p11) target = $region8
  $region5: #{part_unet2_forward.13} parent=0 // loop_body
    %s15 = ssub.s32 %s10, 1
    %s16 = ssub.s32 %s10, 2
    %s23 = sadd.s32 1, %s18
    %p24 = scmp.ge.s32.totalorder %s23, 1
    %s25 = scalar_select %p24, 0, %s23
    %s26 = sadd.s32 1, %s17
    %s27 = scalar_select %p24, %s26, %s17
    %p28 = scmp.ge.s32.totalorder %s27, 4
    %s29 = scalar_select %p28, 0, %s27
    %s30 = ssub.s32 %s17, %s29
    %s31 = ssub.s32 %s18, %s25
    %s32 = sor.u32 %s30, %s31
    %p33 = scmp.eq.s32.totalorder %s32, 0
    %s35 = sadd.s32 %s34, 1
    %s36 = scalar_select %p33, %s34, %s35
    %p39 = pneg %p33
    %p40 = scmp.eq.s32.totalorder %s10, 3
    %p41 = por %p39, %p40
    %p42 = scmp.ne.s32.totalorder %s34, %s37
    %p43 = scmp.eq.s32.totalorder %s10, 0
    %p44 = por %p42, %p43
    %p45 = scmp.ne.s32.totalorder %s34, %s37
    %p46 = scmp.eq.s32.totalorder %s15, 3
    %p47 = por %p45, %p46
    %p48 = scmp.ne.s32.totalorder %s37, %s38
    %p49 = scmp.eq.s32.totalorder %s15, 0
    %p50 = por %p48, %p49
    %p51 = scmp.ne.s32.totalorder %s37, %s38
    %p52 = scmp.eq.s32.totalorder %s16, 3
    %p53 = por %p51, %p52
    %p55 = scmp.ne.s32.totalorder %s38, %s54
    %p56 = scmp.eq.s32.totalorder %s16, 0
    %p57 = por %p55, %p56
    %s58 = ssub.s32 %s17, %s29
    %p59 = scmp.eq.s32.totalorder %s58, 0
    %s61 = sadd.s32 %s60, 1
    %s62 = scalar_select %p59, %s60, %s61
    %p65 = pneg %p59
    %p66 = scmp.eq.s32.totalorder %s10, 3
    %p67 = por %p65, %p66
    %p68 = scmp.ne.s32.totalorder %s60, %s63
    %p69 = scmp.eq.s32.totalorder %s10, 0
    %p70 = por %p68, %p69
    %p71 = scmp.ne.s32.totalorder %s60, %s63
    %p72 = scmp.eq.s32.totalorder %s15, 3
    %p73 = por %p71, %p72
    %p74 = scmp.ne.s32.totalorder %s63, %s64
    %p75 = scmp.eq.s32.totalorder %s15, 0
    %p76 = por %p74, %p75
    %p77 = scmp.ne.s32.totalorder %s63, %s64
    %p78 = scmp.eq.s32.totalorder %s16, 3
    %p79 = por %p77, %p78
    %p81 = scmp.ne.s32.totalorder %s64, %s80
    %p82 = scmp.eq.s32.totalorder %s16, 0
    %p83 = por %p81, %p82
    %s84 = ssub.s32 %s17, %s29
    %s85 = ssub.s32 %s18, %s25
    %s86 = sor.u32 %s84, %s85
    %p87 = scmp.eq.s32.totalorder %s86, 0
    %s89 = sadd.s32 %s88, 1
    %s90 = scalar_select %p87, %s88, %s89
    %p93 = pneg %p87
    %p94 = scmp.eq.s32.totalorder %s10, 3
    %p95 = por %p93, %p94
    %p96 = scmp.ne.s32.totalorder %s88, %s91
    %p97 = scmp.eq.s32.totalorder %s10, 0
    %p98 = por %p96, %p97
    %p99 = scmp.ne.s32.totalorder %s88, %s91
    %p100 = scmp.eq.s32.totalorder %s15, 3
    %p101 = por %p99, %p100
    %p102 = scmp.ne.s32.totalorder %s91, %s92
    %p103 = scmp.eq.s32.totalorder %s15, 0
    %p104 = por %p102, %p103
    %p105 = scmp.ne.s32.totalorder %s91, %s92
    %p106 = scmp.eq.s32.totalorder %s16, 3
    %p107 = por %p105, %p106
    %p109 = scmp.ne.s32.totalorder %s92, %s108
    %p110 = scmp.eq.s32.totalorder %s16, 0
    %p111 = por %p109, %p110
    %s112 = ssub.s32 %s17, %s29
    %s113 = ssub.s32 %s18, %s25
    %s114 = sor.u32 %s112, %s113
    %p115 = scmp.eq.s32.totalorder %s114, 0
    %s117 = sadd.s32 %s116, 1
    %s118 = scalar_select %p115, %s116, %s117
    %p121 = pneg %p115
    %p122 = scmp.eq.s32.totalorder %s10, 3
    %p123 = por %p121, %p122
    %p124 = scmp.ne.s32.totalorder %s116, %s119
    %p125 = scmp.eq.s32.totalorder %s10, 0
    %p126 = por %p124, %p125
    %p127 = scmp.ne.s32.totalorder %s116, %s119
    %p128 = scmp.eq.s32.totalorder %s15, 3
    %p129 = por %p127, %p128
    %p130 = scmp.ne.s32.totalorder %s119, %s120
    %p131 = scmp.eq.s32.totalorder %s15, 0
    %p132 = por %p130, %p131
    %p133 = scmp.ne.s32.totalorder %s119, %s120
    %p134 = scmp.eq.s32.totalorder %s16, 3
    %p135 = por %p133, %p134
    %p137 = scmp.ne.s32.totalorder %s120, %s136
    %p138 = scmp.eq.s32.totalorder %s16, 0
    %p139 = por %p137, %p138
    %p140 = scmp.le.s32.totalorder 1, %s10
    %p141 = scmp.lt.s32.totalorder %s10, 5
    %p142 = pnand %p140, %p141
    %p143 = pneg %p142
    // Predicated region
    $region9: #{part_unet2_forward.13} parent=5 // pred_check
      _
    $region10: #{part_unet2_forward.13} parent=5 // pred_check_branch
      %145 = sbr.rel (%p142) target = $region12
    $region11: #{part_unet2_forward.13} parent=5 // pred_region
      %s146 = ssub.s32 %s10, 1
    $region12: #{part_unet2_forward.13} parent=5 // pred_fallthru
      _
    %p147 = scmp.lt.s32.totalorder %s10, 4
    // Predicated region
    $region13: #{part_unet2_forward.13} parent=5 // pred_check
      %p148 = pneg %p147
    $region14: #{part_unet2_forward.13} parent=5 // pred_check_branch
      %150 = sbr.rel (%p148) target = $region16
    $region15: #{part_unet2_forward.13} parent=5 // pred_region
      // Predicated region
      $region17: #{part_unet2_forward.13} parent=15 // pred_check
        %p151 = pneg %p44
      $region18: #{part_unet2_forward.13} parent=15 // pred_check_branch
        %153 = sbr.rel (%p151) target = $region20
      $region19: #{part_unet2_forward.13} parent=15 // pred_region
        %p154 = scmp.lt.s32.totalorder %s17, 3
        %s155 = scalar_select %p154, %s17, 3
        %p156 = scmp.lt.s32.totalorder %s18, 0
        %s157 = scalar_select %p156, %s18, 0
        %s158 = smul.addr %s155, 16
        %s159 = sadd.s32 %s157, %s158
        %s160 = smul.addr %s159, 4
        %s161 = scalar_lea.vmem %s0, %s160
      $region20: #{part_unet2_forward.13} parent=15 // pred_fallthru
        _
      // Predicated region
      $region21: #{part_unet2_forward.13} parent=15 // pred_check
        %p162 = pneg %p70
      $region22: #{part_unet2_forward.13} parent=15 // pred_check_branch
        %164 = sbr.rel (%p162) target = $region24
      $region23: #{part_unet2_forward.13} parent=15 // pred_region
        %p165 = scmp.lt.s32.totalorder %s17, 3
        %s166 = scalar_select %p165, %s17, 3
        %s167 = smul.addr %s166, 2
        %s168 = smul.addr %s167, 4
        %s169 = scalar_lea.vmem %s1, %s168
      $region24: #{part_unet2_forward.13} parent=15 // pred_fallthru
        _
    $region16: #{part_unet2_forward.13} parent=5 // pred_fallthru
      _
    %p170 = scmp.le.s32.totalorder 1, %s10
    %p171 = scmp.lt.s32.totalorder %s10, 5
    %p172 = pnand %p170, %p171
    %p173 = pneg %p172
    // Predicated region
    $region25: #{part_unet2_forward.13} parent=5 // pred_check
      _
    $region26: #{part_unet2_forward.13} parent=5 // pred_check_branch
      %175 = sbr.rel (%p172) target = $region28
    $region27: #{part_unet2_forward.13} parent=5 // pred_region
      %s176 = ssub.s32 %s10, 1
      %p177 = scmp.lt.s32.totalorder %s19, 3
      %s178 = scalar_select %p177, %s19, 3
      %p179 = scmp.lt.s32.totalorder %s20, 0
      %s180 = scalar_select %p179, %s20, 0
      %s181 = smul.addr %s178, 16
      %s182 = sadd.s32 %s180, %s181
      %s183 = smul.addr %s182, 4
      %s184 = scalar_lea.vmem %s0, %s183
      %p185 = pneg %p50
      %p186 = pneg %p47
      %p187 = scmp.lt.s32.totalorder %s19, 3
      %s188 = scalar_select %p187, %s19, 3
      %s189 = smul.addr %s188, 2
      %s190 = smul.addr %s189, 4
      %s191 = scalar_lea.vmem %s1, %s190
      %p192 = pneg %p76
      %p193 = pneg %p73
      %p194 = pneg %p104
      %p195 = pneg %p101
      %p196 = scmp.lt.s32.totalorder %s19, 3
      %s197 = scalar_select %p196, %s19, 3
      %p198 = scmp.lt.s32.totalorder %s20, 0
      %s199 = scalar_select %p198, %s20, 0
      %s200 = smul.addr %s197, 2
      %s201 = sadd.s32 %s199, %s200
      %s202 = smul.addr %s201, 4
      %s203 = scalar_lea.vmem %s2, %s202
      %p204 = pneg %p132
      %p205 = pneg %p129
      %p206 = scmp.lt.s32.totalorder %s19, 3
      %s207 = scalar_select %p206, %s19, 3
      %p208 = scmp.lt.s32.totalorder %s20, 0
      %s209 = scalar_select %p208, %s20, 0
      %s210 = smul.addr %s209, 2
      %s211 = smul.addr %s207, 2
      %s212 = sadd.s32 %s210, %s211
      %s213 = smul.addr %s212, 8
      %s214 = scalar_lea.vmem %s3, %s213
      %p215 = scmp.lt.s32.totalorder %s19, 3
      %s216 = scalar_select %p215, %s19, 3
      %p217 = scmp.lt.s32.totalorder %s20, 0
      %s218 = scalar_select %p217, %s20, 0
      %s219 = smul.addr %s216, 16
      %s220 = sadd.s32 %s218, %s219
      %s221 = smul.addr %s220, 4
      %s222 = scalar_lea.vmem %s0, %s221
      %p223 = scmp.lt.s32.totalorder %s19, 3
      %s224 = scalar_select %p223, %s19, 3
      %s225 = smul.addr %s224, 2
      %s226 = smul.addr %s225, 4
      %s227 = scalar_lea.vmem %s1, %s226
      %p228 = scmp.lt.s32.totalorder %s19, 3
      %s229 = scalar_select %p228, %s19, 3
      %p230 = scmp.lt.s32.totalorder %s20, 0
      %s231 = scalar_select %p230, %s20, 0
      %s232 = smul.addr %s229, 2
      %s233 = sadd.s32 %s231, %s232
      %s234 = smul.addr %s233, 4
      %s235 = scalar_lea.vmem %s2, %s234
      %p236 = scmp.lt.s32.totalorder %s19, 3
      %s237 = scalar_select %p236, %s19, 3
      %p238 = scmp.lt.s32.totalorder %s20, 0
      %s239 = scalar_select %p238, %s20, 0
      %s240 = smul.addr %s239, 2
      %s241 = smul.addr %s237, 2
      %s242 = sadd.s32 %s240, %s241
      %s243 = smul.addr %s242, 8
      %s244 = scalar_lea.vmem %s3, %s243
      %v245 = vld [vmem:[%s222] sm:$0xf]
      %v246 = vld [vmem:[%s222 + $0x4] sm:$0xf]
      %v247 = vld [vmem:[%s222 + $0x8] sm:$0xf]
      %v248 = vld [vmem:[%s222 + $0xc] sm:$0xf]
      %v249 = vld [vmem:[%s222 + $0x10] sm:$0xf]
      %v250 = vld [vmem:[%s222 + $0x14] sm:$0xf]
      %v251 = vld [vmem:[%s222 + $0x18] sm:$0xf]
      %v252 = vld [vmem:[%s222 + $0x1c] sm:$0xf]
      %v253 = vld [vmem:[%s222 + $0x20] sm:$0xf]
      %v254 = vld [vmem:[%s222 + $0x24] sm:$0xf]
      %v255 = vld [vmem:[%s222 + $0x28] sm:$0xf]
      %v256 = vld [vmem:[%s222 + $0x2c] sm:$0xf]
      %v257 = vld [vmem:[%s222 + $0x30] sm:$0xf]
      %v258 = vld [vmem:[%s222 + $0x34] sm:$0xf]
      %v259 = vld [vmem:[%s222 + $0x38] sm:$0xf]
      %v260 = vld [vmem:[%s222 + $0x3c] sm:$0xf]
      %v261 = vunpack.c.l.bf16 %v245
      %v262 = vunpack.c.l.bf16 %v246
      %v263 = vunpack.c.l.bf16 %v247
      %v264 = vunpack.c.l.bf16 %v248
      %v265 = vunpack.c.l.bf16 %v249
      %v266 = vunpack.c.l.bf16 %v250
      %v267 = vunpack.c.l.bf16 %v251
      %v268 = vunpack.c.l.bf16 %v252
      %v269 = vunpack.c.l.bf16 %v253
      %v270 = vunpack.c.l.bf16 %v254
      %v271 = vunpack.c.l.bf16 %v255
      %v272 = vunpack.c.l.bf16 %v256
      %v273 = vunpack.c.l.bf16 %v257
      %v274 = vunpack.c.l.bf16 %v258
      %v275 = vunpack.c.l.bf16 %v259
      %v276 = vunpack.c.l.bf16 %v260
      %v277 = vmax.f32 %v261, 0.0
      %v278 = vmax.f32 %v262, 0.0
      %v279 = vmax.f32 %v263, 0.0
      %v280 = vmax.f32 %v264, 0.0
      %v281 = vmax.f32 %v265, 0.0
      %v282 = vmax.f32 %v266, 0.0
      %v283 = vmax.f32 %v267, 0.0
      %v284 = vmax.f32 %v268, 0.0
      %v285 = vmax.f32 %v269, 0.0
      %v286 = vmax.f32 %v270, 0.0
      %v287 = vmax.f32 %v271, 0.0
      %v288 = vmax.f32 %v272, 0.0
      %v289 = vmax.f32 %v273, 0.0
      %v290 = vmax.f32 %v274, 0.0
      %v291 = vmax.f32 %v275, 0.0
      %v292 = vmax.f32 %v276, 0.0
      %v293 = vpack.c.bf16 %v278, %v277
      %v294 = vpack.c.bf16 %v280, %v279
      %v295 = vpack.c.bf16 %v282, %v281
      %v296 = vpack.c.bf16 %v284, %v283
      %v297 = vpack.c.bf16 %v286, %v285
      %v298 = vpack.c.bf16 %v288, %v287
      %v299 = vpack.c.bf16 %v290, %v289
      %v300 = vpack.c.bf16 %v292, %v291
      %v301 = vld [vmem:[%s227] sm:$0xf]
      %v302 = vld [vmem:[%s227 + $0x4] sm:$0xf]
      %v305 = vunpack.c.l.b16 %v301
      %v306 = vunpack.c.l.b16 %v302
      %v307 = vpack.c.b16 %v306, %v305
      %309 = vmatpush.bf16.msra.mxu0 %v300
      %310 = vmatpush.bf16.msra.mxu0 %v299
      %311 = vmatpush.bf16.msra.mxu0 %v298
      %312 = vmatpush.bf16.msra.mxu0 %v297
      %313 = vmatpush.bf16.msra.mxu0 %v296
      %314 = vmatpush.bf16.msra.mxu0 %v295
      %315 = vmatpush.bf16.msra.mxu0 %v294
      %316 = vmatpush.bf16.msra.mxu0 %v293
      %317 = vmatmul.bf16.gmra.mxu0 %v307
      %v318 = vpop.f32.mrf.mxu0
      %v319 = vadd.f32 0.0, %v318
      %v320 = vpop.f32.mrf.mxu0
      %v321 = vadd.f32 0.0, %v320
      %322 = vdwg.mxu0
      %vm323 = vcmask 64512
      %v324 = vsel %vm323, %v319, 0.0
      %325 = vadd.xlane.f32.xlu0 %v324
      %v326 = vpop.xlane.xlu0 %325
      %v327 = vsel %vm323, %v321, 0.0
      %328 = vadd.xlane.f32.xlu0 %v327
      %v329 = vpop.xlane.xlu0 %328
      %v330 = vmul.f32 %v319, %v319
      %v331 = vmul.f32 %v321, %v321
      %v332 = vsel %vm323, %v330, 0.0
      %333 = vadd.xlane.f32.xlu0 %v332
      %v334 = vpop.xlane.xlu0 %333
      %v335 = vsel %vm323, %v331, 0.0
      %336 = vadd.xlane.f32.xlu0 %v335
      %v337 = vpop.xlane.xlu0 %336
      %vm338 = vcmask 7168
      %v339 = vsel %vm338, %v326, %v334
      %v340 = vsel %vm338, %v329, %v337
      %vm341 = vcmask 15360
      %342 = vst.msk [vmem:[%s244] sm:$0xff] %vm341, %v339
      %343 = vst.msk [vmem:[%s244 + $0x8] sm:$0xff] %vm341, %v340
      %v344 = vpack.c.bf16 %v319, %v319
      %v345 = vpack.c.bf16 %v321, %v321
      %vm346 = vcmask 60416
      %347 = vst.msk [vmem:[%s235] sm:$0xf] %vm346, %v344
      %348 = vst.msk [vmem:[%s235 + $0x4] sm:$0xf] %vm346, %v345
      %p349 = scmp.lt.s32.totalorder %s19, 3
      %s350 = scalar_select %p349, %s19, 3
      %p351 = scmp.lt.s32.totalorder %s20, 0
      %s352 = scalar_select %p351, %s20, 0
      %s353 = smul.addr %s350, 2
      %s354 = sadd.s32 %s352, %s353
      %s355 = smul.addr %s354, 4
      %s356 = scalar_lea.vmem %s2, %s355
      %p357 = scmp.lt.s32.totalorder %s19, 3
      %s358 = scalar_select %p357, %s19, 3
      %p359 = scmp.lt.s32.totalorder %s20, 0
      %s360 = scalar_select %p359, %s20, 0
      %s361 = smul.addr %s360, 2
      %s362 = smul.addr %s358, 2
      %s363 = sadd.s32 %s361, %s362
      %s364 = smul.addr %s363, 8
      %s365 = scalar_lea.vmem %s3, %s364
      // Predicated region
      $region29: #{part_unet2_forward.13} parent=27 // pred_check
        %p366 = pneg %p101
      $region30: #{part_unet2_forward.13} parent=27 // pred_check_branch
        %368 = sbr.rel (%p366) target = $region32
      $region31: #{part_unet2_forward.13} parent=27 // pred_region
        _
      $region32: #{part_unet2_forward.13} parent=27 // pred_fallthru
        _
      // Predicated region
      $region33: #{part_unet2_forward.13} parent=27 // pred_check
        %p369 = pneg %p129
      $region34: #{part_unet2_forward.13} parent=27 // pred_check_branch
        %371 = sbr.rel (%p369) target = $region36
      $region35: #{part_unet2_forward.13} parent=27 // pred_region
        _
      $region36: #{part_unet2_forward.13} parent=27 // pred_fallthru
        _
    $region28: #{part_unet2_forward.13} parent=5 // pred_fallthru
      _
    %p372 = scmp.le.s32.totalorder 2, %s10
    // Predicated region
    $region37: #{part_unet2_forward.13} parent=5 // pred_check
      %p373 = pneg %p372
    $region38: #{part_unet2_forward.13} parent=5 // pred_check_branch
      %375 = sbr.rel (%p373) target = $region40
    $region39: #{part_unet2_forward.13} parent=5 // pred_region
      %s376 = ssub.s32 %s10, 2
      // Predicated region
      $region41: #{part_unet2_forward.13} parent=39 // pred_check
        %p377 = pneg %p107
      $region42: #{part_unet2_forward.13} parent=39 // pred_check_branch
        %379 = sbr.rel (%p377) target = $region44
      $region43: #{part_unet2_forward.13} parent=39 // pred_region
        %p380 = scmp.lt.s32.totalorder %s21, 3
        %s381 = scalar_select %p380, %s21, 3
        %p382 = scmp.lt.s32.totalorder %s22, 0
        %s383 = scalar_select %p382, %s22, 0
        %s384 = smul.addr %s381, 2
        %s385 = sadd.s32 %s383, %s384
        %s386 = smul.addr %s385, 4
        %s387 = scalar_lea.vmem %s2, %s386
      $region44: #{part_unet2_forward.13} parent=39 // pred_fallthru
        _
      // Predicated region
      $region45: #{part_unet2_forward.13} parent=39 // pred_check
        %p388 = pneg %p135
      $region46: #{part_unet2_forward.13} parent=39 // pred_check_branch
        %390 = sbr.rel (%p388) target = $region48
      $region47: #{part_unet2_forward.13} parent=39 // pred_region
        %p391 = scmp.lt.s32.totalorder %s21, 3
        %s392 = scalar_select %p391, %s21, 3
        %p393 = scmp.lt.s32.totalorder %s22, 0
        %s394 = scalar_select %p393, %s22, 0
        %s395 = smul.addr %s394, 2
        %s396 = smul.addr %s392, 2
        %s397 = sadd.s32 %s395, %s396
        %s398 = smul.addr %s397, 8
        %s399 = scalar_lea.vmem %s3, %s398
      $region48: #{part_unet2_forward.13} parent=39 // pred_fallthru
        _
    $region40: #{part_unet2_forward.13} parent=5 // pred_fallthru
      _
  $region6: #{part_unet2_forward.13} parent=0 // loop_footer
    %s14 = sadd.s32 1, %s10
  $region7: #{part_unet2_forward.13} parent=0 // loop_footer_branch
    %9 = sbr.rel target = $region3
  $region8: #{part_unet2_forward.13} parent=0 // loop_exit
    _

// kernel: part_unet2_forward.14
$region0: #{part_unet2_forward.14}
  #allocation0 [shape = 'u32[]', space=smem, size = 0x4, offset = 0x4, fixed_abs, tag = 'smem constant byte address 0x4 - core index']
  #allocation1 [shape = 'u32[72,128]{1,0:T(1,128)}', space=vmem, size = 0x9000, scoped, tag = 'internal scratch']
  %s0 = inlined_call_operand.vmem [shape: bf16[4,128,32], index: 0, kind: input, shape index: {}]
  %s1 = inlined_call_operand.vmem [shape: bf16[4,8,128], index: 1, kind: input, shape index: {}]
  %s2 = inlined_call_operand.vmem [shape: bf16[4,8,32], index: 2, kind: output, shape index: {0}]
  %s3 = inlined_call_operand.vmem [shape: f32[4,1,8,2], index: 3, kind: output, shape index: {1}]
  %4 = xla_tuple %s2, %s3
  %s5 = sld [smem:[#allocation0]]
  $region49: #{part_unet2_forward.14} parent=0
    _
  %s7 = ssub.s32 1, %s5
  %s8 = scalar_select 0, %s7, %s5
  loop: start=0, step=1, limit=6
  $region2: #{part_unet2_forward.14} parent=0 // loop_pre_header
    _
  $region3: #{part_unet2_forward.14} parent=0 // loop_header
    %s10 = sphi 0, %s14
    %p11 = scmp.ge.s32.totalorder %s10, 6
    %s17 = sphi 0, %s29
    %s18 = sphi 0, %s25
    %s19 = sphi 0, %s17
    %s20 = sphi 0, %s18
    %s21 = sphi 0, %s19
    %s22 = sphi 0, %s20
    %s34 = sphi 0, %s36
    %s37 = sphi 0, %s34
    %s38 = sphi 0, %s37
    %s54 = sphi 0, %s38
    %s60 = sphi 0, %s62
    %s63 = sphi 0, %s60
    %s64 = sphi 0, %s63
    %s80 = sphi 0, %s64
    %s88 = sphi 0, %s90
    %s91 = sphi 0, %s88
    %s92 = sphi 0, %s91
    %s108 = sphi 0, %s92
    %s116 = sphi 0, %s118
    %s119 = sphi 0, %s116
    %s120 = sphi 0, %s119
    %s136 = sphi 0, %s120
  $region4: #{part_unet2_forward.14} parent=0 // loop_header_branch
    %13 = sbr.rel (%p11) target = $region8
  $region5: #{part_unet2_forward.14} parent=0 // loop_body
    %s15 = ssub.s32 %s10, 1
    %s16 = ssub.s32 %s10, 2
    %s23 = sadd.s32 1, %s18
    %p24 = scmp.ge.s32.totalorder %s23, 1
    %s25 = scalar_select %p24, 0, %s23
    %s26 = sadd.s32 1, %s17
    %s27 = scalar_select %p24, %s26, %s17
    %p28 = scmp.ge.s32.totalorder %s27, 4
    %s29 = scalar_select %p28, 0, %s27
    %s30 = ssub.s32 %s17, %s29
    %s31 = ssub.s32 %s18, %s25
    %s32 = sor.u32 %s30, %s31
    %p33 = scmp.eq.s32.totalorder %s32, 0
    %s35 = sadd.s32 %s34, 1
    %s36 = scalar_select %p33, %s34, %s35
    %p39 = pneg %p33
    %p40 = scmp.eq.s32.totalorder %s10, 3
    %p41 = por %p39, %p40
    %p42 = scmp.ne.s32.totalorder %s34, %s37
    %p43 = scmp.eq.s32.totalorder %s10, 0
    %p44 = por %p42, %p43
    %p45 = scmp.ne.s32.totalorder %s34, %s37
    %p46 = scmp.eq.s32.totalorder %s15, 3
    %p47 = por %p45, %p46
    %p48 = scmp.ne.s32.totalorder %s37, %s38
    %p49 = scmp.eq.s32.totalorder %s15, 0
    %p50 = por %p48, %p49
    %p51 = scmp.ne.s32.totalorder %s37, %s38
    %p52 = scmp.eq.s32.totalorder %s16, 3
    %p53 = por %p51, %p52
    %p55 = scmp.ne.s32.totalorder %s38, %s54
    %p56 = scmp.eq.s32.totalorder %s16, 0
    %p57 = por %p55, %p56
    %s58 = ssub.s32 %s17, %s29
    %p59 = scmp.eq.s32.totalorder %s58, 0
    %s61 = sadd.s32 %s60, 1
    %s62 = scalar_select %p59, %s60, %s61
    %p65 = pneg %p59
    %p66 = scmp.eq.s32.totalorder %s10, 3
    %p67 = por %p65, %p66
    %p68 = scmp.ne.s32.totalorder %s60, %s63
    %p69 = scmp.eq.s32.totalorder %s10, 0
    %p70 = por %p68, %p69
    %p71 = scmp.ne.s32.totalorder %s60, %s63
    %p72 = scmp.eq.s32.totalorder %s15, 3
    %p73 = por %p71, %p72
    %p74 = scmp.ne.s32.totalorder %s63, %s64
    %p75 = scmp.eq.s32.totalorder %s15, 0
    %p76 = por %p74, %p75
    %p77 = scmp.ne.s32.totalorder %s63, %s64
    %p78 = scmp.eq.s32.totalorder %s16, 3
    %p79 = por %p77, %p78
    %p81 = scmp.ne.s32.totalorder %s64, %s80
    %p82 = scmp.eq.s32.totalorder %s16, 0
    %p83 = por %p81, %p82
    %s84 = ssub.s32 %s17, %s29
    %s85 = ssub.s32 %s18, %s25
    %s86 = sor.u32 %s84, %s85
    %p87 = scmp.eq.s32.totalorder %s86, 0
    %s89 = sadd.s32 %s88, 1
    %s90 = scalar_select %p87, %s88, %s89
    %p93 = pneg %p87
    %p94 = scmp.eq.s32.totalorder %s10, 3
    %p95 = por %p93, %p94
    %p96 = scmp.ne.s32.totalorder %s88, %s91
    %p97 = scmp.eq.s32.totalorder %s10, 0
    %p98 = por %p96, %p97
    %p99 = scmp.ne.s32.totalorder %s88, %s91
    %p100 = scmp.eq.s32.totalorder %s15, 3
    %p101 = por %p99, %p100
    %p102 = scmp.ne.s32.totalorder %s91, %s92
    %p103 = scmp.eq.s32.totalorder %s15, 0
    %p104 = por %p102, %p103
    %p105 = scmp.ne.s32.totalorder %s91, %s92
    %p106 = scmp.eq.s32.totalorder %s16, 3
    %p107 = por %p105, %p106
    %p109 = scmp.ne.s32.totalorder %s92, %s108
    %p110 = scmp.eq.s32.totalorder %s16, 0
    %p111 = por %p109, %p110
    %s112 = ssub.s32 %s17, %s29
    %s113 = ssub.s32 %s18, %s25
    %s114 = sor.u32 %s112, %s113
    %p115 = scmp.eq.s32.totalorder %s114, 0
    %s117 = sadd.s32 %s116, 1
    %s118 = scalar_select %p115, %s116, %s117
    %p121 = pneg %p115
    %p122 = scmp.eq.s32.totalorder %s10, 3
    %p123 = por %p121, %p122
    %p124 = scmp.ne.s32.totalorder %s116, %s119
    %p125 = scmp.eq.s32.totalorder %s10, 0
    %p126 = por %p124, %p125
    %p127 = scmp.ne.s32.totalorder %s116, %s119
    %p128 = scmp.eq.s32.totalorder %s15, 3
    %p129 = por %p127, %p128
    %p130 = scmp.ne.s32.totalorder %s119, %s120
    %p131 = scmp.eq.s32.totalorder %s15, 0
    %p132 = por %p130, %p131
    %p133 = scmp.ne.s32.totalorder %s119, %s120
    %p134 = scmp.eq.s32.totalorder %s16, 3
    %p135 = por %p133, %p134
    %p137 = scmp.ne.s32.totalorder %s120, %s136
    %p138 = scmp.eq.s32.totalorder %s16, 0
    %p139 = por %p137, %p138
    %p140 = scmp.le.s32.totalorder 1, %s10
    %p141 = scmp.lt.s32.totalorder %s10, 5
    %p142 = pnand %p140, %p141
    %p143 = pneg %p142
    // Predicated region
    $region9: #{part_unet2_forward.14} parent=5 // pred_check
      _
    $region10: #{part_unet2_forward.14} parent=5 // pred_check_branch
      %145 = sbr.rel (%p142) target = $region12
    $region11: #{part_unet2_forward.14} parent=5 // pred_region
      %s146 = ssub.s32 %s10, 1
    $region12: #{part_unet2_forward.14} parent=5 // pred_fallthru
      _
    %p147 = scmp.lt.s32.totalorder %s10, 4
    // Predicated region
    $region13: #{part_unet2_forward.14} parent=5 // pred_check
      %p148 = pneg %p147
    $region14: #{part_unet2_forward.14} parent=5 // pred_check_branch
      %150 = sbr.rel (%p148) target = $region16
    $region15: #{part_unet2_forward.14} parent=5 // pred_region
      // Predicated region
      $region17: #{part_unet2_forward.14} parent=15 // pred_check
        %p151 = pneg %p44
      $region18: #{part_unet2_forward.14} parent=15 // pred_check_branch
        %153 = sbr.rel (%p151) target = $region20
      $region19: #{part_unet2_forward.14} parent=15 // pred_region
        %p154 = scmp.lt.s32.totalorder %s17, 3
        %s155 = scalar_select %p154, %s17, 3
        %p156 = scmp.lt.s32.totalorder %s18, 0
        %s157 = scalar_select %p156, %s18, 0
        %s158 = smul.addr %s155, 16
        %s159 = sadd.s32 %s157, %s158
        %s160 = smul.addr %s159, 4
        %s161 = scalar_lea.vmem %s0, %s160
      $region20: #{part_unet2_forward.14} parent=15 // pred_fallthru
        _
      // Predicated region
      $region21: #{part_unet2_forward.14} parent=15 // pred_check
        %p162 = pneg %p70
      $region22: #{part_unet2_forward.14} parent=15 // pred_check_branch
        %164 = sbr.rel (%p162) target = $region24
      $region23: #{part_unet2_forward.14} parent=15 // pred_region
        %p165 = scmp.lt.s32.totalorder %s17, 3
        %s166 = scalar_select %p165, %s17, 3
        %s167 = smul.addr %s166, 4
        %s168 = scalar_lea.vmem %s1, %s167
      $region24: #{part_unet2_forward.14} parent=15 // pred_fallthru
        _
    $region16: #{part_unet2_forward.14} parent=5 // pred_fallthru
      _
    %p169 = scmp.le.s32.totalorder 1, %s10
    %p170 = scmp.lt.s32.totalorder %s10, 5
    %p171 = pnand %p169, %p170
    %p172 = pneg %p171
    // Predicated region
    $region25: #{part_unet2_forward.14} parent=5 // pred_check
      _
    $region26: #{part_unet2_forward.14} parent=5 // pred_check_branch
      %174 = sbr.rel (%p171) target = $region28
    $region27: #{part_unet2_forward.14} parent=5 // pred_region
      %s175 = ssub.s32 %s10, 1
      %p176 = scmp.lt.s32.totalorder %s19, 3
      %s177 = scalar_select %p176, %s19, 3
      %p178 = scmp.lt.s32.totalorder %s20, 0
      %s179 = scalar_select %p178, %s20, 0
      %s180 = smul.addr %s177, 16
      %s181 = sadd.s32 %s179, %s180
      %s182 = smul.addr %s181, 4
      %s183 = scalar_lea.vmem %s0, %s182
      %p184 = pneg %p50
      %p185 = pneg %p47
      %p186 = scmp.lt.s32.totalorder %s19, 3
      %s187 = scalar_select %p186, %s19, 3
      %s188 = smul.addr %s187, 4
      %s189 = scalar_lea.vmem %s1, %s188
      %p190 = pneg %p76
      %p191 = pneg %p73
      %p192 = pneg %p104
      %p193 = pneg %p101
      %p194 = scmp.lt.s32.totalorder %s19, 3
      %s195 = scalar_select %p194, %s19, 3
      %p196 = scmp.lt.s32.totalorder %s20, 0
      %s197 = scalar_select %p196, %s20, 0
      %s198 = sadd.s32 %s197, %s195
      %s199 = smul.addr %s198, 4
      %s200 = scalar_lea.vmem %s2, %s199
      %p201 = pneg %p132
      %p202 = pneg %p129
      %p203 = scmp.lt.s32.totalorder %s19, 3
      %s204 = scalar_select %p203, %s19, 3
      %p205 = scmp.lt.s32.totalorder %s20, 0
      %s206 = scalar_select %p205, %s20, 0
      %s207 = sadd.s32 %s206, %s204
      %s208 = smul.addr %s207, 8
      %s209 = scalar_lea.vmem %s3, %s208
      %p210 = scmp.lt.s32.totalorder %s19, 3
      %s211 = scalar_select %p210, %s19, 3
      %p212 = scmp.lt.s32.totalorder %s20, 0
      %s213 = scalar_select %p212, %s20, 0
      %s214 = smul.addr %s211, 16
      %s215 = sadd.s32 %s213, %s214
      %s216 = smul.addr %s215, 4
      %s217 = scalar_lea.vmem %s0, %s216
      %p218 = scmp.lt.s32.totalorder %s19, 3
      %s219 = scalar_select %p218, %s19, 3
      %s220 = smul.addr %s219, 4
      %s221 = scalar_lea.vmem %s1, %s220
      %p222 = scmp.lt.s32.totalorder %s19, 3
      %s223 = scalar_select %p222, %s19, 3
      %p224 = scmp.lt.s32.totalorder %s20, 0
      %s225 = scalar_select %p224, %s20, 0
      %s226 = sadd.s32 %s225, %s223
      %s227 = smul.addr %s226, 4
      %s228 = scalar_lea.vmem %s2, %s227
      %p229 = scmp.lt.s32.totalorder %s19, 3
      %s230 = scalar_select %p229, %s19, 3
      %p231 = scmp.lt.s32.totalorder %s20, 0
      %s232 = scalar_select %p231, %s20, 0
      %s233 = sadd.s32 %s232, %s230
      %s234 = smul.addr %s233, 8
      %s235 = scalar_lea.vmem %s3, %s234
      %v236 = vld [vmem:[%s217] sm:$0xf]
      %v237 = vld [vmem:[%s217 + $0x4] sm:$0xf]
      %v238 = vld [vmem:[%s217 + $0x8] sm:$0xf]
      %v239 = vld [vmem:[%s217 + $0xc] sm:$0xf]
      %v240 = vld [vmem:[%s217 + $0x10] sm:$0xf]
      %v241 = vld [vmem:[%s217 + $0x14] sm:$0xf]
      %v242 = vld [vmem:[%s217 + $0x18] sm:$0xf]
      %v243 = vld [vmem:[%s217 + $0x1c] sm:$0xf]
      %v244 = vld [vmem:[%s217 + $0x20] sm:$0xf]
      %v245 = vld [vmem:[%s217 + $0x24] sm:$0xf]
      %v246 = vld [vmem:[%s217 + $0x28] sm:$0xf]
      %v247 = vld [vmem:[%s217 + $0x2c] sm:$0xf]
      %v248 = vld [vmem:[%s217 + $0x30] sm:$0xf]
      %v249 = vld [vmem:[%s217 + $0x34] sm:$0xf]
      %v250 = vld [vmem:[%s217 + $0x38] sm:$0xf]
      %v251 = vld [vmem:[%s217 + $0x3c] sm:$0xf]
      %v252 = vunpack.c.l.bf16 %v236
      %v253 = vunpack.c.l.bf16 %v237
      %v254 = vunpack.c.l.bf16 %v238
      %v255 = vunpack.c.l.bf16 %v239
      %v256 = vunpack.c.l.bf16 %v240
      %v257 = vunpack.c.l.bf16 %v241
      %v258 = vunpack.c.l.bf16 %v242
      %v259 = vunpack.c.l.bf16 %v243
      %v260 = vunpack.c.l.bf16 %v244
      %v261 = vunpack.c.l.bf16 %v245
      %v262 = vunpack.c.l.bf16 %v246
      %v263 = vunpack.c.l.bf16 %v247
      %v264 = vunpack.c.l.bf16 %v248
      %v265 = vunpack.c.l.bf16 %v249
      %v266 = vunpack.c.l.bf16 %v250
      %v267 = vunpack.c.l.bf16 %v251
      %v268 = vmax.f32 %v252, 0.0
      %v269 = vmax.f32 %v253, 0.0
      %v270 = vmax.f32 %v254, 0.0
      %v271 = vmax.f32 %v255, 0.0
      %v272 = vmax.f32 %v256, 0.0
      %v273 = vmax.f32 %v257, 0.0
      %v274 = vmax.f32 %v258, 0.0
      %v275 = vmax.f32 %v259, 0.0
      %v276 = vmax.f32 %v260, 0.0
      %v277 = vmax.f32 %v261, 0.0
      %v278 = vmax.f32 %v262, 0.0
      %v279 = vmax.f32 %v263, 0.0
      %v280 = vmax.f32 %v264, 0.0
      %v281 = vmax.f32 %v265, 0.0
      %v282 = vmax.f32 %v266, 0.0
      %v283 = vmax.f32 %v267, 0.0
      %v284 = vpack.c.bf16 %v269, %v268
      %v285 = vpack.c.bf16 %v271, %v270
      %v286 = vpack.c.bf16 %v273, %v272
      %v287 = vpack.c.bf16 %v275, %v274
      %v288 = vpack.c.bf16 %v277, %v276
      %v289 = vpack.c.bf16 %v279, %v278
      %v290 = vpack.c.bf16 %v281, %v280
      %v291 = vpack.c.bf16 %v283, %v282
      %v292 = vld [vmem:[%s221] sm:$0xf]
      %293 = vmatpush.bf16.msra.mxu0 %v291
      %294 = vmatpush.bf16.msra.mxu0 %v290
      %295 = vmatpush.bf16.msra.mxu0 %v289
      %296 = vmatpush.bf16.msra.mxu0 %v288
      %297 = vmatpush.bf16.msra.mxu0 %v287
      %298 = vmatpush.bf16.msra.mxu0 %v286
      %299 = vmatpush.bf16.msra.mxu0 %v285
      %300 = vmatpush.bf16.msra.mxu0 %v284
      %301 = vmatmul.bf16.gmra.mxu0 %v292
      %v302 = vpop.f32.mrf.mxu0
      %v303 = vadd.f32 0.0, %v302
      %v304 = vpop.f32.mrf.mxu0
      %305 = vdwg.mxu0
      %vm306 = vcmask 261120
      %v307 = vsel %vm306, %v303, 0.0
      %308 = vadd.xlane.f32.xlu0 %v307
      %v309 = vpop.xlane.xlu0 %308
      %v310 = vmul.f32 %v303, %v303
      %v311 = vsel %vm306, %v310, 0.0
      %312 = vadd.xlane.f32.xlu0 %v311
      %v313 = vpop.xlane.xlu0 %312
      %vm314 = vcmask 7168
      %v315 = vsel %vm314, %v309, %v313
      %vm316 = vcmask 15360
      %317 = vst.msk [vmem:[%s235] sm:$0xff] %vm316, %v315
      %v318 = vpack.c.bf16 %v303, %v303
      %vm319 = vcmask 257024
      %320 = vst.msk [vmem:[%s228] sm:$0xf] %vm319, %v318
      %p321 = scmp.lt.s32.totalorder %s19, 3
      %s322 = scalar_select %p321, %s19, 3
      %p323 = scmp.lt.s32.totalorder %s20, 0
      %s324 = scalar_select %p323, %s20, 0
      %s325 = sadd.s32 %s324, %s322
      %s326 = smul.addr %s325, 4
      %s327 = scalar_lea.vmem %s2, %s326
      %p328 = scmp.lt.s32.totalorder %s19, 3
      %s329 = scalar_select %p328, %s19, 3
      %p330 = scmp.lt.s32.totalorder %s20, 0
      %s331 = scalar_select %p330, %s20, 0
      %s332 = sadd.s32 %s331, %s329
      %s333 = smul.addr %s332, 8
      %s334 = scalar_lea.vmem %s3, %s333
      // Predicated region
      $region29: #{part_unet2_forward.14} parent=27 // pred_check
        %p335 = pneg %p101
      $region30: #{part_unet2_forward.14} parent=27 // pred_check_branch
        %337 = sbr.rel (%p335) target = $region32
      $region31: #{part_unet2_forward.14} parent=27 // pred_region
        _
      $region32: #{part_unet2_forward.14} parent=27 // pred_fallthru
        _
      // Predicated region
      $region33: #{part_unet2_forward.14} parent=27 // pred_check
        %p338 = pneg %p129
      $region34: #{part_unet2_forward.14} parent=27 // pred_check_branch
        %340 = sbr.rel (%p338) target = $region36
      $region35: #{part_unet2_forward.14} parent=27 // pred_region
        _
      $region36: #{part_unet2_forward.14} parent=27 // pred_fallthru
        _
    $region28: #{part_unet2_forward.14} parent=5 // pred_fallthru
      _
    %p341 = scmp.le.s32.totalorder 2, %s10
    // Predicated region
    $region37: #{part_unet2_forward.14} parent=5 // pred_check
      %p342 = pneg %p341
    $region38: #{part_unet2_forward.14} parent=5 // pred_check_branch
      %344 = sbr.rel (%p342) target = $region40
    $region39: #{part_unet2_forward.14} parent=5 // pred_region
      %s345 = ssub.s32 %s10, 2
      // Predicated region
      $region41: #{part_unet2_forward.14} parent=39 // pred_check
        %p346 = pneg %p107
      $region42: #{part_unet2_forward.14} parent=39 // pred_check_branch
        %348 = sbr.rel (%p346) target = $region44
      $region43: #{part_unet2_forward.14} parent=39 // pred_region
        %p349 = scmp.lt.s32.totalorder %s21, 3
        %s350 = scalar_select %p349, %s21, 3
        %p351 = scmp.lt.s32.totalorder %s22, 0
        %s352 = scalar_select %p351, %s22, 0
        %s353 = sadd.s32 %s352, %s350
        %s354 = smul.addr %s353, 4
        %s355 = scalar_lea.vmem %s2, %s354
      $region44: #{part_unet2_forward.14} parent=39 // pred_fallthru
        _
      // Predicated region
      $region45: #{part_unet2_forward.14} parent=39 // pred_check
        %p356 = pneg %p135
      $region46: #{part_unet2_forward.14} parent=39 // pred_check_branch
        %358 = sbr.rel (%p356) target = $region48
      $region47: #{part_unet2_forward.14} parent=39 // pred_region
        %p359 = scmp.lt.s32.totalorder %s21, 3
        %s360 = scalar_select %p359, %s21, 3
        %p361 = scmp.lt.s32.totalorder %s22, 0
        %s362 = scalar_select %p361, %s22, 0
        %s363 = sadd.s32 %s362, %s360
        %s364 = smul.addr %s363, 8
        %s365 = scalar_lea.vmem %s3, %s364
      $region48: #{part_unet2_forward.14} parent=39 // pred_fallthru
        _
    $region40: #{part_unet2_forward.14} parent=5 // pred_fallthru
      _
  $region6: #{part_unet2_forward.14} parent=0 // loop_footer
    %s14 = sadd.s32 1, %s10
  $region7: #{part_unet2_forward.14} parent=0 // loop_footer_branch
    %9 = sbr.rel target = $region3
  $region8: #{part_unet2_forward.14} parent=0 // loop_exit
    _

// kernel: part_unet2_forward.15
$region0: #{part_unet2_forward.15}
  #allocation0 [shape = 'u32[]', space=smem, size = 0x4, offset = 0x4, fixed_abs, tag = 'smem constant byte address 0x4 - core index']
  #allocation1 [shape = 'u32[72,128]{1,0:T(1,128)}', space=vmem, size = 0x9000, scoped, tag = 'internal scratch']
  %s0 = inlined_call_operand.vmem [shape: bf16[4,64,128], index: 0, kind: input, shape index: {}]
  %s1 = inlined_call_operand.vmem [shape: bf16[4,3,64], index: 1, kind: input, shape index: {}]
  %s2 = inlined_call_operand.vmem [shape: f32[3,1], index: 2, kind: input, shape index: {}]
  %s3 = inlined_call_operand.vmem [shape: f32[4,3,128], index: 3, kind: output, shape index: {}]
  %s4 = sld [smem:[#allocation0]]
  $region45: #{part_unet2_forward.15} parent=0
    _
  %s6 = ssub.s32 1, %s4
  %s7 = scalar_select 0, %s6, %s4
  loop: start=0, step=1, limit=6
  $region2: #{part_unet2_forward.15} parent=0 // loop_pre_header
    _
  $region3: #{part_unet2_forward.15} parent=0 // loop_header
    %s9 = sphi 0, %s13
    %p10 = scmp.ge.s32.totalorder %s9, 6
    %s16 = sphi 0, %s28
    %s17 = sphi 0, %s24
    %s18 = sphi 0, %s16
    %s19 = sphi 0, %s17
    %s20 = sphi 0, %s18
    %s21 = sphi 0, %s19
    %s33 = sphi 0, %s35
    %s36 = sphi 0, %s33
    %s37 = sphi 0, %s36
    %s53 = sphi 0, %s37
    %s59 = sphi 0, %s61
    %s62 = sphi 0, %s59
    %s63 = sphi 0, %s62
    %s79 = sphi 0, %s63
    %s83 = sphi 0, %s83
    %s85 = sphi 0, %s83
    %s86 = sphi 0, %s85
    %s100 = sphi 0, %s86
    %s108 = sphi 0, %s110
    %s111 = sphi 0, %s108
    %s112 = sphi 0, %s111
    %s128 = sphi 0, %s112
  $region4: #{part_unet2_forward.15} parent=0 // loop_header_branch
    %12 = sbr.rel (%p10) target = $region8
  $region5: #{part_unet2_forward.15} parent=0 // loop_body
    %s14 = ssub.s32 %s9, 1
    %s15 = ssub.s32 %s9, 2
    %s22 = sadd.s32 1, %s17
    %p23 = scmp.ge.s32.totalorder %s22, 1
    %s24 = scalar_select %p23, 0, %s22
    %s25 = sadd.s32 1, %s16
    %s26 = scalar_select %p23, %s25, %s16
    %p27 = scmp.ge.s32.totalorder %s26, 4
    %s28 = scalar_select %p27, 0, %s26
    %s29 = ssub.s32 %s16, %s28
    %s30 = ssub.s32 %s17, %s24
    %s31 = sor.u32 %s29, %s30
    %p32 = scmp.eq.s32.totalorder %s31, 0
    %s34 = sadd.s32 %s33, 1
    %s35 = scalar_select %p32, %s33, %s34
    %p38 = pneg %p32
    %p39 = scmp.eq.s32.totalorder %s9, 3
    %p40 = por %p38, %p39
    %p41 = scmp.ne.s32.totalorder %s33, %s36
    %p42 = scmp.eq.s32.totalorder %s9, 0
    %p43 = por %p41, %p42
    %p44 = scmp.ne.s32.totalorder %s33, %s36
    %p45 = scmp.eq.s32.totalorder %s14, 3
    %p46 = por %p44, %p45
    %p47 = scmp.ne.s32.totalorder %s36, %s37
    %p48 = scmp.eq.s32.totalorder %s14, 0
    %p49 = por %p47, %p48
    %p50 = scmp.ne.s32.totalorder %s36, %s37
    %p51 = scmp.eq.s32.totalorder %s15, 3
    %p52 = por %p50, %p51
    %p54 = scmp.ne.s32.totalorder %s37, %s53
    %p55 = scmp.eq.s32.totalorder %s15, 0
    %p56 = por %p54, %p55
    %s57 = ssub.s32 %s16, %s28
    %p58 = scmp.eq.s32.totalorder %s57, 0
    %s60 = sadd.s32 %s59, 1
    %s61 = scalar_select %p58, %s59, %s60
    %p64 = pneg %p58
    %p65 = scmp.eq.s32.totalorder %s9, 3
    %p66 = por %p64, %p65
    %p67 = scmp.ne.s32.totalorder %s59, %s62
    %p68 = scmp.eq.s32.totalorder %s9, 0
    %p69 = por %p67, %p68
    %p70 = scmp.ne.s32.totalorder %s59, %s62
    %p71 = scmp.eq.s32.totalorder %s14, 3
    %p72 = por %p70, %p71
    %p73 = scmp.ne.s32.totalorder %s62, %s63
    %p74 = scmp.eq.s32.totalorder %s14, 0
    %p75 = por %p73, %p74
    %p76 = scmp.ne.s32.totalorder %s62, %s63
    %p77 = scmp.eq.s32.totalorder %s15, 3
    %p78 = por %p76, %p77
    %p80 = scmp.ne.s32.totalorder %s63, %s79
    %p81 = scmp.eq.s32.totalorder %s15, 0
    %p82 = por %p80, %p81
    %s84 = sadd.s32 %s83, 1
    %p87 = scmp.eq.s32.totalorder %s9, 3
    %p88 = scmp.ne.s32.totalorder %s83, %s85
    %p89 = scmp.eq.s32.totalorder %s9, 0
    %p90 = por %p88, %p89
    %p91 = scmp.ne.s32.totalorder %s83, %s85
    %p92 = scmp.eq.s32.totalorder %s14, 3
    %p93 = por %p91, %p92
    %p94 = scmp.ne.s32.totalorder %s85, %s86
    %p95 = scmp.eq.s32.totalorder %s14, 0
    %p96 = por %p94, %p95
    %p97 = scmp.ne.s32.totalorder %s85, %s86
    %p98 = scmp.eq.s32.totalorder %s15, 3
    %p99 = por %p97, %p98
    %p101 = scmp.ne.s32.totalorder %s86, %s100
    %p102 = scmp.eq.s32.totalorder %s15, 0
    %p103 = por %p101, %p102
    %s104 = ssub.s32 %s16, %s28
    %s105 = ssub.s32 %s17, %s24
    %s106 = sor.u32 %s104, %s105
    %p107 = scmp.eq.s32.totalorder %s106, 0
    %s109 = sadd.s32 %s108, 1
    %s110 = scalar_select %p107, %s108, %s109
    %p113 = pneg %p107
    %p114 = scmp.eq.s32.totalorder %s9, 3
    %p115 = por %p113, %p114
    %p116 = scmp.ne.s32.totalorder %s108, %s111
    %p117 = scmp.eq.s32.totalorder %s9, 0
    %p118 = por %p116, %p117
    %p119 = scmp.ne.s32.totalorder %s108, %s111
    %p120 = scmp.eq.s32.totalorder %s14, 3
    %p121 = por %p119, %p120
    %p122 = scmp.ne.s32.totalorder %s111, %s112
    %p123 = scmp.eq.s32.totalorder %s14, 0
    %p124 = por %p122, %p123
    %p125 = scmp.ne.s32.totalorder %s111, %s112
    %p126 = scmp.eq.s32.totalorder %s15, 3
    %p127 = por %p125, %p126
    %p129 = scmp.ne.s32.totalorder %s112, %s128
    %p130 = scmp.eq.s32.totalorder %s15, 0
    %p131 = por %p129, %p130
    %p132 = scmp.le.s32.totalorder 1, %s9
    %p133 = scmp.lt.s32.totalorder %s9, 5
    %p134 = pnand %p132, %p133
    %p135 = pneg %p134
    // Predicated region
    $region9: #{part_unet2_forward.15} parent=5 // pred_check
      _
    $region10: #{part_unet2_forward.15} parent=5 // pred_check_branch
      %137 = sbr.rel (%p134) target = $region12
    $region11: #{part_unet2_forward.15} parent=5 // pred_region
      %s138 = ssub.s32 %s9, 1
      // Predicated region
      $region13: #{part_unet2_forward.15} parent=11 // pred_check
        %p139 = pneg %p96
      $region14: #{part_unet2_forward.15} parent=11 // pred_check_branch
        %141 = sbr.rel (%p139) target = $region16
      $region15: #{part_unet2_forward.15} parent=11 // pred_region
        _
      $region16: #{part_unet2_forward.15} parent=11 // pred_fallthru
        _
    $region12: #{part_unet2_forward.15} parent=5 // pred_fallthru
      _
    %p142 = scmp.lt.s32.totalorder %s9, 4
    // Predicated region
    $region17: #{part_unet2_forward.15} parent=5 // pred_check
      %p143 = pneg %p142
    $region18: #{part_unet2_forward.15} parent=5 // pred_check_branch
      %145 = sbr.rel (%p143) target = $region20
    $region19: #{part_unet2_forward.15} parent=5 // pred_region
      // Predicated region
      $region21: #{part_unet2_forward.15} parent=19 // pred_check
        %p146 = pneg %p43
      $region22: #{part_unet2_forward.15} parent=19 // pred_check_branch
        %148 = sbr.rel (%p146) target = $region24
      $region23: #{part_unet2_forward.15} parent=19 // pred_region
        %p149 = scmp.lt.s32.totalorder %s16, 3
        %s150 = scalar_select %p149, %s16, 3
        %p151 = scmp.lt.s32.totalorder %s17, 0
        %s152 = scalar_select %p151, %s17, 0
        %s153 = smul.addr %s150, 8
        %s154 = sadd.s32 %s152, %s153
        %s155 = smul.addr %s154, 4
        %s156 = scalar_lea.vmem %s0, %s155
      $region24: #{part_unet2_forward.15} parent=19 // pred_fallthru
        _
      // Predicated region
      $region25: #{part_unet2_forward.15} parent=19 // pred_check
        %p157 = pneg %p69
      $region26: #{part_unet2_forward.15} parent=19 // pred_check_branch
        %159 = sbr.rel (%p157) target = $region28
      $region27: #{part_unet2_forward.15} parent=19 // pred_region
        %p160 = scmp.lt.s32.totalorder %s16, 3
        %s161 = scalar_select %p160, %s16, 3
        %s162 = smul.addr %s161, 2
        %s163 = scalar_lea.vmem %s1, %s162
      $region28: #{part_unet2_forward.15} parent=19 // pred_fallthru
        _
    $region20: #{part_unet2_forward.15} parent=5 // pred_fallthru
      _
    %p164 = scmp.le.s32.totalorder 1, %s9
    %p165 = scmp.lt.s32.totalorder %s9, 5
    %p166 = pnand %p164, %p165
    %p167 = pneg %p166
    // Predicated region
    $region29: #{part_unet2_forward.15} parent=5 // pred_check
      _
    $region30: #{part_unet2_forward.15} parent=5 // pred_check_branch
      %169 = sbr.rel (%p166) target = $region32
    $region31: #{part_unet2_forward.15} parent=5 // pred_region
      %s170 = ssub.s32 %s9, 1
      %p171 = scmp.lt.s32.totalorder %s18, 3
      %s172 = scalar_select %p171, %s18, 3
      %p173 = scmp.lt.s32.totalorder %s19, 0
      %s174 = scalar_select %p173, %s19, 0
      %s175 = smul.addr %s172, 8
      %s176 = sadd.s32 %s174, %s175
      %s177 = smul.addr %s176, 4
      %s178 = scalar_lea.vmem %s0, %s177
      %p179 = pneg %p49
      %p180 = pneg %p46
      %p181 = scmp.lt.s32.totalorder %s18, 3
      %s182 = scalar_select %p181, %s18, 3
      %s183 = smul.addr %s182, 2
      %s184 = scalar_lea.vmem %s1, %s183
      %p185 = pneg %p75
      %p186 = pneg %p72
      %p187 = pneg %p96
      %p188 = pneg %p93
      %p189 = pneg %p124
      %p190 = pneg %p121
      %p191 = scmp.lt.s32.totalorder %s18, 3
      %s192 = scalar_select %p191, %s18, 3
      %p193 = scmp.lt.s32.totalorder %s19, 0
      %s194 = scalar_select %p193, %s19, 0
      %s195 = sadd.s32 %s194, %s192
      %s196 = smul.addr %s195, 4
      %s197 = scalar_lea.vmem %s3, %s196
      %p198 = scmp.lt.s32.totalorder %s18, 3
      %s199 = scalar_select %p198, %s18, 3
      %p200 = scmp.lt.s32.totalorder %s19, 0
      %s201 = scalar_select %p200, %s19, 0
      %s202 = smul.addr %s199, 8
      %s203 = sadd.s32 %s201, %s202
      %s204 = smul.addr %s203, 4
      %s205 = scalar_lea.vmem %s0, %s204
      %p206 = scmp.lt.s32.totalorder %s18, 3
      %s207 = scalar_select %p206, %s18, 3
      %s208 = smul.addr %s207, 2
      %s209 = scalar_lea.vmem %s1, %s208
      %p210 = scmp.lt.s32.totalorder %s18, 3
      %s211 = scalar_select %p210, %s18, 3
      %p212 = scmp.lt.s32.totalorder %s19, 0
      %s213 = scalar_select %p212, %s19, 0
      %s214 = sadd.s32 %s213, %s211
      %s215 = smul.addr %s214, 4
      %s216 = scalar_lea.vmem %s3, %s215
      %v218 = vld [vmem:[%s205] sm:$0xf]
      %v219 = vld [vmem:[%s205 + $0x4] sm:$0xf]
      %v220 = vld [vmem:[%s205 + $0x8] sm:$0xf]
      %v221 = vld [vmem:[%s205 + $0xc] sm:$0xf]
      %v222 = vld [vmem:[%s205 + $0x10] sm:$0xf]
      %v223 = vld [vmem:[%s205 + $0x14] sm:$0xf]
      %v224 = vld [vmem:[%s205 + $0x18] sm:$0xf]
      %v225 = vld [vmem:[%s205 + $0x1c] sm:$0xf]
      %v226 = vunpack.c.l.bf16 %v218
      %v227 = vunpack.c.l.bf16 %v219
      %v228 = vunpack.c.l.bf16 %v220
      %v229 = vunpack.c.l.bf16 %v221
      %v230 = vunpack.c.l.bf16 %v222
      %v231 = vunpack.c.l.bf16 %v223
      %v232 = vunpack.c.l.bf16 %v224
      %v233 = vunpack.c.l.bf16 %v225
      %v234 = vmax.f32 %v226, 0.0
      %v235 = vmax.f32 %v227, 0.0
      %v236 = vmax.f32 %v228, 0.0
      %v237 = vmax.f32 %v229, 0.0
      %v238 = vmax.f32 %v230, 0.0
      %v239 = vmax.f32 %v231, 0.0
      %v240 = vmax.f32 %v232, 0.0
      %v241 = vmax.f32 %v233, 0.0
      %v242 = vpack.c.bf16 %v235, %v234
      %v243 = vpack.c.bf16 %v237, %v236
      %v244 = vpack.c.bf16 %v239, %v238
      %v245 = vpack.c.bf16 %v241, %v240
      %v246 = vld [vmem:[%s209] sm:$0x3]
      %v247 = vld [vmem:[%s2] sm:$0x7]
      %249 = vset.pattern.permute.xlu0 0
      %250 = vperm.xlu0 %249, %v247
      %v251 = vpop.permute.xlu0 %250
      %vm253 = vcmask 523264
      %v255 = vsel %vm253, %v246, 0
      %257 = vmatpush.bf16.msra.mxu0 0
      %258 = vmatpush.bf16.msra.mxu0 0
      %259 = vmatpush.bf16.msra.mxu0 0
      %260 = vmatpush.bf16.msra.mxu0 0
      %261 = vmatpush.bf16.msra.mxu0 %v245
      %262 = vmatpush.bf16.msra.mxu0 %v244
      %263 = vmatpush.bf16.msra.mxu0 %v243
      %264 = vmatpush.bf16.msra.mxu0 %v242
      %265 = vmatmul.bf16.gmra.mxu0 %v255
      %v266 = vpop.f32.mrf.mxu0
      %v267 = vadd.f32 %v251, %v266
      %v268 = vpop.f32.mrf.mxu0
      %269 = vdwg.mxu0
      %v270 = vtanh.pop %v267
      %271 = vst [vmem:[%s216] sm:$0x7] %v270
      %p272 = scmp.lt.s32.totalorder %s18, 3
      %s273 = scalar_select %p272, %s18, 3
      %p274 = scmp.lt.s32.totalorder %s19, 0
      %s275 = scalar_select %p274, %s19, 0
      %s276 = sadd.s32 %s275, %s273
      %s277 = smul.addr %s276, 4
      %s278 = scalar_lea.vmem %s3, %s277
      // Predicated region
      $region33: #{part_unet2_forward.15} parent=31 // pred_check
        %p279 = pneg %p121
      $region34: #{part_unet2_forward.15} parent=31 // pred_check_branch
        %281 = sbr.rel (%p279) target = $region36
      $region35: #{part_unet2_forward.15} parent=31 // pred_region
        _
      $region36: #{part_unet2_forward.15} parent=31 // pred_fallthru
        _
    $region32: #{part_unet2_forward.15} parent=5 // pred_fallthru
      _
    %p282 = scmp.le.s32.totalorder 2, %s9
    // Predicated region
    $region37: #{part_unet2_forward.15} parent=5 // pred_check
      %p283 = pneg %p282
    $region38: #{part_unet2_forward.15} parent=5 // pred_check_branch
      %285 = sbr.rel (%p283) target = $region40
    $region39: #{part_unet2_forward.15} parent=5 // pred_region
      %s286 = ssub.s32 %s9, 2
      // Predicated region
      $region41: #{part_unet2_forward.15} parent=39 // pred_check
        %p287 = pneg %p127
      $region42: #{part_unet2_forward.15} parent=39 // pred_check_branch
        %289 = sbr.rel (%p287) target = $region44
      $region43: #{part_unet2_forward.15} parent=39 // pred_region
        %p290 = scmp.lt.s32.totalorder %s20, 3
        %s291 = scalar_select %p290, %s20, 3
        %p292 = scmp.lt.s32.totalorder %s21, 0
        %s293 = scalar_select %p292, %s21, 0
        %s294 = sadd.s32 %s293, %s291
        %s295 = smul.addr %s294, 4
        %s296 = scalar_lea.vmem %s3, %s295
      $region44: #{part_unet2_forward.15} parent=39 // pred_fallthru
        _
    $region40: #{part_unet2_forward.15} parent=5 // pred_fallthru
      _
  $region6: #{part_unet2_forward.15} parent=0 // loop_footer
    %s13 = sadd.s32 1, %s9
  $region7: #{part_unet2_forward.15} parent=0 // loop_footer_branch
    %8 = sbr.rel target = $region3
  $region8: #{part_unet2_forward.15} parent=0 // loop_exit
    _

</llo_original>
